<compile_context>
chip_gen: v6e
topology: v6e:2x2x1
jax: 0.10.0
libtpu: 0.0.40
codegen_flags: <defaults>
</compile_context>

<pallas_src>
import functools

import jax
import jax.numpy as jnp
from jax.experimental import pallas as pl
from jax.experimental.pallas import tpu as pltpu


def _round_up(n, m):
    return ((n + m - 1) // m) * m


def _largest_divisor_le(n, cap):
    for t in range(min(n, cap), 0, -1):
        if n % t == 0:
            return t
    return 1


def _pick_row_tile(total, cap=4096):
    """Row tile for the LSH kernel: big tiles first, capped + pad-friendly fallback."""
    for t in (4096, 2048, 1024, 512, 256, 128, 64, 32, 16, 8):
        if t <= cap and t <= total and total % t == 0:
            return t
    return min(cap, _round_up(total, 8))      # caller pads rows to a multiple of this


def _pick_bin_tile(m_bins, target=32):
    """Bins-per-step for the Gaussian kernel; keep >=2 grid steps for v7x megacore."""
    nt = _largest_divisor_le(m_bins, min(target, m_bins))
    if m_bins // nt < 2 and nt >= 2 and nt % 2 == 0:
        nt //= 2
    return max(nt, 1)


# ----------------------------------------------------------------------------
# Pallas kernel 1: fused LSH projection + argmax(concat([mul,-mul])) + mask
# offset.  Emits lane-dense int32 bin indices; cmul never exists in HBM.
# ----------------------------------------------------------------------------
def _lsh_bin_kernel(x_ref, wT_ref, m_ref, o_ref, *, n_bins):
    x = x_ref[...]                       # (TM, D) rows of x_msg (f32)
    wT = wT_ref[...]                     # (C, D)  codebook columns, transposed
    # mulT[c, r] = sum_d x[r, d] * w[d, c]  == (x @ w).T, computed A·Bᵀ-style so the
    # (C, TM) result keeps the long axis on lanes (argmax then runs over sublanes).
    mulT = jax.lax.dot_general(
        wT, x, dimension_numbers=(((1,), (1,)), ((), ())),
        preferred_element_type=jnp.float32)                       # (C, TM)
    ncols = mulT.shape[0]
    max_v = jnp.max(mulT, axis=0, keepdims=True)                  # (1, TM)
    min_v = jnp.min(mulT, axis=0, keepdims=True)                  # (1, TM)
    ridx = jax.lax.broadcasted_iota(jnp.int32, mulT.shape, 0)     # (C, TM)
    # first-occurrence argmax/argmin over the (tiny) codebook axis
    arg_max = jnp.min(jnp.where(mulT == max_v, ridx, ncols), axis=0, keepdims=True)
    arg_min = jnp.min(jnp.where(mulT == min_v, ridx, ncols), axis=0, keepdims=True)
    # argmax(concat([mul, -mul], -1)) without materializing cmul; ties between the
    # two halves resolve to the first half (>=), matching concat+argmax semantics.
    a = jnp.where(max_v >= -min_v, arg_max, ncols + arg_min)      # (1, TM) int32
    m = m_ref[0]                                                  # (1, TM) int32 mask
    o_ref[0] = (a + jnp.where(m != 0, 0, n_bins - 1)).astype(jnp.int32)


def lsh_bin_index(x_msg, w, msk, n_bins):
    """bin_idx (B, N) int32 = argmax(concat([x_msg@w, -x_msg@w], -1)) + (~msk)*(n_bins-1)."""
    B, N, D = x_msg.shape
    C = w.shape[1]
    total = B * N
    TM = _pick_row_tile(total)
    padded = _round_up(total, TM)
    G = padded // TM

    x2 = x_msg.reshape(total, D)
    mflat = msk.reshape(total).astype(jnp.int32)
    if padded != total:
        x2 = jnp.pad(x2, ((0, padded - total), (0, 0)))
        mflat = jnp.pad(mflat, (0, padded - total))
    wT = jnp.transpose(w)                                  # (C, D)
    msk3 = mflat.reshape(G, 1, TM)                         # lane-dense mask rows

    out = pl.pallas_call(
        functools.partial(_lsh_bin_kernel, n_bins=n_bins),
        out_shape=jax.ShapeDtypeStruct((G, 1, TM), jnp.int32),   # lane-dense output
        grid=(G,),
        in_specs=[
            pl.BlockSpec((TM, D), lambda i: (i, 0)),
            pl.BlockSpec((C, D), lambda i: (0, 0)),
            pl.BlockSpec((1, 1, TM), lambda i: (i, 0, 0)),
        ],
        out_specs=pl.BlockSpec((1, 1, TM), lambda i: (i, 0, 0)),
        compiler_params=pltpu.CompilerParams(dimension_semantics=("parallel",)),
    )(x2, wT, msk3)
    return out.reshape(padded)[:total].reshape(B, N)


# ----------------------------------------------------------------------------
# Pallas kernel 2: NodePairGaussianKernel over NT bins per grid step + row/col
# masking.  Mask arrives lane-major as (NT, 1, BS); (B, n_bins) is pre-flattened.
# ----------------------------------------------------------------------------
def _gaussian_bins_kernel(x_ref, m_ref, o_ref, *, dist_mult, clip_value_low,
                          exp_bf16):
    x = x_ref[...]                      # (NT, BS, D) f32
    m = m_ref[...]                      # (NT, 1, BS) f32 lane-dense mask
    # NOTE: the reference pre-multiplies x by the mask, but since every entry whose
    # row or column is masked gets multiplied by 0 afterwards, skipping it yields a
    # bit-identical final dm for surviving entries and exact zeros elsewhere.
    na = jnp.sum(x * x, axis=-1, keepdims=True)                     # (NT, BS, 1)
    gram = jax.lax.dot_general(
        x, x, dimension_numbers=(((2,), (2,)), ((0,), (0,))),       # batched i·jᵀ
        preferred_element_type=jnp.float32)                         # (NT, BS, BS)
    d2 = jnp.clip(na - 2.0 * gram + jnp.swapaxes(na, 1, 2), 1e-6, 1e6)
    arg = -dist_mult * jnp.sqrt(d2)
    if exp_bf16:
        # bf16 exp halves EUP pushes on v6e/v7x; keep d2/sqrt in f32 for stability.
        arg = arg.astype(jnp.bfloat16)
    dm = jnp.exp(arg).astype(jnp.float32)
    # upper clip at 1.0 is redundant: exp(-dist_mult*sqrt(d2>=1e-6)) <= 1 (dist_mult>=0)
    dm = jnp.maximum(dm, clip_value_low)
    dm = dm * m                         # column mask: lane-aligned broadcast (free)
    dm = dm * jnp.swapaxes(m, 1, 2)     # row mask: small per-tile relayout
    o_ref[...] = dm.astype(o_ref.dtype)


def gaussian_kernel_binned(x_msg_binned, msk_lane, dist_mult=0.1,
                           clip_value_low=0.0, out_bf16=False, exp_bf16=False):
    """x_msg_binned: (B, NB, BS, D); msk_lane: (B*NB, 1, BS) f32.  Returns (B, NB, BS, BS)."""
    B, NB, BS, D = x_msg_binned.shape
    M = B * NB
    NT = _pick_bin_tile(M, target=32)
    out_dtype = jnp.bfloat16 if out_bf16 else x_msg_binned.dtype

    x_flat = x_msg_binned.reshape(M, BS, D)

    # VMEM budget: account for the D -> 128 lane padding of the x block.
    d_pad = max(_round_up(D, 128), 128)
    out_bytes = 2 if out_bf16 else 4
    per_bin = BS * d_pad * 4 + BS * BS * out_bytes + 8 * _round_up(BS, 128) * 4
    needed = 2 * NT * per_bin                                   # double-buffered
    vmem_limit = int(min(max(needed + (8 << 20), 32 << 20), 56 << 20))

    kern = functools.partial(
        _gaussian_bins_kernel, dist_mult=float(dist_mult),
        clip_value_low=float(clip_value_low), exp_bf16=exp_bf16)
    out = pl.pallas_call(
        kern,
        out_shape=jax.ShapeDtypeStruct((M, BS, BS), out_dtype),
        grid=(M // NT,),
        in_specs=[
            pl.BlockSpec((NT, BS, D), lambda i: (i, 0, 0)),
            pl.BlockSpec((NT, 1, BS), lambda i: (i, 0, 0)),
        ],
        out_specs=pl.BlockSpec((NT, BS, BS), lambda i: (i, 0, 0)),
        compiler_params=pltpu.CompilerParams(
            dimension_semantics=("parallel",),
            vmem_limit_bytes=vmem_limit),
    )(x_flat, msk_lane)
    return out.reshape(B, NB, BS, BS)


# ----------------------------------------------------------------------------
# Full forward pass (matches MessageBuildingLayerLSH.forward)
# ----------------------------------------------------------------------------
def message_building_layer_lsh(x_msg, x_node, msk, codebook, bin_size=128,
                               dist_mult=0.1, clip_value_low=0.0,
                               out_bf16=False, exp_bf16=False):
    B, N, Dmsg = x_msg.shape
    Dnode = x_node.shape[-1]
    assert N % bin_size == 0, "n_points must be divisible by bin_size"
    n_bins = N // bin_size
    ncols = max(1, n_bins // 2)
    w = codebook[:, :ncols]

    # (1) fused LSH projection + argmax + mask offset (Pallas, lane-dense int32 out)
    bin_idx = lsh_bin_index(x_msg, w, msk, n_bins)             # (B, N) int32

    # (2) sort + single fused gather of (x_msg | x_node | mask)
    # TODO(synk): argsort stays in XLA — no clean Pallas TPU sort primitive.
    bins_split = jnp.argsort(bin_idx, axis=-1).reshape(B, n_bins, bin_size)
    flat = bins_split.reshape(B, n_bins * bin_size)
    feat = jnp.concatenate(
        [x_msg, x_node, msk.astype(x_msg.dtype)[..., None]], axis=-1)
    gathered = jnp.take_along_axis(feat, flat[..., None], axis=1)       # (B, N, Dmsg+Dnode+1)
    x_msg_binned = gathered[..., :Dmsg].reshape(B, n_bins, bin_size, Dmsg)
    x_features_binned = gathered[..., Dmsg:Dmsg + Dnode].reshape(B, n_bins, bin_size, Dnode)
    msk_g = gathered[..., -1] > 0.5                                      # bool, (B, N)
    msk_f_binned = msk_g.reshape(B, n_bins, bin_size, 1)                 # module output
    msk_lane = msk_g.reshape(B * n_bins, 1, bin_size).astype(x_msg.dtype)

    # (3) Gaussian message matrix + row/col masking (Pallas, NT bins per step)
    dm = gaussian_kernel_binned(x_msg_binned, msk_lane, dist_mult=dist_mult,
                                clip_value_low=clip_value_low,
                                out_bf16=out_bf16, exp_bf16=exp_bf16)
    # Kernel output stays lane-dense (last dim = bin_size); the trailing singleton is
    # added here as a metadata-only expand to match the module's 5-D output.
    dm = dm[..., None]                                         # (B, n_bins, bs, bs, 1)
    return bins_split, x_features_binned, dm, msk_f_binned


if __name__ == "__main__":
    key = jax.random.PRNGKey(0)
    k1, k2, k3, k4 = jax.random.split(key, 4)

    # Small, module-consistent shapes: n_bins = 4, ncols = 2
    B, N = 2, 512
    distance_dim, node_dim = 32, 16
    max_num_bins, bin_size = 8, 128
    dist_mult, clip_value_low = 0.1, 0.0

    x_msg = jax.random.normal(k1, (B, N, distance_dim), dtype=jnp.float32)
    x_node = jax.random.normal(k2, (B, N, node_dim), dtype=jnp.float32)
    msk = jax.random.uniform(k3, (B, N)) > 0.2
    codebook = jax.random.normal(k4, (distance_dim, max_num_bins // 2), dtype=jnp.float32)

    fwd = jax.jit(functools.partial(message_building_layer_lsh, bin_size=bin_size,
                                    dist_mult=dist_mult, clip_value_low=clip_value_low))
    bins_split, x_features_binned, dm, msk_f_binned = fwd(x_msg, x_node, msk, codebook)
    jax.block_until_ready((bins_split, x_features_binned, dm, msk_f_binned))

    n_bins = N // bin_size
    ncols = max(1, n_bins // 2)
    assert bins_split.shape == (B, n_bins, bin_size)
    assert x_features_binned.shape == (B, n_bins, bin_size, node_dim)
    assert dm.shape == (B, n_bins, bin_size, bin_size, 1)
    assert msk_f_binned.shape == (B, n_bins, bin_size, 1)
    assert bool(jnp.all(jnp.isfinite(dm)))
    assert bool(jnp.all((dm >= 0.0) & (dm <= 1.0)))

    # --- check fused LSH bin assignment against a plain-JAX reference -------
    w = codebook[:, :ncols]
    mul_ref = jnp.einsum("bnd,dc->bnc", x_msg, w, precision=jax.lax.Precision.HIGHEST)
    cmul_ref = jnp.concatenate([mul_ref, -mul_ref], axis=-1)
    bin_ref = jnp.argmax(cmul_ref, axis=-1) + jnp.where(msk, 0, n_bins - 1)
    bin_pal = lsh_bin_index(x_msg, w, msk, n_bins)
    match = float(jnp.mean((bin_pal == bin_ref).astype(jnp.float32)))
    assert match >= 0.99, f"LSH bin mismatch fraction {1.0 - match}"

    # --- check Gaussian message matrix against a plain-JAX reference --------
    flat = bins_split.reshape(B, n_bins * bin_size)
    xb = jnp.take_along_axis(x_msg, flat[..., None], axis=1)
    xb = xb.reshape(B, n_bins, bin_size, distance_dim)
    mb = msk_f_binned.astype(jnp.float32)
    xm = xb * mb
    na = jnp.sum(xm * xm, axis=-1, keepdims=True)
    gram = jnp.einsum("bnid,bnjd->bnij", xm, xm, precision=jax.lax.Precision.HIGHEST)
    d2 = jnp.clip(na - 2.0 * gram + jnp.swapaxes(na, -1, -2), 1e-6, 1e6)
    dm_ref = jnp.clip(jnp.exp(-dist_mult * jnp.sqrt(d2)), clip_value_low, 1.0)
    dm_ref = dm_ref * mb * jnp.swapaxes(mb, -1, -2)
    err = float(jnp.max(jnp.abs(dm[..., 0] - dm_ref)))
    assert err < 5e-3, f"dm mismatch: max abs err {err}"

    # masked rows / cols must be exactly zero
    mbool = msk_f_binned[..., 0]
    outer = mbool[:, :, :, None] & mbool[:, :, None, :]
    assert bool(jnp.all(jnp.where(outer, True, dm[..., 0] == 0.0)))

    # --- fast path: bf16 dm store + bf16 exp (review-suggested; looser tol) --
    fwd_fast = jax.jit(functools.partial(
        message_building_layer_lsh, bin_size=bin_size, dist_mult=dist_mult,
        clip_value_low=clip_value_low, out_bf16=True, exp_bf16=True))
    _, _, dm_fast, _ = fwd_fast(x_msg, x_node, msk, codebook)
    jax.block_until_ready(dm_fast)
    assert dm_fast.dtype == jnp.bfloat16
    assert bool(jnp.all(jnp.isfinite(dm_fast.astype(jnp.float32))))
    assert bool(jnp.all((dm_fast >= 0.0) & (dm_fast <= 1.0)))
    err_fast = float(jnp.max(jnp.abs(dm_fast[..., 0].astype(jnp.float32) - dm_ref)))
    assert err_fast < 2e-2, f"bf16 dm mismatch: max abs err {err_fast}"

    print("KERNEL_OK")
</pallas_src>

<mosaic_0001>
module attributes {stable_mosaic.version = 11 : i64} {
  func.func @_lsh_bin_kernel(%arg0: i32, %arg1: memref<1024x32xf32, #tpu.memory_space<vmem>>, %arg2: memref<2x32xf32, #tpu.memory_space<vmem>>, %arg3: memref<1x1x1024xi32, #tpu.memory_space<vmem>>, %arg4: memref<1x1x1024xi32, #tpu.memory_space<vmem>>) attributes {dimension_semantics = [#tpu.dimension_semantics<parallel>], iteration_bounds = array<i64: 1>, scalar_prefetch = 0 : i64, scratch_operands = 0 : i64, tpu.core_type = #tpu.core_type<tc>, window_params = [{transform_indices = @transform_0, window_bounds = array<i64: 1024, 32>}, {pipeline_mode = #tpu.pipeline_mode<synchronous>, transform_indices = @transform_1, window_bounds = array<i64: 2, 32>}, {transform_indices = @transform_2, window_bounds = array<i64: 1, 1, 1024>}, {transform_indices = @transform_3, window_bounds = array<i64: 1, 1, 1024>}]} {
    %c0 = arith.constant 0 : index
    %c0_0 = arith.constant 0 : index
    %0 = vector.load %arg1[%c0, %c0_0] : memref<1024x32xf32, #tpu.memory_space<vmem>>, vector<1024x32xf32>
    %c0_1 = arith.constant 0 : index
    %c0_2 = arith.constant 0 : index
    %1 = vector.load %arg2[%c0_1, %c0_2] : memref<2x32xf32, #tpu.memory_space<vmem>>, vector<2x32xf32>
    %cst = arith.constant dense<0.000000e+00> : vector<2x1024xf32>
    %2 = tpu.matmul %1, %0, %cst {dimension_numbers = #tpu.dot_dimension_numbers<[1], [1], [0], [0], [0, 0, 1, 0], [], []>} : vector<2x32xf32>, vector<1024x32xf32>, vector<2x1024xf32> -> vector<2x1024xf32>
    %cst_3 = arith.constant dense<0xFF800000> : vector<1024xf32>
    %3 = vector.multi_reduction <maximumf>, %2, %cst_3 [0] : vector<2x1024xf32> to vector<1024xf32>
    %4 = vector.shape_cast %3 : vector<1024xf32> to vector<1x1024xf32>
    %cst_4 = arith.constant dense<0x7F800000> : vector<1024xf32>
    %5 = vector.multi_reduction <minimumf>, %2, %cst_4 [0] : vector<2x1024xf32> to vector<1024xf32>
    %6 = vector.shape_cast %5 : vector<1024xf32> to vector<1x1024xf32>
    %7 = tpu.iota {dimensions = array<i32: 0>} : vector<2x1024xi32>
    %8 = vector.broadcast %4 : vector<1x1024xf32> to vector<2x1024xf32>
    %9 = arith.cmpf oeq, %2, %8 : vector<2x1024xf32>
    %c2_i32 = arith.constant 2 : i32
    %10 = vector.broadcast %c2_i32 : i32 to vector<2x1024xi32>
    %11 = arith.select %9, %7, %10 : vector<2x1024xi1>, vector<2x1024xi32>
    %cst_5 = arith.constant dense<2147483647> : vector<1024xi32>
    %12 = vector.multi_reduction <minsi>, %11, %cst_5 [0] : vector<2x1024xi32> to vector<1024xi32>
    %13 = vector.shape_cast %12 : vector<1024xi32> to vector<1x1024xi32>
    %14 = vector.broadcast %6 : vector<1x1024xf32> to vector<2x1024xf32>
    %15 = arith.cmpf oeq, %2, %14 : vector<2x1024xf32>
    %c2_i32_6 = arith.constant 2 : i32
    %16 = vector.broadcast %c2_i32_6 : i32 to vector<2x1024xi32>
    %17 = arith.select %15, %7, %16 : vector<2x1024xi1>, vector<2x1024xi32>
    %cst_7 = arith.constant dense<2147483647> : vector<1024xi32>
    %18 = vector.multi_reduction <minsi>, %17, %cst_7 [0] : vector<2x1024xi32> to vector<1024xi32>
    %19 = vector.shape_cast %18 : vector<1024xi32> to vector<1x1024xi32>
    %cst_8 = arith.constant 0.000000e+00 : f32
    %20 = vector.broadcast %cst_8 : f32 to vector<1x1024xf32>
    %21 = arith.subf %20, %6 : vector<1x1024xf32>
    %22 = arith.cmpf oge, %4, %21 : vector<1x1024xf32>
    %c2_i32_9 = arith.constant 2 : i32
    %23 = vector.broadcast %c2_i32_9 : i32 to vector<1x1024xi32>
    %24 = arith.addi %23, %19 : vector<1x1024xi32>
    %25 = arith.select %22, %13, %24 : vector<1x1024xi1>, vector<1x1024xi32>
    %c0_10 = arith.constant 0 : index
    %c0_11 = arith.constant 0 : index
    %c0_12 = arith.constant 0 : index
    %26 = vector.load %arg3[%c0_10, %c0_11, %c0_12] : memref<1x1x1024xi32, #tpu.memory_space<vmem>>, vector<1x1x1024xi32>
    %27 = vector.shape_cast %26 : vector<1x1x1024xi32> to vector<1x1024xi32>
    %c0_i32 = arith.constant 0 : i32
    %28 = vector.broadcast %c0_i32 : i32 to vector<1x1024xi32>
    %29 = arith.cmpi ne, %27, %28 : vector<1x1024xi32>
    %c0_i32_13 = arith.constant 0 : i32
    %c3_i32 = arith.constant 3 : i32
    %30 = vector.broadcast %c0_i32_13 : i32 to vector<1x1024xi32>
    %31 = vector.broadcast %c3_i32 : i32 to vector<1x1024xi32>
    %32 = arith.select %29, %30, %31 : vector<1x1024xi1>, vector<1x1024xi32>
    %33 = arith.addi %25, %32 : vector<1x1024xi32>
    %c0_14 = arith.constant 0 : index
    %c0_15 = arith.constant 0 : index
    %c0_16 = arith.constant 0 : index
    %34 = vector.load %arg4[%c0_14, %c0_15, %c0_16] : memref<1x1x1024xi32, #tpu.memory_space<vmem>>, vector<1x1x1024xi32>
    %35 = vector.shape_cast %34 : vector<1x1x1024xi32> to vector<1x1024xi32>
    %36 = vector.shape_cast %33 : vector<1x1024xi32> to vector<1x1x1024xi32>
    tpu.vector_store %arg4[%c0_14, %c0_15, %c0_16], %36 {strides = array<i32>} : memref<1x1x1024xi32, #tpu.memory_space<vmem>>, vector<1x1x1024xi32>,
    return
  }
  func.func @transform_0(%arg0: i32) -> (i32, i32) {
    %c0_i32 = arith.constant 0 : i32
    %c0_i32_0 = arith.constant 0 : i32
    return %arg0, %c0_i32 : i32, i32
  }
  func.func @transform_1(%arg0: i32) -> (i32, i32) {
    %c0_i32 = arith.constant 0 : i32
    %c0_i32_0 = arith.constant 0 : i32
    %c0_i32_1 = arith.constant 0 : i32
    return %c0_i32, %c0_i32_0 : i32, i32
  }
  func.func @transform_2(%arg0: i32) -> (i32, i32, i32) {
    %c0_i32 = arith.constant 0 : i32
    %c0_i32_0 = arith.constant 0 : i32
    %c0_i32_1 = arith.constant 0 : i32
    return %arg0, %c0_i32, %c0_i32_0 : i32, i32, i32
  }
  func.func @transform_3(%arg0: i32) -> (i32, i32, i32) {
    %c0_i32 = arith.constant 0 : i32
    %c0_i32_0 = arith.constant 0 : i32
    %c0_i32_1 = arith.constant 0 : i32
    return %arg0, %c0_i32, %c0_i32_0 : i32, i32, i32
  }
}

module attributes {stable_mosaic.version = 11 : i64} {
  func.func @_gaussian_bins_kernel(%arg0: i32, %arg1: memref<4x128x32xf32, #tpu.memory_space<vmem>>, %arg2: memref<4x1x128xf32, #tpu.memory_space<vmem>>, %arg3: memref<4x128x128xf32, #tpu.memory_space<vmem>>) attributes {dimension_semantics = [#tpu.dimension_semantics<parallel>], iteration_bounds = array<i64: 2>, scalar_prefetch = 0 : i64, scratch_operands = 0 : i64, tpu.core_type = #tpu.core_type<tc>, window_params = [{transform_indices = @transform_0, window_bounds = array<i64: 4, 128, 32>}, {transform_indices = @transform_1, window_bounds = array<i64: 4, 1, 128>}, {transform_indices = @transform_2, window_bounds = array<i64: 4, 128, 128>}]} {
    %c0 = arith.constant 0 : index
    %c0_0 = arith.constant 0 : index
    %c0_1 = arith.constant 0 : index
    %0 = vector.load %arg1[%c0, %c0_0, %c0_1] : memref<4x128x32xf32, #tpu.memory_space<vmem>>, vector<4x128x32xf32>
    %c0_2 = arith.constant 0 : index
    %c0_3 = arith.constant 0 : index
    %c0_4 = arith.constant 0 : index
    %1 = vector.load %arg2[%c0_2, %c0_3, %c0_4] : memref<4x1x128xf32, #tpu.memory_space<vmem>>, vector<4x1x128xf32>
    %2 = arith.mulf %0, %0 : vector<4x128x32xf32>
    %cst = arith.constant dense<0.000000e+00> : vector<4x128xf32>
    %3 = vector.multi_reduction <add>, %2, %cst [2] : vector<4x128x32xf32> to vector<4x128xf32>
    %4 = vector.shape_cast %3 : vector<4x128xf32> to vector<4x128x1xf32>
    %cst_5 = arith.constant dense<0.000000e+00> : vector<4x128x128xf32>
    %5 = tpu.matmul %0, %0, %cst_5 {dimension_numbers = #tpu.dot_dimension_numbers<[2], [2], [1], [1], [0, 0, 0, 1, 1, 1], [0], [0]>} : vector<4x128x32xf32>, vector<4x128x32xf32>, vector<4x128x128xf32> -> vector<4x128x128xf32>
    %cst_6 = arith.constant 2.000000e+00 : f32
    %6 = vector.broadcast %cst_6 : f32 to vector<4x128x128xf32>
    %7 = arith.mulf %6, %5 : vector<4x128x128xf32>
    %8 = vector.broadcast %4 : vector<4x128x1xf32> to vector<4x128x128xf32>
    %9 = arith.subf %8, %7 : vector<4x128x128xf32>
    %10 = tpu.transpose %4, [0, 2, 1] : vector<4x128x1xf32> -> vector<4x1x128xf32>
    %11 = vector.broadcast %10 : vector<4x1x128xf32> to vector<4x128x128xf32>
    %12 = arith.addf %9, %11 : vector<4x128x128xf32>
    %cst_7 = arith.constant 9.99999997E-7 : f32
    %cst_8 = arith.constant 1.000000e+06 : f32
    %13 = vector.broadcast %cst_7 : f32 to vector<4x128x128xf32>
    %14 = arith.maximumf %13, %12 : vector<4x128x128xf32>
    %15 = vector.broadcast %cst_8 : f32 to vector<4x128x128xf32>
    %16 = arith.minimumf %15, %14 : vector<4x128x128xf32>
    %17 = math.sqrt %16 : vector<4x128x128xf32>
    %cst_9 = arith.constant -1.000000e-01 : f32
    %18 = vector.broadcast %cst_9 : f32 to vector<4x128x128xf32>
    %19 = arith.mulf %18, %17 : vector<4x128x128xf32>
    %20 = math.exp %19 : vector<4x128x128xf32>
    %cst_10 = arith.constant 0.000000e+00 : f32
    %21 = vector.broadcast %cst_10 : f32 to vector<4x128x128xf32>
    %22 = arith.maximumf %20, %21 : vector<4x128x128xf32>
    %23 = vector.broadcast %1 : vector<4x1x128xf32> to vector<4x128x128xf32>
    %24 = arith.mulf %22, %23 : vector<4x128x128xf32>
    %25 = tpu.transpose %1, [0, 2, 1] : vector<4x1x128xf32> -> vector<4x128x1xf32>
    %26 = vector.broadcast %25 : vector<4x128x1xf32> to vector<4x128x128xf32>
    %27 = arith.mulf %24, %26 : vector<4x128x128xf32>
    %c0_11 = arith.constant 0 : index
    %c0_12 = arith.constant 0 : index
    %c0_13 = arith.constant 0 : index
    %28 = vector.load %arg3[%c0_11, %c0_12, %c0_13] : memref<4x128x128xf32, #tpu.memory_space<vmem>>, vector<4x128x128xf32>
    tpu.vector_store %arg3[%c0_11, %c0_12, %c0_13], %27 {strides = array<i32>} : memref<4x128x128xf32, #tpu.memory_space<vmem>>, vector<4x128x128xf32>,
    return
  }
  func.func @transform_0(%arg0: i32) -> (i32, i32, i32) {
    %c0_i32 = arith.constant 0 : i32
    %c0_i32_0 = arith.constant 0 : i32
    %c0_i32_1 = arith.constant 0 : i32
    return %arg0, %c0_i32, %c0_i32_0 : i32, i32, i32
  }
  func.func @transform_1(%arg0: i32) -> (i32, i32, i32) {
    %c0_i32 = arith.constant 0 : i32
    %c0_i32_0 = arith.constant 0 : i32
    %c0_i32_1 = arith.constant 0 : i32
    return %arg0, %c0_i32, %c0_i32_0 : i32, i32, i32
  }
  func.func @transform_2(%arg0: i32) -> (i32, i32, i32) {
    %c0_i32 = arith.constant 0 : i32
    %c0_i32_0 = arith.constant 0 : i32
    %c0_i32_1 = arith.constant 0 : i32
    return %arg0, %c0_i32, %c0_i32_0 : i32, i32, i32
  }
}

</mosaic_0001>

<llo_original>
// kernel: message_building_layer_lsh.2
$region0: #{message_building_layer_lsh.2}
  #allocation0 [shape = 'u32[]', space=smem, size = 0x4, offset = 0x4, fixed_abs, tag = 'smem constant byte address 0x4 - core index']
  #allocation1 [shape = 'u32[144,128]{1,0:T(1,128)}', space=vmem, size = 0x12000, scoped, tag = 'internal scratch']
  %s0 = inlined_call_operand.vmem [shape: f32[1024,32], index: 0, kind: input, shape index: {}]
  %s1 = inlined_call_operand.vmem [shape: f32[2,32], index: 1, kind: input, shape index: {}]
  %s2 = inlined_call_operand.vmem [shape: s32[1,1,1024], index: 2, kind: input, shape index: {}]
  %s3 = inlined_call_operand.vmem [shape: s32[1,1,1024], index: 3, kind: output, shape index: {}]
  %s4 = sld [smem:[#allocation0]]
  $region22: #{message_building_layer_lsh.2} parent=0
    _
  %s6 = ssub.s32 1, %s4
  %s7 = scalar_select 0, %s6, %s4
  // Predicated region
  $region2: #{message_building_layer_lsh.2} parent=0 // pred_check
    _
  $region3: #{message_building_layer_lsh.2} parent=0 // pred_check_branch
    %9 = sbr.rel (0) target = $region5
  $region4: #{message_building_layer_lsh.2} parent=0 // pred_region
    _
  $region5: #{message_building_layer_lsh.2} parent=0 // pred_fallthru
    _
  // Predicated region
  $region6: #{message_building_layer_lsh.2} parent=0 // pred_check
    _
  $region7: #{message_building_layer_lsh.2} parent=0 // pred_check_branch
    %11 = sbr.rel (0) target = $region9
  $region8: #{message_building_layer_lsh.2} parent=0 // pred_region
    _
  $region9: #{message_building_layer_lsh.2} parent=0 // pred_fallthru
    _
  // Predicated region
  $region10: #{message_building_layer_lsh.2} parent=0 // pred_check
    _
  $region11: #{message_building_layer_lsh.2} parent=0 // pred_check_branch
    %13 = sbr.rel (0) target = $region13
  $region12: #{message_building_layer_lsh.2} parent=0 // pred_region
    _
  $region13: #{message_building_layer_lsh.2} parent=0 // pred_fallthru
    _
  %v14 = vld [vmem:[%s0] sm:$0xff]
  %v15 = vld [vmem:[%s0 + $0x8] sm:$0xff]
  %v16 = vld [vmem:[%s0 + $0x10] sm:$0xff]
  %v17 = vld [vmem:[%s0 + $0x18] sm:$0xff]
  %v18 = vld [vmem:[%s0 + $0x20] sm:$0xff]
  %v19 = vld [vmem:[%s0 + $0x28] sm:$0xff]
  %v20 = vld [vmem:[%s0 + $0x30] sm:$0xff]
  %v21 = vld [vmem:[%s0 + $0x38] sm:$0xff]
  %v22 = vld [vmem:[%s0 + $0x40] sm:$0xff]
  %v23 = vld [vmem:[%s0 + $0x48] sm:$0xff]
  %v24 = vld [vmem:[%s0 + $0x50] sm:$0xff]
  %v25 = vld [vmem:[%s0 + $0x58] sm:$0xff]
  %v26 = vld [vmem:[%s0 + $0x60] sm:$0xff]
  %v27 = vld [vmem:[%s0 + $0x68] sm:$0xff]
  %v28 = vld [vmem:[%s0 + $0x70] sm:$0xff]
  %v29 = vld [vmem:[%s0 + $0x78] sm:$0xff]
  %v30 = vld [vmem:[%s0 + $0x80] sm:$0xff]
  %v31 = vld [vmem:[%s0 + $0x88] sm:$0xff]
  %v32 = vld [vmem:[%s0 + $0x90] sm:$0xff]
  %v33 = vld [vmem:[%s0 + $0x98] sm:$0xff]
  %v34 = vld [vmem:[%s0 + $0xa0] sm:$0xff]
  %v35 = vld [vmem:[%s0 + $0xa8] sm:$0xff]
  %v36 = vld [vmem:[%s0 + $0xb0] sm:$0xff]
  %v37 = vld [vmem:[%s0 + $0xb8] sm:$0xff]
  %v38 = vld [vmem:[%s0 + $0xc0] sm:$0xff]
  %v39 = vld [vmem:[%s0 + $0xc8] sm:$0xff]
  %v40 = vld [vmem:[%s0 + $0xd0] sm:$0xff]
  %v41 = vld [vmem:[%s0 + $0xd8] sm:$0xff]
  %v42 = vld [vmem:[%s0 + $0xe0] sm:$0xff]
  %v43 = vld [vmem:[%s0 + $0xe8] sm:$0xff]
  %v44 = vld [vmem:[%s0 + $0xf0] sm:$0xff]
  %v45 = vld [vmem:[%s0 + $0xf8] sm:$0xff]
  %v46 = vld [vmem:[%s0 + $0x100] sm:$0xff]
  %v47 = vld [vmem:[%s0 + $0x108] sm:$0xff]
  %v48 = vld [vmem:[%s0 + $0x110] sm:$0xff]
  %v49 = vld [vmem:[%s0 + $0x118] sm:$0xff]
  %v50 = vld [vmem:[%s0 + $0x120] sm:$0xff]
  %v51 = vld [vmem:[%s0 + $0x128] sm:$0xff]
  %v52 = vld [vmem:[%s0 + $0x130] sm:$0xff]
  %v53 = vld [vmem:[%s0 + $0x138] sm:$0xff]
  %v54 = vld [vmem:[%s0 + $0x140] sm:$0xff]
  %v55 = vld [vmem:[%s0 + $0x148] sm:$0xff]
  %v56 = vld [vmem:[%s0 + $0x150] sm:$0xff]
  %v57 = vld [vmem:[%s0 + $0x158] sm:$0xff]
  %v58 = vld [vmem:[%s0 + $0x160] sm:$0xff]
  %v59 = vld [vmem:[%s0 + $0x168] sm:$0xff]
  %v60 = vld [vmem:[%s0 + $0x170] sm:$0xff]
  %v61 = vld [vmem:[%s0 + $0x178] sm:$0xff]
  %v62 = vld [vmem:[%s0 + $0x180] sm:$0xff]
  %v63 = vld [vmem:[%s0 + $0x188] sm:$0xff]
  %v64 = vld [vmem:[%s0 + $0x190] sm:$0xff]
  %v65 = vld [vmem:[%s0 + $0x198] sm:$0xff]
  %v66 = vld [vmem:[%s0 + $0x1a0] sm:$0xff]
  %v67 = vld [vmem:[%s0 + $0x1a8] sm:$0xff]
  %v68 = vld [vmem:[%s0 + $0x1b0] sm:$0xff]
  %v69 = vld [vmem:[%s0 + $0x1b8] sm:$0xff]
  %v70 = vld [vmem:[%s0 + $0x1c0] sm:$0xff]
  %v71 = vld [vmem:[%s0 + $0x1c8] sm:$0xff]
  %v72 = vld [vmem:[%s0 + $0x1d0] sm:$0xff]
  %v73 = vld [vmem:[%s0 + $0x1d8] sm:$0xff]
  %v74 = vld [vmem:[%s0 + $0x1e0] sm:$0xff]
  %v75 = vld [vmem:[%s0 + $0x1e8] sm:$0xff]
  %v76 = vld [vmem:[%s0 + $0x1f0] sm:$0xff]
  %v77 = vld [vmem:[%s0 + $0x1f8] sm:$0xff]
  %v78 = vld [vmem:[%s0 + $0x200] sm:$0xff]
  %v79 = vld [vmem:[%s0 + $0x208] sm:$0xff]
  %v80 = vld [vmem:[%s0 + $0x210] sm:$0xff]
  %v81 = vld [vmem:[%s0 + $0x218] sm:$0xff]
  %v82 = vld [vmem:[%s0 + $0x220] sm:$0xff]
  %v83 = vld [vmem:[%s0 + $0x228] sm:$0xff]
  %v84 = vld [vmem:[%s0 + $0x230] sm:$0xff]
  %v85 = vld [vmem:[%s0 + $0x238] sm:$0xff]
  %v86 = vld [vmem:[%s0 + $0x240] sm:$0xff]
  %v87 = vld [vmem:[%s0 + $0x248] sm:$0xff]
  %v88 = vld [vmem:[%s0 + $0x250] sm:$0xff]
  %v89 = vld [vmem:[%s0 + $0x258] sm:$0xff]
  %v90 = vld [vmem:[%s0 + $0x260] sm:$0xff]
  %v91 = vld [vmem:[%s0 + $0x268] sm:$0xff]
  %v92 = vld [vmem:[%s0 + $0x270] sm:$0xff]
  %v93 = vld [vmem:[%s0 + $0x278] sm:$0xff]
  %v94 = vld [vmem:[%s0 + $0x280] sm:$0xff]
  %v95 = vld [vmem:[%s0 + $0x288] sm:$0xff]
  %v96 = vld [vmem:[%s0 + $0x290] sm:$0xff]
  %v97 = vld [vmem:[%s0 + $0x298] sm:$0xff]
  %v98 = vld [vmem:[%s0 + $0x2a0] sm:$0xff]
  %v99 = vld [vmem:[%s0 + $0x2a8] sm:$0xff]
  %v100 = vld [vmem:[%s0 + $0x2b0] sm:$0xff]
  %v101 = vld [vmem:[%s0 + $0x2b8] sm:$0xff]
  %v102 = vld [vmem:[%s0 + $0x2c0] sm:$0xff]
  %v103 = vld [vmem:[%s0 + $0x2c8] sm:$0xff]
  %v104 = vld [vmem:[%s0 + $0x2d0] sm:$0xff]
  %v105 = vld [vmem:[%s0 + $0x2d8] sm:$0xff]
  %v106 = vld [vmem:[%s0 + $0x2e0] sm:$0xff]
  %v107 = vld [vmem:[%s0 + $0x2e8] sm:$0xff]
  %v108 = vld [vmem:[%s0 + $0x2f0] sm:$0xff]
  %v109 = vld [vmem:[%s0 + $0x2f8] sm:$0xff]
  %v110 = vld [vmem:[%s0 + $0x300] sm:$0xff]
  %v111 = vld [vmem:[%s0 + $0x308] sm:$0xff]
  %v112 = vld [vmem:[%s0 + $0x310] sm:$0xff]
  %v113 = vld [vmem:[%s0 + $0x318] sm:$0xff]
  %v114 = vld [vmem:[%s0 + $0x320] sm:$0xff]
  %v115 = vld [vmem:[%s0 + $0x328] sm:$0xff]
  %v116 = vld [vmem:[%s0 + $0x330] sm:$0xff]
  %v117 = vld [vmem:[%s0 + $0x338] sm:$0xff]
  %v118 = vld [vmem:[%s0 + $0x340] sm:$0xff]
  %v119 = vld [vmem:[%s0 + $0x348] sm:$0xff]
  %v120 = vld [vmem:[%s0 + $0x350] sm:$0xff]
  %v121 = vld [vmem:[%s0 + $0x358] sm:$0xff]
  %v122 = vld [vmem:[%s0 + $0x360] sm:$0xff]
  %v123 = vld [vmem:[%s0 + $0x368] sm:$0xff]
  %v124 = vld [vmem:[%s0 + $0x370] sm:$0xff]
  %v125 = vld [vmem:[%s0 + $0x378] sm:$0xff]
  %v126 = vld [vmem:[%s0 + $0x380] sm:$0xff]
  %v127 = vld [vmem:[%s0 + $0x388] sm:$0xff]
  %v128 = vld [vmem:[%s0 + $0x390] sm:$0xff]
  %v129 = vld [vmem:[%s0 + $0x398] sm:$0xff]
  %v130 = vld [vmem:[%s0 + $0x3a0] sm:$0xff]
  %v131 = vld [vmem:[%s0 + $0x3a8] sm:$0xff]
  %v132 = vld [vmem:[%s0 + $0x3b0] sm:$0xff]
  %v133 = vld [vmem:[%s0 + $0x3b8] sm:$0xff]
  %v134 = vld [vmem:[%s0 + $0x3c0] sm:$0xff]
  %v135 = vld [vmem:[%s0 + $0x3c8] sm:$0xff]
  %v136 = vld [vmem:[%s0 + $0x3d0] sm:$0xff]
  %v137 = vld [vmem:[%s0 + $0x3d8] sm:$0xff]
  %v138 = vld [vmem:[%s0 + $0x3e0] sm:$0xff]
  %v139 = vld [vmem:[%s0 + $0x3e8] sm:$0xff]
  %v140 = vld [vmem:[%s0 + $0x3f0] sm:$0xff]
  %v141 = vld [vmem:[%s0 + $0x3f8] sm:$0xff]
  %v142 = vld [vmem:[%s1] sm:$0x3]
  %vm143 = vcmask 261120
  %v145 = vsel %vm143, %v142, 0
  %v148 = vsel %vm143, %v14, 0
  %v151 = vsel %vm143, %v15, 0
  %v154 = vsel %vm143, %v16, 0
  %v157 = vsel %vm143, %v17, 0
  %v160 = vsel %vm143, %v18, 0
  %v163 = vsel %vm143, %v19, 0
  %v166 = vsel %vm143, %v20, 0
  %v169 = vsel %vm143, %v21, 0
  %v172 = vsel %vm143, %v22, 0
  %v175 = vsel %vm143, %v23, 0
  %v178 = vsel %vm143, %v24, 0
  %v181 = vsel %vm143, %v25, 0
  %v184 = vsel %vm143, %v26, 0
  %v187 = vsel %vm143, %v27, 0
  %v190 = vsel %vm143, %v28, 0
  %v193 = vsel %vm143, %v29, 0
  %v196 = vsel %vm143, %v30, 0
  %v199 = vsel %vm143, %v31, 0
  %v202 = vsel %vm143, %v32, 0
  %v205 = vsel %vm143, %v33, 0
  %v208 = vsel %vm143, %v34, 0
  %v211 = vsel %vm143, %v35, 0
  %v214 = vsel %vm143, %v36, 0
  %v217 = vsel %vm143, %v37, 0
  %v220 = vsel %vm143, %v38, 0
  %v223 = vsel %vm143, %v39, 0
  %v226 = vsel %vm143, %v40, 0
  %v229 = vsel %vm143, %v41, 0
  %v232 = vsel %vm143, %v42, 0
  %v235 = vsel %vm143, %v43, 0
  %v238 = vsel %vm143, %v44, 0
  %v241 = vsel %vm143, %v45, 0
  %v244 = vsel %vm143, %v46, 0
  %v247 = vsel %vm143, %v47, 0
  %v250 = vsel %vm143, %v48, 0
  %v253 = vsel %vm143, %v49, 0
  %v256 = vsel %vm143, %v50, 0
  %v259 = vsel %vm143, %v51, 0
  %v262 = vsel %vm143, %v52, 0
  %v265 = vsel %vm143, %v53, 0
  %v268 = vsel %vm143, %v54, 0
  %v271 = vsel %vm143, %v55, 0
  %v274 = vsel %vm143, %v56, 0
  %v277 = vsel %vm143, %v57, 0
  %v280 = vsel %vm143, %v58, 0
  %v283 = vsel %vm143, %v59, 0
  %v286 = vsel %vm143, %v60, 0
  %v289 = vsel %vm143, %v61, 0
  %v292 = vsel %vm143, %v62, 0
  %v295 = vsel %vm143, %v63, 0
  %v298 = vsel %vm143, %v64, 0
  %v301 = vsel %vm143, %v65, 0
  %v304 = vsel %vm143, %v66, 0
  %v307 = vsel %vm143, %v67, 0
  %v310 = vsel %vm143, %v68, 0
  %v313 = vsel %vm143, %v69, 0
  %v316 = vsel %vm143, %v70, 0
  %v319 = vsel %vm143, %v71, 0
  %v322 = vsel %vm143, %v72, 0
  %v325 = vsel %vm143, %v73, 0
  %v328 = vsel %vm143, %v74, 0
  %v331 = vsel %vm143, %v75, 0
  %v334 = vsel %vm143, %v76, 0
  %v337 = vsel %vm143, %v77, 0
  %v340 = vsel %vm143, %v78, 0
  %v343 = vsel %vm143, %v79, 0
  %v346 = vsel %vm143, %v80, 0
  %v349 = vsel %vm143, %v81, 0
  %v352 = vsel %vm143, %v82, 0
  %v355 = vsel %vm143, %v83, 0
  %v358 = vsel %vm143, %v84, 0
  %v361 = vsel %vm143, %v85, 0
  %v364 = vsel %vm143, %v86, 0
  %v367 = vsel %vm143, %v87, 0
  %v370 = vsel %vm143, %v88, 0
  %v373 = vsel %vm143, %v89, 0
  %v376 = vsel %vm143, %v90, 0
  %v379 = vsel %vm143, %v91, 0
  %v382 = vsel %vm143, %v92, 0
  %v385 = vsel %vm143, %v93, 0
  %v388 = vsel %vm143, %v94, 0
  %v391 = vsel %vm143, %v95, 0
  %v394 = vsel %vm143, %v96, 0
  %v397 = vsel %vm143, %v97, 0
  %v400 = vsel %vm143, %v98, 0
  %v403 = vsel %vm143, %v99, 0
  %v406 = vsel %vm143, %v100, 0
  %v409 = vsel %vm143, %v101, 0
  %v412 = vsel %vm143, %v102, 0
  %v415 = vsel %vm143, %v103, 0
  %v418 = vsel %vm143, %v104, 0
  %v421 = vsel %vm143, %v105, 0
  %v424 = vsel %vm143, %v106, 0
  %v427 = vsel %vm143, %v107, 0
  %v430 = vsel %vm143, %v108, 0
  %v433 = vsel %vm143, %v109, 0
  %v436 = vsel %vm143, %v110, 0
  %v439 = vsel %vm143, %v111, 0
  %v442 = vsel %vm143, %v112, 0
  %v445 = vsel %vm143, %v113, 0
  %v448 = vsel %vm143, %v114, 0
  %v451 = vsel %vm143, %v115, 0
  %v454 = vsel %vm143, %v116, 0
  %v457 = vsel %vm143, %v117, 0
  %v460 = vsel %vm143, %v118, 0
  %v463 = vsel %vm143, %v119, 0
  %v466 = vsel %vm143, %v120, 0
  %v469 = vsel %vm143, %v121, 0
  %v472 = vsel %vm143, %v122, 0
  %v475 = vsel %vm143, %v123, 0
  %v478 = vsel %vm143, %v124, 0
  %v481 = vsel %vm143, %v125, 0
  %v484 = vsel %vm143, %v126, 0
  %v487 = vsel %vm143, %v127, 0
  %v490 = vsel %vm143, %v128, 0
  %v493 = vsel %vm143, %v129, 0
  %v496 = vsel %vm143, %v130, 0
  %v499 = vsel %vm143, %v131, 0
  %v502 = vsel %vm143, %v132, 0
  %v505 = vsel %vm143, %v133, 0
  %v508 = vsel %vm143, %v134, 0
  %v511 = vsel %vm143, %v135, 0
  %v514 = vsel %vm143, %v136, 0
  %v517 = vsel %vm143, %v137, 0
  %v520 = vsel %vm143, %v138, 0
  %v523 = vsel %vm143, %v139, 0
  %v526 = vsel %vm143, %v140, 0
  %v529 = vsel %vm143, %v141, 0
  %531 = vmatprep.subr.mxu0 0.0
  %532 = vmatpush1.xpose.msra.mxu0 %v193
  %533 = vmatprep.subr.mxu0 0.0
  %534 = vmatpush1.xpose.msra.mxu0 %v190
  %535 = vmatprep.subr.mxu0 0.0
  %536 = vmatpush1.xpose.msra.mxu0 %v187
  %537 = vmatprep.subr.mxu0 0.0
  %538 = vmatpush1.xpose.msra.mxu0 %v184
  %539 = vmatprep.subr.mxu0 0.0
  %540 = vmatpush1.xpose.msra.mxu0 %v181
  %541 = vmatprep.subr.mxu0 0.0
  %542 = vmatpush1.xpose.msra.mxu0 %v178
  %543 = vmatprep.subr.mxu0 0.0
  %544 = vmatpush1.xpose.msra.mxu0 %v175
  %545 = vmatprep.subr.mxu0 0.0
  %546 = vmatpush1.xpose.msra.mxu0 %v172
  %547 = vmatprep.subr.mxu0 0.0
  %548 = vmatpush1.xpose.msra.mxu0 %v169
  %549 = vmatprep.subr.mxu0 0.0
  %550 = vmatpush1.xpose.msra.mxu0 %v166
  %551 = vmatprep.subr.mxu0 0.0
  %552 = vmatpush1.xpose.msra.mxu0 %v163
  %553 = vmatprep.subr.mxu0 0.0
  %554 = vmatpush1.xpose.msra.mxu0 %v160
  %555 = vmatprep.subr.mxu0 0.0
  %556 = vmatpush1.xpose.msra.mxu0 %v157
  %557 = vmatprep.subr.mxu0 0.0
  %558 = vmatpush1.xpose.msra.mxu0 %v154
  %559 = vmatprep.subr.mxu0 0.0
  %560 = vmatpush1.xpose.msra.mxu0 %v151
  %561 = vmatprep.subr.mxu0 0.0
  %562 = vmatpush1.xpose.msra.mxu0 %v148
  %563 = vmatprep.subr.mxu0 0.0
  %564 = vmatpush2.xpose.msra.mxu0 %v241
  %565 = vmatprep.subr.mxu0 0.0
  %566 = vmatpush2.xpose.msra.mxu0 %v238
  %567 = vmatprep.subr.mxu0 0.0
  %568 = vmatpush2.xpose.msra.mxu0 %v235
  %569 = vmatprep.subr.mxu0 0.0
  %570 = vmatpush2.xpose.msra.mxu0 %v232
  %571 = vmatprep.subr.mxu0 0.0
  %572 = vmatpush2.xpose.msra.mxu0 %v229
  %573 = vmatprep.subr.mxu0 0.0
  %574 = vmatpush2.xpose.msra.mxu0 %v226
  %575 = vmatprep.subr.mxu0 0.0
  %576 = vmatpush2.xpose.msra.mxu0 %v223
  %577 = vmatprep.subr.mxu0 0.0
  %578 = vmatpush2.xpose.msra.mxu0 %v220
  %579 = vmatprep.subr.mxu0 0.0
  %580 = vmatpush2.xpose.msra.mxu0 %v217
  %581 = vmatprep.subr.mxu0 0.0
  %582 = vmatpush2.xpose.msra.mxu0 %v214
  %583 = vmatprep.subr.mxu0 0.0
  %584 = vmatpush2.xpose.msra.mxu0 %v211
  %585 = vmatprep.subr.mxu0 0.0
  %586 = vmatpush2.xpose.msra.mxu0 %v208
  %587 = vmatprep.subr.mxu0 0.0
  %588 = vmatpush2.xpose.msra.mxu0 %v205
  %589 = vmatprep.subr.mxu0 0.0
  %590 = vmatpush2.xpose.msra.mxu0 %v202
  %591 = vmatprep.subr.mxu0 0.0
  %592 = vmatpush2.xpose.msra.mxu0 %v199
  %593 = vmatprep.subr.mxu0 0.0
  %594 = vmatpush2.xpose.msra.mxu0 %v196
  %595 = vmatprep.mubr.f32.mxu0 0.0
  %596 = vmatmul.mubr.f32.gmra.mxu0 %v145
  %v597 = vpop.f32.mrf.mxu0
  %v598 = vadd.f32 0.0, %v597
  %v599 = vpop.f32.mrf.mxu0
  %v600 = vadd.f32 0.0, %v599
  %601 = vdwg.mxu0
  %602 = vmatprep.subr.mxu0 0.0
  %603 = vmatpush1.xpose.msra.mxu0 %v289
  %604 = vmatprep.subr.mxu0 0.0
  %605 = vmatpush1.xpose.msra.mxu0 %v286
  %606 = vmatprep.subr.mxu0 0.0
  %607 = vmatpush1.xpose.msra.mxu0 %v283
  %608 = vmatprep.subr.mxu0 0.0
  %609 = vmatpush1.xpose.msra.mxu0 %v280
  %610 = vmatprep.subr.mxu0 0.0
  %611 = vmatpush1.xpose.msra.mxu0 %v277
  %612 = vmatprep.subr.mxu0 0.0
  %613 = vmatpush1.xpose.msra.mxu0 %v274
  %614 = vmatprep.subr.mxu0 0.0
  %615 = vmatpush1.xpose.msra.mxu0 %v271
  %616 = vmatprep.subr.mxu0 0.0
  %617 = vmatpush1.xpose.msra.mxu0 %v268
  %618 = vmatprep.subr.mxu0 0.0
  %619 = vmatpush1.xpose.msra.mxu0 %v265
  %620 = vmatprep.subr.mxu0 0.0
  %621 = vmatpush1.xpose.msra.mxu0 %v262
  %622 = vmatprep.subr.mxu0 0.0
  %623 = vmatpush1.xpose.msra.mxu0 %v259
  %624 = vmatprep.subr.mxu0 0.0
  %625 = vmatpush1.xpose.msra.mxu0 %v256
  %626 = vmatprep.subr.mxu0 0.0
  %627 = vmatpush1.xpose.msra.mxu0 %v253
  %628 = vmatprep.subr.mxu0 0.0
  %629 = vmatpush1.xpose.msra.mxu0 %v250
  %630 = vmatprep.subr.mxu0 0.0
  %631 = vmatpush1.xpose.msra.mxu0 %v247
  %632 = vmatprep.subr.mxu0 0.0
  %633 = vmatpush1.xpose.msra.mxu0 %v244
  %634 = vmatprep.subr.mxu0 0.0
  %635 = vmatpush2.xpose.msra.mxu0 %v337
  %636 = vmatprep.subr.mxu0 0.0
  %637 = vmatpush2.xpose.msra.mxu0 %v334
  %638 = vmatprep.subr.mxu0 0.0
  %639 = vmatpush2.xpose.msra.mxu0 %v331
  %640 = vmatprep.subr.mxu0 0.0
  %641 = vmatpush2.xpose.msra.mxu0 %v328
  %642 = vmatprep.subr.mxu0 0.0
  %643 = vmatpush2.xpose.msra.mxu0 %v325
  %644 = vmatprep.subr.mxu0 0.0
  %645 = vmatpush2.xpose.msra.mxu0 %v322
  %646 = vmatprep.subr.mxu0 0.0
  %647 = vmatpush2.xpose.msra.mxu0 %v319
  %648 = vmatprep.subr.mxu0 0.0
  %649 = vmatpush2.xpose.msra.mxu0 %v316
  %650 = vmatprep.subr.mxu0 0.0
  %651 = vmatpush2.xpose.msra.mxu0 %v313
  %652 = vmatprep.subr.mxu0 0.0
  %653 = vmatpush2.xpose.msra.mxu0 %v310
  %654 = vmatprep.subr.mxu0 0.0
  %655 = vmatpush2.xpose.msra.mxu0 %v307
  %656 = vmatprep.subr.mxu0 0.0
  %657 = vmatpush2.xpose.msra.mxu0 %v304
  %658 = vmatprep.subr.mxu0 0.0
  %659 = vmatpush2.xpose.msra.mxu0 %v301
  %660 = vmatprep.subr.mxu0 0.0
  %661 = vmatpush2.xpose.msra.mxu0 %v298
  %662 = vmatprep.subr.mxu0 0.0
  %663 = vmatpush2.xpose.msra.mxu0 %v295
  %664 = vmatprep.subr.mxu0 0.0
  %665 = vmatpush2.xpose.msra.mxu0 %v292
  %666 = vmatprep.mubr.f32.mxu0 0.0
  %667 = vmatmul.mubr.f32.gmra.mxu0 %v145
  %v668 = vpop.f32.mrf.mxu0
  %v669 = vadd.f32 0.0, %v668
  %v670 = vpop.f32.mrf.mxu0
  %v671 = vadd.f32 0.0, %v670
  %672 = vdwg.mxu0
  %673 = vmatprep.subr.mxu0 0.0
  %674 = vmatpush1.xpose.msra.mxu0 %v385
  %675 = vmatprep.subr.mxu0 0.0
  %676 = vmatpush1.xpose.msra.mxu0 %v382
  %677 = vmatprep.subr.mxu0 0.0
  %678 = vmatpush1.xpose.msra.mxu0 %v379
  %679 = vmatprep.subr.mxu0 0.0
  %680 = vmatpush1.xpose.msra.mxu0 %v376
  %681 = vmatprep.subr.mxu0 0.0
  %682 = vmatpush1.xpose.msra.mxu0 %v373
  %683 = vmatprep.subr.mxu0 0.0
  %684 = vmatpush1.xpose.msra.mxu0 %v370
  %685 = vmatprep.subr.mxu0 0.0
  %686 = vmatpush1.xpose.msra.mxu0 %v367
  %687 = vmatprep.subr.mxu0 0.0
  %688 = vmatpush1.xpose.msra.mxu0 %v364
  %689 = vmatprep.subr.mxu0 0.0
  %690 = vmatpush1.xpose.msra.mxu0 %v361
  %691 = vmatprep.subr.mxu0 0.0
  %692 = vmatpush1.xpose.msra.mxu0 %v358
  %693 = vmatprep.subr.mxu0 0.0
  %694 = vmatpush1.xpose.msra.mxu0 %v355
  %695 = vmatprep.subr.mxu0 0.0
  %696 = vmatpush1.xpose.msra.mxu0 %v352
  %697 = vmatprep.subr.mxu0 0.0
  %698 = vmatpush1.xpose.msra.mxu0 %v349
  %699 = vmatprep.subr.mxu0 0.0
  %700 = vmatpush1.xpose.msra.mxu0 %v346
  %701 = vmatprep.subr.mxu0 0.0
  %702 = vmatpush1.xpose.msra.mxu0 %v343
  %703 = vmatprep.subr.mxu0 0.0
  %704 = vmatpush1.xpose.msra.mxu0 %v340
  %705 = vmatprep.subr.mxu0 0.0
  %706 = vmatpush2.xpose.msra.mxu0 %v433
  %707 = vmatprep.subr.mxu0 0.0
  %708 = vmatpush2.xpose.msra.mxu0 %v430
  %709 = vmatprep.subr.mxu0 0.0
  %710 = vmatpush2.xpose.msra.mxu0 %v427
  %711 = vmatprep.subr.mxu0 0.0
  %712 = vmatpush2.xpose.msra.mxu0 %v424
  %713 = vmatprep.subr.mxu0 0.0
  %714 = vmatpush2.xpose.msra.mxu0 %v421
  %715 = vmatprep.subr.mxu0 0.0
  %716 = vmatpush2.xpose.msra.mxu0 %v418
  %717 = vmatprep.subr.mxu0 0.0
  %718 = vmatpush2.xpose.msra.mxu0 %v415
  %719 = vmatprep.subr.mxu0 0.0
  %720 = vmatpush2.xpose.msra.mxu0 %v412
  %721 = vmatprep.subr.mxu0 0.0
  %722 = vmatpush2.xpose.msra.mxu0 %v409
  %723 = vmatprep.subr.mxu0 0.0
  %724 = vmatpush2.xpose.msra.mxu0 %v406
  %725 = vmatprep.subr.mxu0 0.0
  %726 = vmatpush2.xpose.msra.mxu0 %v403
  %727 = vmatprep.subr.mxu0 0.0
  %728 = vmatpush2.xpose.msra.mxu0 %v400
  %729 = vmatprep.subr.mxu0 0.0
  %730 = vmatpush2.xpose.msra.mxu0 %v397
  %731 = vmatprep.subr.mxu0 0.0
  %732 = vmatpush2.xpose.msra.mxu0 %v394
  %733 = vmatprep.subr.mxu0 0.0
  %734 = vmatpush2.xpose.msra.mxu0 %v391
  %735 = vmatprep.subr.mxu0 0.0
  %736 = vmatpush2.xpose.msra.mxu0 %v388
  %737 = vmatprep.mubr.f32.mxu0 0.0
  %738 = vmatmul.mubr.f32.gmra.mxu0 %v145
  %v739 = vpop.f32.mrf.mxu0
  %v740 = vadd.f32 0.0, %v739
  %v741 = vpop.f32.mrf.mxu0
  %v742 = vadd.f32 0.0, %v741
  %743 = vdwg.mxu0
  %744 = vmatprep.subr.mxu0 0.0
  %745 = vmatpush1.xpose.msra.mxu0 %v481
  %746 = vmatprep.subr.mxu0 0.0
  %747 = vmatpush1.xpose.msra.mxu0 %v478
  %748 = vmatprep.subr.mxu0 0.0
  %749 = vmatpush1.xpose.msra.mxu0 %v475
  %750 = vmatprep.subr.mxu0 0.0
  %751 = vmatpush1.xpose.msra.mxu0 %v472
  %752 = vmatprep.subr.mxu0 0.0
  %753 = vmatpush1.xpose.msra.mxu0 %v469
  %754 = vmatprep.subr.mxu0 0.0
  %755 = vmatpush1.xpose.msra.mxu0 %v466
  %756 = vmatprep.subr.mxu0 0.0
  %757 = vmatpush1.xpose.msra.mxu0 %v463
  %758 = vmatprep.subr.mxu0 0.0
  %759 = vmatpush1.xpose.msra.mxu0 %v460
  %760 = vmatprep.subr.mxu0 0.0
  %761 = vmatpush1.xpose.msra.mxu0 %v457
  %762 = vmatprep.subr.mxu0 0.0
  %763 = vmatpush1.xpose.msra.mxu0 %v454
  %764 = vmatprep.subr.mxu0 0.0
  %765 = vmatpush1.xpose.msra.mxu0 %v451
  %766 = vmatprep.subr.mxu0 0.0
  %767 = vmatpush1.xpose.msra.mxu0 %v448
  %768 = vmatprep.subr.mxu0 0.0
  %769 = vmatpush1.xpose.msra.mxu0 %v445
  %770 = vmatprep.subr.mxu0 0.0
  %771 = vmatpush1.xpose.msra.mxu0 %v442
  %772 = vmatprep.subr.mxu0 0.0
  %773 = vmatpush1.xpose.msra.mxu0 %v439
  %774 = vmatprep.subr.mxu0 0.0
  %775 = vmatpush1.xpose.msra.mxu0 %v436
  %776 = vmatprep.subr.mxu0 0.0
  %777 = vmatpush2.xpose.msra.mxu0 %v529
  %778 = vmatprep.subr.mxu0 0.0
  %779 = vmatpush2.xpose.msra.mxu0 %v526
  %780 = vmatprep.subr.mxu0 0.0
  %781 = vmatpush2.xpose.msra.mxu0 %v523
  %782 = vmatprep.subr.mxu0 0.0
  %783 = vmatpush2.xpose.msra.mxu0 %v520
  %784 = vmatprep.subr.mxu0 0.0
  %785 = vmatpush2.xpose.msra.mxu0 %v517
  %786 = vmatprep.subr.mxu0 0.0
  %787 = vmatpush2.xpose.msra.mxu0 %v514
  %788 = vmatprep.subr.mxu0 0.0
  %789 = vmatpush2.xpose.msra.mxu0 %v511
  %790 = vmatprep.subr.mxu0 0.0
  %791 = vmatpush2.xpose.msra.mxu0 %v508
  %792 = vmatprep.subr.mxu0 0.0
  %793 = vmatpush2.xpose.msra.mxu0 %v505
  %794 = vmatprep.subr.mxu0 0.0
  %795 = vmatpush2.xpose.msra.mxu0 %v502
  %796 = vmatprep.subr.mxu0 0.0
  %797 = vmatpush2.xpose.msra.mxu0 %v499
  %798 = vmatprep.subr.mxu0 0.0
  %799 = vmatpush2.xpose.msra.mxu0 %v496
  %800 = vmatprep.subr.mxu0 0.0
  %801 = vmatpush2.xpose.msra.mxu0 %v493
  %802 = vmatprep.subr.mxu0 0.0
  %803 = vmatpush2.xpose.msra.mxu0 %v490
  %804 = vmatprep.subr.mxu0 0.0
  %805 = vmatpush2.xpose.msra.mxu0 %v487
  %806 = vmatprep.subr.mxu0 0.0
  %807 = vmatpush2.xpose.msra.mxu0 %v484
  %808 = vmatprep.mubr.f32.mxu0 0.0
  %809 = vmatmul.mubr.f32.gmra.mxu0 %v145
  %v810 = vpop.f32.mrf.mxu0
  %v811 = vadd.f32 0.0, %v810
  %v812 = vpop.f32.mrf.mxu0
  %v813 = vadd.f32 0.0, %v812
  %814 = vdwg.mxu0
  %vm815 = vcmask 1041408
  %v816 = vsel %vm815, %v598, -inf
  %v817 = vrot.slane %v816, 4
  %v818 = vmax.f32 %v816, %v817
  %v819 = vrot.slane %v818, 2
  %v820 = vmax.f32 %v818, %v819
  %v821 = vrot.slane %v820, 1
  %v822 = vmax.f32 %v820, %v821
  %v823 = vsel %vm815, %v600, -inf
  %v824 = vrot.slane %v823, 4
  %v825 = vmax.f32 %v823, %v824
  %v826 = vrot.slane %v825, 2
  %v827 = vmax.f32 %v825, %v826
  %v828 = vrot.slane %v827, 1
  %v829 = vmax.f32 %v827, %v828
  %v830 = vsel %vm815, %v669, -inf
  %v831 = vrot.slane %v830, 4
  %v832 = vmax.f32 %v830, %v831
  %v833 = vrot.slane %v832, 2
  %v834 = vmax.f32 %v832, %v833
  %v835 = vrot.slane %v834, 1
  %v836 = vmax.f32 %v834, %v835
  %v837 = vsel %vm815, %v671, -inf
  %v838 = vrot.slane %v837, 4
  %v839 = vmax.f32 %v837, %v838
  %v840 = vrot.slane %v839, 2
  %v841 = vmax.f32 %v839, %v840
  %v842 = vrot.slane %v841, 1
  %v843 = vmax.f32 %v841, %v842
  %v844 = vsel %vm815, %v740, -inf
  %v845 = vrot.slane %v844, 4
  %v846 = vmax.f32 %v844, %v845
  %v847 = vrot.slane %v846, 2
  %v848 = vmax.f32 %v846, %v847
  %v849 = vrot.slane %v848, 1
  %v850 = vmax.f32 %v848, %v849
  %v851 = vsel %vm815, %v742, -inf
  %v852 = vrot.slane %v851, 4
  %v853 = vmax.f32 %v851, %v852
  %v854 = vrot.slane %v853, 2
  %v855 = vmax.f32 %v853, %v854
  %v856 = vrot.slane %v855, 1
  %v857 = vmax.f32 %v855, %v856
  %v858 = vsel %vm815, %v811, -inf
  %v859 = vrot.slane %v858, 4
  %v860 = vmax.f32 %v858, %v859
  %v861 = vrot.slane %v860, 2
  %v862 = vmax.f32 %v860, %v861
  %v863 = vrot.slane %v862, 1
  %v864 = vmax.f32 %v862, %v863
  %v865 = vsel %vm815, %v813, -inf
  %v866 = vrot.slane %v865, 4
  %v867 = vmax.f32 %v865, %v866
  %v868 = vrot.slane %v867, 2
  %v869 = vmax.f32 %v867, %v868
  %v870 = vrot.slane %v869, 1
  %v871 = vmax.f32 %v869, %v870
  %v872 = vsel %vm815, %v598, inf
  %v873 = vrot.slane %v872, 4
  %v874 = vmin.f32 %v872, %v873
  %v875 = vrot.slane %v874, 2
  %v876 = vmin.f32 %v874, %v875
  %v877 = vrot.slane %v876, 1
  %v878 = vmin.f32 %v876, %v877
  %v879 = vsel %vm815, %v600, inf
  %v880 = vrot.slane %v879, 4
  %v881 = vmin.f32 %v879, %v880
  %v882 = vrot.slane %v881, 2
  %v883 = vmin.f32 %v881, %v882
  %v884 = vrot.slane %v883, 1
  %v885 = vmin.f32 %v883, %v884
  %v886 = vsel %vm815, %v669, inf
  %v887 = vrot.slane %v886, 4
  %v888 = vmin.f32 %v886, %v887
  %v889 = vrot.slane %v888, 2
  %v890 = vmin.f32 %v888, %v889
  %v891 = vrot.slane %v890, 1
  %v892 = vmin.f32 %v890, %v891
  %v893 = vsel %vm815, %v671, inf
  %v894 = vrot.slane %v893, 4
  %v895 = vmin.f32 %v893, %v894
  %v896 = vrot.slane %v895, 2
  %v897 = vmin.f32 %v895, %v896
  %v898 = vrot.slane %v897, 1
  %v899 = vmin.f32 %v897, %v898
  %v900 = vsel %vm815, %v740, inf
  %v901 = vrot.slane %v900, 4
  %v902 = vmin.f32 %v900, %v901
  %v903 = vrot.slane %v902, 2
  %v904 = vmin.f32 %v902, %v903
  %v905 = vrot.slane %v904, 1
  %v906 = vmin.f32 %v904, %v905
  %v907 = vsel %vm815, %v742, inf
  %v908 = vrot.slane %v907, 4
  %v909 = vmin.f32 %v907, %v908
  %v910 = vrot.slane %v909, 2
  %v911 = vmin.f32 %v909, %v910
  %v912 = vrot.slane %v911, 1
  %v913 = vmin.f32 %v911, %v912
  %v914 = vsel %vm815, %v811, inf
  %v915 = vrot.slane %v914, 4
  %v916 = vmin.f32 %v914, %v915
  %v917 = vrot.slane %v916, 2
  %v918 = vmin.f32 %v916, %v917
  %v919 = vrot.slane %v918, 1
  %v920 = vmin.f32 %v918, %v919
  %v921 = vsel %vm815, %v813, inf
  %v922 = vrot.slane %v921, 4
  %v923 = vmin.f32 %v921, %v922
  %v924 = vrot.slane %v923, 2
  %v925 = vmin.f32 %v923, %v924
  %v926 = vrot.slane %v925, 1
  %v927 = vmin.f32 %v925, %v926
  %v928 = vlaneseq
  %v929 = vshrl.u32 %v928, 7
  %vm930 = vcmp.eq.f32.partialorder %v598, %v822
  %vm931 = vcmp.eq.f32.partialorder %v600, %v829
  %vm932 = vcmp.eq.f32.partialorder %v669, %v836
  %vm933 = vcmp.eq.f32.partialorder %v671, %v843
  %vm934 = vcmp.eq.f32.partialorder %v740, %v850
  %vm935 = vcmp.eq.f32.partialorder %v742, %v857
  %vm936 = vcmp.eq.f32.partialorder %v811, %v864
  %vm937 = vcmp.eq.f32.partialorder %v813, %v871
  %v938 = vsel %vm930, %v929, 2
  %v939 = vsel %vm931, %v929, 2
  %v940 = vsel %vm932, %v929, 2
  %v941 = vsel %vm933, %v929, 2
  %v942 = vsel %vm934, %v929, 2
  %v943 = vsel %vm935, %v929, 2
  %v944 = vsel %vm936, %v929, 2
  %v945 = vsel %vm937, %v929, 2
  %v946 = vsel %vm815, %v938, 2147483647
  %v947 = vrot.slane %v946, 4
  %vm948 = vcmp.lt.s32.totalorder %v946, %v947
  %v949 = vsel %vm948, %v946, %v947
  %v950 = vrot.slane %v949, 2
  %vm951 = vcmp.lt.s32.totalorder %v949, %v950
  %v952 = vsel %vm951, %v949, %v950
  %v953 = vrot.slane %v952, 1
  %vm954 = vcmp.lt.s32.totalorder %v952, %v953
  %v955 = vsel %vm954, %v952, %v953
  %v956 = vsel %vm815, %v939, 2147483647
  %v957 = vrot.slane %v956, 4
  %vm958 = vcmp.lt.s32.totalorder %v956, %v957
  %v959 = vsel %vm958, %v956, %v957
  %v960 = vrot.slane %v959, 2
  %vm961 = vcmp.lt.s32.totalorder %v959, %v960
  %v962 = vsel %vm961, %v959, %v960
  %v963 = vrot.slane %v962, 1
  %vm964 = vcmp.lt.s32.totalorder %v962, %v963
  %v965 = vsel %vm964, %v962, %v963
  %v966 = vsel %vm815, %v940, 2147483647
  %v967 = vrot.slane %v966, 4
  %vm968 = vcmp.lt.s32.totalorder %v966, %v967
  %v969 = vsel %vm968, %v966, %v967
  %v970 = vrot.slane %v969, 2
  %vm971 = vcmp.lt.s32.totalorder %v969, %v970
  %v972 = vsel %vm971, %v969, %v970
  %v973 = vrot.slane %v972, 1
  %vm974 = vcmp.lt.s32.totalorder %v972, %v973
  %v975 = vsel %vm974, %v972, %v973
  %v976 = vsel %vm815, %v941, 2147483647
  %v977 = vrot.slane %v976, 4
  %vm978 = vcmp.lt.s32.totalorder %v976, %v977
  %v979 = vsel %vm978, %v976, %v977
  %v980 = vrot.slane %v979, 2
  %vm981 = vcmp.lt.s32.totalorder %v979, %v980
  %v982 = vsel %vm981, %v979, %v980
  %v983 = vrot.slane %v982, 1
  %vm984 = vcmp.lt.s32.totalorder %v982, %v983
  %v985 = vsel %vm984, %v982, %v983
  %v986 = vsel %vm815, %v942, 2147483647
  %v987 = vrot.slane %v986, 4
  %vm988 = vcmp.lt.s32.totalorder %v986, %v987
  %v989 = vsel %vm988, %v986, %v987
  %v990 = vrot.slane %v989, 2
  %vm991 = vcmp.lt.s32.totalorder %v989, %v990
  %v992 = vsel %vm991, %v989, %v990
  %v993 = vrot.slane %v992, 1
  %vm994 = vcmp.lt.s32.totalorder %v992, %v993
  %v995 = vsel %vm994, %v992, %v993
  %v996 = vsel %vm815, %v943, 2147483647
  %v997 = vrot.slane %v996, 4
  %vm998 = vcmp.lt.s32.totalorder %v996, %v997
  %v999 = vsel %vm998, %v996, %v997
  %v1000 = vrot.slane %v999, 2
  %vm1001 = vcmp.lt.s32.totalorder %v999, %v1000
  %v1002 = vsel %vm1001, %v999, %v1000
  %v1003 = vrot.slane %v1002, 1
  %vm1004 = vcmp.lt.s32.totalorder %v1002, %v1003
  %v1005 = vsel %vm1004, %v1002, %v1003
  %v1006 = vsel %vm815, %v944, 2147483647
  %v1007 = vrot.slane %v1006, 4
  %vm1008 = vcmp.lt.s32.totalorder %v1006, %v1007
  %v1009 = vsel %vm1008, %v1006, %v1007
  %v1010 = vrot.slane %v1009, 2
  %vm1011 = vcmp.lt.s32.totalorder %v1009, %v1010
  %v1012 = vsel %vm1011, %v1009, %v1010
  %v1013 = vrot.slane %v1012, 1
  %vm1014 = vcmp.lt.s32.totalorder %v1012, %v1013
  %v1015 = vsel %vm1014, %v1012, %v1013
  %v1016 = vsel %vm815, %v945, 2147483647
  %v1017 = vrot.slane %v1016, 4
  %vm1018 = vcmp.lt.s32.totalorder %v1016, %v1017
  %v1019 = vsel %vm1018, %v1016, %v1017
  %v1020 = vrot.slane %v1019, 2
  %vm1021 = vcmp.lt.s32.totalorder %v1019, %v1020
  %v1022 = vsel %vm1021, %v1019, %v1020
  %v1023 = vrot.slane %v1022, 1
  %vm1024 = vcmp.lt.s32.totalorder %v1022, %v1023
  %v1025 = vsel %vm1024, %v1022, %v1023
  %vm1026 = vcmp.eq.f32.partialorder %v598, %v878
  %vm1027 = vcmp.eq.f32.partialorder %v600, %v885
  %vm1028 = vcmp.eq.f32.partialorder %v669, %v892
  %vm1029 = vcmp.eq.f32.partialorder %v671, %v899
  %vm1030 = vcmp.eq.f32.partialorder %v740, %v906
  %vm1031 = vcmp.eq.f32.partialorder %v742, %v913
  %vm1032 = vcmp.eq.f32.partialorder %v811, %v920
  %vm1033 = vcmp.eq.f32.partialorder %v813, %v927
  %v1034 = vsel %vm1026, %v929, 2
  %v1035 = vsel %vm1027, %v929, 2
  %v1036 = vsel %vm1028, %v929, 2
  %v1037 = vsel %vm1029, %v929, 2
  %v1038 = vsel %vm1030, %v929, 2
  %v1039 = vsel %vm1031, %v929, 2
  %v1040 = vsel %vm1032, %v929, 2
  %v1041 = vsel %vm1033, %v929, 2
  %v1042 = vsel %vm815, %v1034, 2147483647
  %v1043 = vrot.slane %v1042, 4
  %vm1044 = vcmp.lt.s32.totalorder %v1042, %v1043
  %v1045 = vsel %vm1044, %v1042, %v1043
  %v1046 = vrot.slane %v1045, 2
  %vm1047 = vcmp.lt.s32.totalorder %v1045, %v1046
  %v1048 = vsel %vm1047, %v1045, %v1046
  %v1049 = vrot.slane %v1048, 1
  %vm1050 = vcmp.lt.s32.totalorder %v1048, %v1049
  %v1051 = vsel %vm1050, %v1048, %v1049
  %v1052 = vsel %vm815, %v1035, 2147483647
  %v1053 = vrot.slane %v1052, 4
  %vm1054 = vcmp.lt.s32.totalorder %v1052, %v1053
  %v1055 = vsel %vm1054, %v1052, %v1053
  %v1056 = vrot.slane %v1055, 2
  %vm1057 = vcmp.lt.s32.totalorder %v1055, %v1056
  %v1058 = vsel %vm1057, %v1055, %v1056
  %v1059 = vrot.slane %v1058, 1
  %vm1060 = vcmp.lt.s32.totalorder %v1058, %v1059
  %v1061 = vsel %vm1060, %v1058, %v1059
  %v1062 = vsel %vm815, %v1036, 2147483647
  %v1063 = vrot.slane %v1062, 4
  %vm1064 = vcmp.lt.s32.totalorder %v1062, %v1063
  %v1065 = vsel %vm1064, %v1062, %v1063
  %v1066 = vrot.slane %v1065, 2
  %vm1067 = vcmp.lt.s32.totalorder %v1065, %v1066
  %v1068 = vsel %vm1067, %v1065, %v1066
  %v1069 = vrot.slane %v1068, 1
  %vm1070 = vcmp.lt.s32.totalorder %v1068, %v1069
  %v1071 = vsel %vm1070, %v1068, %v1069
  %v1072 = vsel %vm815, %v1037, 2147483647
  %v1073 = vrot.slane %v1072, 4
  %vm1074 = vcmp.lt.s32.totalorder %v1072, %v1073
  %v1075 = vsel %vm1074, %v1072, %v1073
  %v1076 = vrot.slane %v1075, 2
  %vm1077 = vcmp.lt.s32.totalorder %v1075, %v1076
  %v1078 = vsel %vm1077, %v1075, %v1076
  %v1079 = vrot.slane %v1078, 1
  %vm1080 = vcmp.lt.s32.totalorder %v1078, %v1079
  %v1081 = vsel %vm1080, %v1078, %v1079
  %v1082 = vsel %vm815, %v1038, 2147483647
  %v1083 = vrot.slane %v1082, 4
  %vm1084 = vcmp.lt.s32.totalorder %v1082, %v1083
  %v1085 = vsel %vm1084, %v1082, %v1083
  %v1086 = vrot.slane %v1085, 2
  %vm1087 = vcmp.lt.s32.totalorder %v1085, %v1086
  %v1088 = vsel %vm1087, %v1085, %v1086
  %v1089 = vrot.slane %v1088, 1
  %vm1090 = vcmp.lt.s32.totalorder %v1088, %v1089
  %v1091 = vsel %vm1090, %v1088, %v1089
  %v1092 = vsel %vm815, %v1039, 2147483647
  %v1093 = vrot.slane %v1092, 4
  %vm1094 = vcmp.lt.s32.totalorder %v1092, %v1093
  %v1095 = vsel %vm1094, %v1092, %v1093
  %v1096 = vrot.slane %v1095, 2
  %vm1097 = vcmp.lt.s32.totalorder %v1095, %v1096
  %v1098 = vsel %vm1097, %v1095, %v1096
  %v1099 = vrot.slane %v1098, 1
  %vm1100 = vcmp.lt.s32.totalorder %v1098, %v1099
  %v1101 = vsel %vm1100, %v1098, %v1099
  %v1102 = vsel %vm815, %v1040, 2147483647
  %v1103 = vrot.slane %v1102, 4
  %vm1104 = vcmp.lt.s32.totalorder %v1102, %v1103
  %v1105 = vsel %vm1104, %v1102, %v1103
  %v1106 = vrot.slane %v1105, 2
  %vm1107 = vcmp.lt.s32.totalorder %v1105, %v1106
  %v1108 = vsel %vm1107, %v1105, %v1106
  %v1109 = vrot.slane %v1108, 1
  %vm1110 = vcmp.lt.s32.totalorder %v1108, %v1109
  %v1111 = vsel %vm1110, %v1108, %v1109
  %v1112 = vsel %vm815, %v1041, 2147483647
  %v1113 = vrot.slane %v1112, 4
  %vm1114 = vcmp.lt.s32.totalorder %v1112, %v1113
  %v1115 = vsel %vm1114, %v1112, %v1113
  %v1116 = vrot.slane %v1115, 2
  %vm1117 = vcmp.lt.s32.totalorder %v1115, %v1116
  %v1118 = vsel %vm1117, %v1115, %v1116
  %v1119 = vrot.slane %v1118, 1
  %vm1120 = vcmp.lt.s32.totalorder %v1118, %v1119
  %v1121 = vsel %vm1120, %v1118, %v1119
  %v1122 = vsub.f32 0.0, %v878
  %v1123 = vsub.f32 0.0, %v885
  %v1124 = vsub.f32 0.0, %v892
  %v1125 = vsub.f32 0.0, %v899
  %v1126 = vsub.f32 0.0, %v906
  %v1127 = vsub.f32 0.0, %v913
  %v1128 = vsub.f32 0.0, %v920
  %v1129 = vsub.f32 0.0, %v927
  %vm1130 = vcmp.ge.f32.partialorder %v822, %v1122
  %vm1131 = vcmp.ge.f32.partialorder %v829, %v1123
  %vm1132 = vcmp.ge.f32.partialorder %v836, %v1124
  %vm1133 = vcmp.ge.f32.partialorder %v843, %v1125
  %vm1134 = vcmp.ge.f32.partialorder %v850, %v1126
  %vm1135 = vcmp.ge.f32.partialorder %v857, %v1127
  %vm1136 = vcmp.ge.f32.partialorder %v864, %v1128
  %vm1137 = vcmp.ge.f32.partialorder %v871, %v1129
  %v1138 = vadd.s32 %v1051, 2
  %v1139 = vadd.s32 %v1061, 2
  %v1140 = vadd.s32 %v1071, 2
  %v1141 = vadd.s32 %v1081, 2
  %v1142 = vadd.s32 %v1091, 2
  %v1143 = vadd.s32 %v1101, 2
  %v1144 = vadd.s32 %v1111, 2
  %v1145 = vadd.s32 %v1121, 2
  %v1146 = vsel %vm1130, %v955, %v1138
  %v1147 = vsel %vm1131, %v965, %v1139
  %v1148 = vsel %vm1132, %v975, %v1140
  %v1149 = vsel %vm1133, %v985, %v1141
  %v1150 = vsel %vm1134, %v995, %v1142
  %v1151 = vsel %vm1135, %v1005, %v1143
  %v1152 = vsel %vm1136, %v1015, %v1144
  %v1153 = vsel %vm1137, %v1025, %v1145
  %v1154 = vld [vmem:[%s2] sm:$0xff]
  %vm1155 = vcmp.ne.s32.totalorder %v1154, 0
  %v1156 = vsel %vm1155, 0, 3
  %v1157 = vlaneseq
  %v1158 = vshrl.u32 %v1157, 7
  %v1159 = vsub.s32 0, %v1158
  %v1160 = vrot.slane %v1156, %v1159
  %v1161 = vlaneseq
  %v1162 = vshrl.u32 %v1161, 7
  %v1163 = vsub.s32 1, %v1162
  %v1164 = vrot.slane %v1156, %v1163
  %v1165 = vlaneseq
  %v1166 = vshrl.u32 %v1165, 7
  %v1167 = vsub.s32 2, %v1166
  %v1168 = vrot.slane %v1156, %v1167
  %v1169 = vlaneseq
  %v1170 = vshrl.u32 %v1169, 7
  %v1171 = vsub.s32 3, %v1170
  %v1172 = vrot.slane %v1156, %v1171
  %v1173 = vlaneseq
  %v1174 = vshrl.u32 %v1173, 7
  %v1175 = vsub.s32 4, %v1174
  %v1176 = vrot.slane %v1156, %v1175
  %v1177 = vlaneseq
  %v1178 = vshrl.u32 %v1177, 7
  %v1179 = vsub.s32 5, %v1178
  %v1180 = vrot.slane %v1156, %v1179
  %v1181 = vlaneseq
  %v1182 = vshrl.u32 %v1181, 7
  %v1183 = vsub.s32 6, %v1182
  %v1184 = vrot.slane %v1156, %v1183
  %v1185 = vlaneseq
  %v1186 = vshrl.u32 %v1185, 7
  %v1187 = vsub.s32 7, %v1186
  %v1188 = vrot.slane %v1156, %v1187
  %v1189 = vadd.s32 %v1146, %v1160
  %v1190 = vadd.s32 %v1147, %v1164
  %v1191 = vadd.s32 %v1148, %v1168
  %v1192 = vadd.s32 %v1149, %v1172
  %v1193 = vadd.s32 %v1150, %v1176
  %v1194 = vadd.s32 %v1151, %v1180
  %v1195 = vadd.s32 %v1152, %v1184
  %v1196 = vadd.s32 %v1153, %v1188
  %v1197 = vcombine.low %v1189, %v1190
  %v1198 = vcombine.low %v1191, %v1192
  %v1199 = vcombine.low %v1193, %v1194
  %v1200 = vcombine.low %v1195, %v1196
  %v1202 = vunpack.c.l.s4 1966171168
  %v1203 = vunpack.c.0.s8 %v1202
  %v1204 = vlaneseq
  %v1205 = vshrl.u32 %v1204, 7
  %v1206 = vsub.s32 %v1203, %v1205
  %v1207 = vrot.slane %v1197, %v1206
  %v1209 = vunpack.c.l.s4 1966171168
  %v1210 = vunpack.c.0.s8 %v1209
  %v1211 = vlaneseq
  %v1212 = vshrl.u32 %v1211, 7
  %v1213 = vsub.s32 %v1210, %v1212
  %v1214 = vrot.slane %v1198, %v1213
  %v1216 = vunpack.c.l.s4 1966171168
  %v1217 = vunpack.c.0.s8 %v1216
  %v1218 = vlaneseq
  %v1219 = vshrl.u32 %v1218, 7
  %v1220 = vsub.s32 %v1217, %v1219
  %v1221 = vrot.slane %v1199, %v1220
  %v1223 = vunpack.c.l.s4 1966171168
  %v1224 = vunpack.c.0.s8 %v1223
  %v1225 = vlaneseq
  %v1226 = vshrl.u32 %v1225, 7
  %v1227 = vsub.s32 %v1224, %v1226
  %v1228 = vrot.slane %v1200, %v1227
  %v1229 = vcombine.low %v1207, %v1214
  %v1230 = vcombine.low %v1221, %v1228
  %v1232 = vunpack.c.l.s4 1966171168
  %v1233 = vunpack.c.0.s8 %v1232
  %v1234 = vlaneseq
  %v1235 = vshrl.u32 %v1234, 7
  %v1236 = vsub.s32 %v1233, %v1235
  %v1237 = vrot.slane %v1229, %v1236
  %v1239 = vunpack.c.l.s4 1966171168
  %v1240 = vunpack.c.0.s8 %v1239
  %v1241 = vlaneseq
  %v1242 = vshrl.u32 %v1241, 7
  %v1243 = vsub.s32 %v1240, %v1242
  %v1244 = vrot.slane %v1230, %v1243
  %v1245 = vcombine.low %v1237, %v1244
  %1246 = vst [vmem:[%s3] sm:$0xff] %v1245
  // Predicated region
  $region14: #{message_building_layer_lsh.2} parent=0 // pred_check
    _
  $region15: #{message_building_layer_lsh.2} parent=0 // pred_check_branch
    %1248 = sbr.rel (0) target = $region17
  $region16: #{message_building_layer_lsh.2} parent=0 // pred_region
    _
  $region17: #{message_building_layer_lsh.2} parent=0 // pred_fallthru
    _
  // Predicated region
  $region18: #{message_building_layer_lsh.2} parent=0 // pred_check
    _
  $region19: #{message_building_layer_lsh.2} parent=0 // pred_check_branch
    %1250 = sbr.rel (0) target = $region21
  $region20: #{message_building_layer_lsh.2} parent=0 // pred_region
    _
  $region21: #{message_building_layer_lsh.2} parent=0 // pred_fallthru
    _

// kernel: message_building_layer_lsh.3
$region0: #{message_building_layer_lsh.3}
  #allocation0 [shape = 'u32[]', space=smem, size = 0x4, offset = 0x4, fixed_abs, tag = 'smem constant byte address 0x4 - core index']
  #allocation1 [shape = 'u32[144,128]{1,0:T(1,128)}', space=vmem, size = 0x12000, scoped, tag = 'internal scratch']
  %s0 = inlined_call_operand.vmem [shape: f32[8,128,32], index: 0, kind: input, shape index: {}]
  %s1 = inlined_call_operand.vmem [shape: f32[8,1,128], index: 1, kind: input, shape index: {}]
  %s2 = inlined_call_operand.hbm [shape: f32[8,128,128], index: 2, kind: output, shape index: {}]
  %s3 = sld [smem:[#allocation0]]
  $region41: #{message_building_layer_lsh.3} parent=0
    _
  %s5 = ssub.s32 1, %s3
  %s6 = scalar_select 0, %s5, %s3
  $region1: #{message_building_layer_lsh.3} parent=0
    #allocation2 [shape = 'u8[524288]{0}', space=vmem, size = 0x80000, scoped, tag = 'output window, operand 0']
    #allocation3 [shape = 's32[2]{0}', space=sflag, size = 0x8, scoped, tag = 'scoped memory for message_building_layer_lsh.3']
    %7 = vsyncpa [#allocation3], 0
    %s8 = scalar_lea.sflag [#allocation3], 1
    %9 = vsyncpa %s8, 0
    loop: start=0, step=1, limit=4
    $region2: #{message_building_layer_lsh.3} parent=1 // loop_pre_header
      _
    $region3: #{message_building_layer_lsh.3} parent=1 // loop_header
      %s11 = sphi 0, %s15
      %p12 = scmp.ge.s32.totalorder %s11, 4
      %s21 = sphi 0, %s23
      %s24 = sphi 0, %s21
      %s25 = sphi 0, %s24
      %s41 = sphi 0, %s25
      %s47 = sphi 0, %s49
      %s50 = sphi 0, %s47
      %s51 = sphi 0, %s50
      %s67 = sphi 0, %s51
      %s73 = sphi 0, %s75
      %s76 = sphi 0, %s73
      %s77 = sphi 0, %s76
      %s93 = sphi 0, %s77
    $region4: #{message_building_layer_lsh.3} parent=1 // loop_header_branch
      %14 = sbr.rel (%p12) target = $region8
    $region5: #{message_building_layer_lsh.3} parent=1 // loop_body
      %s16 = ssub.s32 %s11, 1
      %s17 = ssub.s32 %s11, 2
      %s18 = sadd.s32 %s11, 1
      %s19 = ssub.s32 %s11, %s18
      %p20 = scmp.eq.s32.totalorder %s19, 0
      %s22 = sadd.s32 %s21, 1
      %s23 = scalar_select %p20, %s21, %s22
      %p26 = pneg %p20
      %p27 = scmp.eq.s32.totalorder %s11, 1
      %p28 = por %p26, %p27
      %p29 = scmp.ne.s32.totalorder %s21, %s24
      %p30 = scmp.eq.s32.totalorder %s11, 0
      %p31 = por %p29, %p30
      %p32 = scmp.ne.s32.totalorder %s21, %s24
      %p33 = scmp.eq.s32.totalorder %s16, 1
      %p34 = por %p32, %p33
      %p35 = scmp.ne.s32.totalorder %s24, %s25
      %p36 = scmp.eq.s32.totalorder %s16, 0
      %p37 = por %p35, %p36
      %p38 = scmp.ne.s32.totalorder %s24, %s25
      %p39 = scmp.eq.s32.totalorder %s17, 1
      %p40 = por %p38, %p39
      %p42 = scmp.ne.s32.totalorder %s25, %s41
      %p43 = scmp.eq.s32.totalorder %s17, 0
      %p44 = por %p42, %p43
      %s45 = ssub.s32 %s11, %s18
      %p46 = scmp.eq.s32.totalorder %s45, 0
      %s48 = sadd.s32 %s47, 1
      %s49 = scalar_select %p46, %s47, %s48
      %p52 = pneg %p46
      %p53 = scmp.eq.s32.totalorder %s11, 1
      %p54 = por %p52, %p53
      %p55 = scmp.ne.s32.totalorder %s47, %s50
      %p56 = scmp.eq.s32.totalorder %s11, 0
      %p57 = por %p55, %p56
      %p58 = scmp.ne.s32.totalorder %s47, %s50
      %p59 = scmp.eq.s32.totalorder %s16, 1
      %p60 = por %p58, %p59
      %p61 = scmp.ne.s32.totalorder %s50, %s51
      %p62 = scmp.eq.s32.totalorder %s16, 0
      %p63 = por %p61, %p62
      %p64 = scmp.ne.s32.totalorder %s50, %s51
      %p65 = scmp.eq.s32.totalorder %s17, 1
      %p66 = por %p64, %p65
      %p68 = scmp.ne.s32.totalorder %s51, %s67
      %p69 = scmp.eq.s32.totalorder %s17, 0
      %p70 = por %p68, %p69
      %s71 = ssub.s32 %s11, %s18
      %p72 = scmp.eq.s32.totalorder %s71, 0
      %s74 = sadd.s32 %s73, 1
      %s75 = scalar_select %p72, %s73, %s74
      %p78 = pneg %p72
      %p79 = scmp.eq.s32.totalorder %s11, 1
      %p80 = por %p78, %p79
      %p81 = scmp.ne.s32.totalorder %s73, %s76
      %p82 = scmp.eq.s32.totalorder %s11, 0
      %p83 = por %p81, %p82
      %p84 = scmp.ne.s32.totalorder %s73, %s76
      %p85 = scmp.eq.s32.totalorder %s16, 1
      %p86 = por %p84, %p85
      %p87 = scmp.ne.s32.totalorder %s76, %s77
      %p88 = scmp.eq.s32.totalorder %s16, 0
      %p89 = por %p87, %p88
      %p90 = scmp.ne.s32.totalorder %s76, %s77
      %p91 = scmp.eq.s32.totalorder %s17, 1
      %p92 = por %p90, %p91
      %p94 = scmp.ne.s32.totalorder %s77, %s93
      %p95 = scmp.eq.s32.totalorder %s17, 0
      %p96 = por %p94, %p95
      %p97 = scmp.le.s32.totalorder 1, %s11
      %p98 = scmp.lt.s32.totalorder %s11, 3
      %p99 = pnand %p97, %p98
      %p100 = pneg %p99
      // Predicated region
      $region9: #{message_building_layer_lsh.3} parent=5 // pred_check
        _
      $region10: #{message_building_layer_lsh.3} parent=5 // pred_check_branch
        %102 = sbr.rel (%p99) target = $region12
      $region11: #{message_building_layer_lsh.3} parent=5 // pred_region
        %s103 = ssub.s32 %s11, 1
      $region12: #{message_building_layer_lsh.3} parent=5 // pred_fallthru
        _
      %p104 = scmp.lt.s32.totalorder %s11, 2
      // Predicated region
      $region13: #{message_building_layer_lsh.3} parent=5 // pred_check
        %p105 = pneg %p104
      $region14: #{message_building_layer_lsh.3} parent=5 // pred_check_branch
        %107 = sbr.rel (%p105) target = $region16
      $region15: #{message_building_layer_lsh.3} parent=5 // pred_region
        // Predicated region
        $region17: #{message_building_layer_lsh.3} parent=15 // pred_check
          %p108 = pneg %p31
        $region18: #{message_building_layer_lsh.3} parent=15 // pred_check_branch
          %110 = sbr.rel (%p108) target = $region20
        $region19: #{message_building_layer_lsh.3} parent=15 // pred_region
          %s111 = smul.u32 4, %s11
          %p112 = scmp.lt.s32.totalorder %s111, 7
          %s113 = scalar_select %p112, %s111, 7
          %s114 = smul.addr %s113, 16
          %s115 = smul.addr %s114, 8
          %s116 = scalar_lea.vmem %s0, %s115
          %s117 = smul.u32 4, %s11
        $region20: #{message_building_layer_lsh.3} parent=15 // pred_fallthru
          _
        // Predicated region
        $region21: #{message_building_layer_lsh.3} parent=15 // pred_check
          %p118 = pneg %p57
        $region22: #{message_building_layer_lsh.3} parent=15 // pred_check_branch
          %120 = sbr.rel (%p118) target = $region24
        $region23: #{message_building_layer_lsh.3} parent=15 // pred_region
          %s121 = smul.u32 4, %s11
          %p122 = scmp.lt.s32.totalorder %s121, 7
          %s123 = scalar_select %p122, %s121, 7
          %s124 = scalar_lea.vmem %s1, %s123
          %s125 = smul.u32 4, %s11
        $region24: #{message_building_layer_lsh.3} parent=15 // pred_fallthru
          _
      $region16: #{message_building_layer_lsh.3} parent=5 // pred_fallthru
        _
      %p126 = scmp.le.s32.totalorder 1, %s11
      %p127 = scmp.lt.s32.totalorder %s11, 3
      %p128 = pnand %p126, %p127
      %p129 = pneg %p128
      // Predicated region
      $region25: #{message_building_layer_lsh.3} parent=5 // pred_check
        _
      $region26: #{message_building_layer_lsh.3} parent=5 // pred_check_branch
        %131 = sbr.rel (%p128) target = $region28
      $region27: #{message_building_layer_lsh.3} parent=5 // pred_region
        %s132 = ssub.s32 %s11, 1
        %s133 = smul.u32 4, %s16
        %p134 = scmp.lt.s32.totalorder %s133, 7
        %s135 = scalar_select %p134, %s133, 7
        %s136 = smul.addr %s135, 16
        %s137 = smul.addr %s136, 8
        %s138 = scalar_lea.vmem %s0, %s137
        %p139 = pneg %p37
        %p140 = pneg %p34
        %s141 = smul.u32 4, %s16
        %p142 = scmp.lt.s32.totalorder %s141, 7
        %s143 = scalar_select %p142, %s141, 7
        %s144 = scalar_lea.vmem %s1, %s143
        %p145 = pneg %p63
        %p146 = pneg %p60
        %p147 = pneg %p89
        %p148 = pneg %p86
        %s149 = sand.u32 %s76, 1
        %s150 = scalar_lea.sflag [#allocation3], %s149
        %s151 = sand.u32 %s76, 1
        %s152 = smul.addr %s151, 512
        %s153 = scalar_lea.vmem [#allocation2], %s152
        %s154 = smul.u32 4, %s16
        %p155 = scmp.lt.s32.totalorder %s154, 7
        %s156 = scalar_select %p155, %s154, 7
        %s157 = smul.addr %s156, 16
        %s158 = smul.addr %s157, 8
        %s159 = scalar_lea.vmem %s0, %s158
        %s160 = smul.u32 4, %s16
        %s161 = smul.u32 4, %s16
        %p162 = scmp.lt.s32.totalorder %s161, 7
        %s163 = scalar_select %p162, %s161, 7
        %s164 = scalar_lea.vmem %s1, %s163
        %s165 = smul.u32 4, %s16
        %s166 = smul.u32 4, %s16
        %v167 = vld [vmem:[%s159] sm:$0xff]
        %v168 = vld [vmem:[%s159 + $0x8] sm:$0xff]
        %v169 = vld [vmem:[%s159 + $0x10] sm:$0xff]
        %v170 = vld [vmem:[%s159 + $0x18] sm:$0xff]
        %v171 = vld [vmem:[%s159 + $0x20] sm:$0xff]
        %v172 = vld [vmem:[%s159 + $0x28] sm:$0xff]
        %v173 = vld [vmem:[%s159 + $0x30] sm:$0xff]
        %v174 = vld [vmem:[%s159 + $0x38] sm:$0xff]
        %v175 = vld [vmem:[%s159 + $0x40] sm:$0xff]
        %v176 = vld [vmem:[%s159 + $0x48] sm:$0xff]
        %v177 = vld [vmem:[%s159 + $0x50] sm:$0xff]
        %v178 = vld [vmem:[%s159 + $0x58] sm:$0xff]
        %v179 = vld [vmem:[%s159 + $0x60] sm:$0xff]
        %v180 = vld [vmem:[%s159 + $0x68] sm:$0xff]
        %v181 = vld [vmem:[%s159 + $0x70] sm:$0xff]
        %v182 = vld [vmem:[%s159 + $0x78] sm:$0xff]
        %v183 = vld [vmem:[%s159 + $0x80] sm:$0xff]
        %v184 = vld [vmem:[%s159 + $0x88] sm:$0xff]
        %v185 = vld [vmem:[%s159 + $0x90] sm:$0xff]
        %v186 = vld [vmem:[%s159 + $0x98] sm:$0xff]
        %v187 = vld [vmem:[%s159 + $0xa0] sm:$0xff]
        %v188 = vld [vmem:[%s159 + $0xa8] sm:$0xff]
        %v189 = vld [vmem:[%s159 + $0xb0] sm:$0xff]
        %v190 = vld [vmem:[%s159 + $0xb8] sm:$0xff]
        %v191 = vld [vmem:[%s159 + $0xc0] sm:$0xff]
        %v192 = vld [vmem:[%s159 + $0xc8] sm:$0xff]
        %v193 = vld [vmem:[%s159 + $0xd0] sm:$0xff]
        %v194 = vld [vmem:[%s159 + $0xd8] sm:$0xff]
        %v195 = vld [vmem:[%s159 + $0xe0] sm:$0xff]
        %v196 = vld [vmem:[%s159 + $0xe8] sm:$0xff]
        %v197 = vld [vmem:[%s159 + $0xf0] sm:$0xff]
        %v198 = vld [vmem:[%s159 + $0xf8] sm:$0xff]
        %v199 = vld [vmem:[%s159 + $0x100] sm:$0xff]
        %v200 = vld [vmem:[%s159 + $0x108] sm:$0xff]
        %v201 = vld [vmem:[%s159 + $0x110] sm:$0xff]
        %v202 = vld [vmem:[%s159 + $0x118] sm:$0xff]
        %v203 = vld [vmem:[%s159 + $0x120] sm:$0xff]
        %v204 = vld [vmem:[%s159 + $0x128] sm:$0xff]
        %v205 = vld [vmem:[%s159 + $0x130] sm:$0xff]
        %v206 = vld [vmem:[%s159 + $0x138] sm:$0xff]
        %v207 = vld [vmem:[%s159 + $0x140] sm:$0xff]
        %v208 = vld [vmem:[%s159 + $0x148] sm:$0xff]
        %v209 = vld [vmem:[%s159 + $0x150] sm:$0xff]
        %v210 = vld [vmem:[%s159 + $0x158] sm:$0xff]
        %v211 = vld [vmem:[%s159 + $0x160] sm:$0xff]
        %v212 = vld [vmem:[%s159 + $0x168] sm:$0xff]
        %v213 = vld [vmem:[%s159 + $0x170] sm:$0xff]
        %v214 = vld [vmem:[%s159 + $0x178] sm:$0xff]
        %v215 = vld [vmem:[%s159 + $0x180] sm:$0xff]
        %v216 = vld [vmem:[%s159 + $0x188] sm:$0xff]
        %v217 = vld [vmem:[%s159 + $0x190] sm:$0xff]
        %v218 = vld [vmem:[%s159 + $0x198] sm:$0xff]
        %v219 = vld [vmem:[%s159 + $0x1a0] sm:$0xff]
        %v220 = vld [vmem:[%s159 + $0x1a8] sm:$0xff]
        %v221 = vld [vmem:[%s159 + $0x1b0] sm:$0xff]
        %v222 = vld [vmem:[%s159 + $0x1b8] sm:$0xff]
        %v223 = vld [vmem:[%s159 + $0x1c0] sm:$0xff]
        %v224 = vld [vmem:[%s159 + $0x1c8] sm:$0xff]
        %v225 = vld [vmem:[%s159 + $0x1d0] sm:$0xff]
        %v226 = vld [vmem:[%s159 + $0x1d8] sm:$0xff]
        %v227 = vld [vmem:[%s159 + $0x1e0] sm:$0xff]
        %v228 = vld [vmem:[%s159 + $0x1e8] sm:$0xff]
        %v229 = vld [vmem:[%s159 + $0x1f0] sm:$0xff]
        %v230 = vld [vmem:[%s159 + $0x1f8] sm:$0xff]
        %v231 = vld [vmem:[%s164] sm:$0x1]
        %v232 = vld [vmem:[%s164 + $0x1] sm:$0x1]
        %v233 = vld [vmem:[%s164 + $0x2] sm:$0x1]
        %v234 = vld [vmem:[%s164 + $0x3] sm:$0x1]
        %v235 = vmul.f32 %v167, %v167
        %v236 = vmul.f32 %v168, %v168
        %v237 = vmul.f32 %v169, %v169
        %v238 = vmul.f32 %v170, %v170
        %v239 = vmul.f32 %v171, %v171
        %v240 = vmul.f32 %v172, %v172
        %v241 = vmul.f32 %v173, %v173
        %v242 = vmul.f32 %v174, %v174
        %v243 = vmul.f32 %v175, %v175
        %v244 = vmul.f32 %v176, %v176
        %v245 = vmul.f32 %v177, %v177
        %v246 = vmul.f32 %v178, %v178
        %v247 = vmul.f32 %v179, %v179
        %v248 = vmul.f32 %v180, %v180
        %v249 = vmul.f32 %v181, %v181
        %v250 = vmul.f32 %v182, %v182
        %v251 = vmul.f32 %v183, %v183
        %v252 = vmul.f32 %v184, %v184
        %v253 = vmul.f32 %v185, %v185
        %v254 = vmul.f32 %v186, %v186
        %v255 = vmul.f32 %v187, %v187
        %v256 = vmul.f32 %v188, %v188
        %v257 = vmul.f32 %v189, %v189
        %v258 = vmul.f32 %v190, %v190
        %v259 = vmul.f32 %v191, %v191
        %v260 = vmul.f32 %v192, %v192
        %v261 = vmul.f32 %v193, %v193
        %v262 = vmul.f32 %v194, %v194
        %v263 = vmul.f32 %v195, %v195
        %v264 = vmul.f32 %v196, %v196
        %v265 = vmul.f32 %v197, %v197
        %v266 = vmul.f32 %v198, %v198
        %v267 = vmul.f32 %v199, %v199
        %v268 = vmul.f32 %v200, %v200
        %v269 = vmul.f32 %v201, %v201
        %v270 = vmul.f32 %v202, %v202
        %v271 = vmul.f32 %v203, %v203
        %v272 = vmul.f32 %v204, %v204
        %v273 = vmul.f32 %v205, %v205
        %v274 = vmul.f32 %v206, %v206
        %v275 = vmul.f32 %v207, %v207
        %v276 = vmul.f32 %v208, %v208
        %v277 = vmul.f32 %v209, %v209
        %v278 = vmul.f32 %v210, %v210
        %v279 = vmul.f32 %v211, %v211
        %v280 = vmul.f32 %v212, %v212
        %v281 = vmul.f32 %v213, %v213
        %v282 = vmul.f32 %v214, %v214
        %v283 = vmul.f32 %v215, %v215
        %v284 = vmul.f32 %v216, %v216
        %v285 = vmul.f32 %v217, %v217
        %v286 = vmul.f32 %v218, %v218
        %v287 = vmul.f32 %v219, %v219
        %v288 = vmul.f32 %v220, %v220
        %v289 = vmul.f32 %v221, %v221
        %v290 = vmul.f32 %v222, %v222
        %v291 = vmul.f32 %v223, %v223
        %v292 = vmul.f32 %v224, %v224
        %v293 = vmul.f32 %v225, %v225
        %v294 = vmul.f32 %v226, %v226
        %v295 = vmul.f32 %v227, %v227
        %v296 = vmul.f32 %v228, %v228
        %v297 = vmul.f32 %v229, %v229
        %v298 = vmul.f32 %v230, %v230
        %vm299 = vcmask 261120
        %v300 = vsel %vm299, %v235, 0.0
        %301 = vadd.xlane.f32.xlu0 %v300
        %v302 = vpop.xlane.xlu0 %301
        %v303 = vsel %vm299, %v236, 0.0
        %304 = vadd.xlane.f32.xlu0 %v303
        %v305 = vpop.xlane.xlu0 %304
        %v306 = vsel %vm299, %v237, 0.0
        %307 = vadd.xlane.f32.xlu0 %v306
        %v308 = vpop.xlane.xlu0 %307
        %v309 = vsel %vm299, %v238, 0.0
        %310 = vadd.xlane.f32.xlu0 %v309
        %v311 = vpop.xlane.xlu0 %310
        %v312 = vsel %vm299, %v239, 0.0
        %313 = vadd.xlane.f32.xlu0 %v312
        %v314 = vpop.xlane.xlu0 %313
        %v315 = vsel %vm299, %v240, 0.0
        %316 = vadd.xlane.f32.xlu0 %v315
        %v317 = vpop.xlane.xlu0 %316
        %v318 = vsel %vm299, %v241, 0.0
        %319 = vadd.xlane.f32.xlu0 %v318
        %v320 = vpop.xlane.xlu0 %319
        %v321 = vsel %vm299, %v242, 0.0
        %322 = vadd.xlane.f32.xlu0 %v321
        %v323 = vpop.xlane.xlu0 %322
        %v324 = vsel %vm299, %v243, 0.0
        %325 = vadd.xlane.f32.xlu0 %v324
        %v326 = vpop.xlane.xlu0 %325
        %v327 = vsel %vm299, %v244, 0.0
        %328 = vadd.xlane.f32.xlu0 %v327
        %v329 = vpop.xlane.xlu0 %328
        %v330 = vsel %vm299, %v245, 0.0
        %331 = vadd.xlane.f32.xlu0 %v330
        %v332 = vpop.xlane.xlu0 %331
        %v333 = vsel %vm299, %v246, 0.0
        %334 = vadd.xlane.f32.xlu0 %v333
        %v335 = vpop.xlane.xlu0 %334
        %v336 = vsel %vm299, %v247, 0.0
        %337 = vadd.xlane.f32.xlu0 %v336
        %v338 = vpop.xlane.xlu0 %337
        %v339 = vsel %vm299, %v248, 0.0
        %340 = vadd.xlane.f32.xlu0 %v339
        %v341 = vpop.xlane.xlu0 %340
        %v342 = vsel %vm299, %v249, 0.0
        %343 = vadd.xlane.f32.xlu0 %v342
        %v344 = vpop.xlane.xlu0 %343
        %v345 = vsel %vm299, %v250, 0.0
        %346 = vadd.xlane.f32.xlu0 %v345
        %v347 = vpop.xlane.xlu0 %346
        %v348 = vsel %vm299, %v251, 0.0
        %349 = vadd.xlane.f32.xlu0 %v348
        %v350 = vpop.xlane.xlu0 %349
        %v351 = vsel %vm299, %v252, 0.0
        %352 = vadd.xlane.f32.xlu0 %v351
        %v353 = vpop.xlane.xlu0 %352
        %v354 = vsel %vm299, %v253, 0.0
        %355 = vadd.xlane.f32.xlu0 %v354
        %v356 = vpop.xlane.xlu0 %355
        %v357 = vsel %vm299, %v254, 0.0
        %358 = vadd.xlane.f32.xlu0 %v357
        %v359 = vpop.xlane.xlu0 %358
        %v360 = vsel %vm299, %v255, 0.0
        %361 = vadd.xlane.f32.xlu0 %v360
        %v362 = vpop.xlane.xlu0 %361
        %v363 = vsel %vm299, %v256, 0.0
        %364 = vadd.xlane.f32.xlu0 %v363
        %v365 = vpop.xlane.xlu0 %364
        %v366 = vsel %vm299, %v257, 0.0
        %367 = vadd.xlane.f32.xlu0 %v366
        %v368 = vpop.xlane.xlu0 %367
        %v369 = vsel %vm299, %v258, 0.0
        %370 = vadd.xlane.f32.xlu0 %v369
        %v371 = vpop.xlane.xlu0 %370
        %v372 = vsel %vm299, %v259, 0.0
        %373 = vadd.xlane.f32.xlu0 %v372
        %v374 = vpop.xlane.xlu0 %373
        %v375 = vsel %vm299, %v260, 0.0
        %376 = vadd.xlane.f32.xlu0 %v375
        %v377 = vpop.xlane.xlu0 %376
        %v378 = vsel %vm299, %v261, 0.0
        %379 = vadd.xlane.f32.xlu0 %v378
        %v380 = vpop.xlane.xlu0 %379
        %v381 = vsel %vm299, %v262, 0.0
        %382 = vadd.xlane.f32.xlu0 %v381
        %v383 = vpop.xlane.xlu0 %382
        %v384 = vsel %vm299, %v263, 0.0
        %385 = vadd.xlane.f32.xlu0 %v384
        %v386 = vpop.xlane.xlu0 %385
        %v387 = vsel %vm299, %v264, 0.0
        %388 = vadd.xlane.f32.xlu0 %v387
        %v389 = vpop.xlane.xlu0 %388
        %v390 = vsel %vm299, %v265, 0.0
        %391 = vadd.xlane.f32.xlu0 %v390
        %v392 = vpop.xlane.xlu0 %391
        %v393 = vsel %vm299, %v266, 0.0
        %394 = vadd.xlane.f32.xlu0 %v393
        %v395 = vpop.xlane.xlu0 %394
        %v396 = vsel %vm299, %v267, 0.0
        %397 = vadd.xlane.f32.xlu0 %v396
        %v398 = vpop.xlane.xlu0 %397
        %v399 = vsel %vm299, %v268, 0.0
        %400 = vadd.xlane.f32.xlu0 %v399
        %v401 = vpop.xlane.xlu0 %400
        %v402 = vsel %vm299, %v269, 0.0
        %403 = vadd.xlane.f32.xlu0 %v402
        %v404 = vpop.xlane.xlu0 %403
        %v405 = vsel %vm299, %v270, 0.0
        %406 = vadd.xlane.f32.xlu0 %v405
        %v407 = vpop.xlane.xlu0 %406
        %v408 = vsel %vm299, %v271, 0.0
        %409 = vadd.xlane.f32.xlu0 %v408
        %v410 = vpop.xlane.xlu0 %409
        %v411 = vsel %vm299, %v272, 0.0
        %412 = vadd.xlane.f32.xlu0 %v411
        %v413 = vpop.xlane.xlu0 %412
        %v414 = vsel %vm299, %v273, 0.0
        %415 = vadd.xlane.f32.xlu0 %v414
        %v416 = vpop.xlane.xlu0 %415
        %v417 = vsel %vm299, %v274, 0.0
        %418 = vadd.xlane.f32.xlu0 %v417
        %v419 = vpop.xlane.xlu0 %418
        %v420 = vsel %vm299, %v275, 0.0
        %421 = vadd.xlane.f32.xlu0 %v420
        %v422 = vpop.xlane.xlu0 %421
        %v423 = vsel %vm299, %v276, 0.0
        %424 = vadd.xlane.f32.xlu0 %v423
        %v425 = vpop.xlane.xlu0 %424
        %v426 = vsel %vm299, %v277, 0.0
        %427 = vadd.xlane.f32.xlu0 %v426
        %v428 = vpop.xlane.xlu0 %427
        %v429 = vsel %vm299, %v278, 0.0
        %430 = vadd.xlane.f32.xlu0 %v429
        %v431 = vpop.xlane.xlu0 %430
        %v432 = vsel %vm299, %v279, 0.0
        %433 = vadd.xlane.f32.xlu0 %v432
        %v434 = vpop.xlane.xlu0 %433
        %v435 = vsel %vm299, %v280, 0.0
        %436 = vadd.xlane.f32.xlu0 %v435
        %v437 = vpop.xlane.xlu0 %436
        %v438 = vsel %vm299, %v281, 0.0
        %439 = vadd.xlane.f32.xlu0 %v438
        %v440 = vpop.xlane.xlu0 %439
        %v441 = vsel %vm299, %v282, 0.0
        %442 = vadd.xlane.f32.xlu0 %v441
        %v443 = vpop.xlane.xlu0 %442
        %v444 = vsel %vm299, %v283, 0.0
        %445 = vadd.xlane.f32.xlu0 %v444
        %v446 = vpop.xlane.xlu0 %445
        %v447 = vsel %vm299, %v284, 0.0
        %448 = vadd.xlane.f32.xlu0 %v447
        %v449 = vpop.xlane.xlu0 %448
        %v450 = vsel %vm299, %v285, 0.0
        %451 = vadd.xlane.f32.xlu0 %v450
        %v452 = vpop.xlane.xlu0 %451
        %v453 = vsel %vm299, %v286, 0.0
        %454 = vadd.xlane.f32.xlu0 %v453
        %v455 = vpop.xlane.xlu0 %454
        %v456 = vsel %vm299, %v287, 0.0
        %457 = vadd.xlane.f32.xlu0 %v456
        %v458 = vpop.xlane.xlu0 %457
        %v459 = vsel %vm299, %v288, 0.0
        %460 = vadd.xlane.f32.xlu0 %v459
        %v461 = vpop.xlane.xlu0 %460
        %v462 = vsel %vm299, %v289, 0.0
        %463 = vadd.xlane.f32.xlu0 %v462
        %v464 = vpop.xlane.xlu0 %463
        %v465 = vsel %vm299, %v290, 0.0
        %466 = vadd.xlane.f32.xlu0 %v465
        %v467 = vpop.xlane.xlu0 %466
        %v468 = vsel %vm299, %v291, 0.0
        %469 = vadd.xlane.f32.xlu0 %v468
        %v470 = vpop.xlane.xlu0 %469
        %v471 = vsel %vm299, %v292, 0.0
        %472 = vadd.xlane.f32.xlu0 %v471
        %v473 = vpop.xlane.xlu0 %472
        %v474 = vsel %vm299, %v293, 0.0
        %475 = vadd.xlane.f32.xlu0 %v474
        %v476 = vpop.xlane.xlu0 %475
        %v477 = vsel %vm299, %v294, 0.0
        %478 = vadd.xlane.f32.xlu0 %v477
        %v479 = vpop.xlane.xlu0 %478
        %v480 = vsel %vm299, %v295, 0.0
        %481 = vadd.xlane.f32.xlu0 %v480
        %v482 = vpop.xlane.xlu0 %481
        %v483 = vsel %vm299, %v296, 0.0
        %484 = vadd.xlane.f32.xlu0 %v483
        %v485 = vpop.xlane.xlu0 %484
        %v486 = vsel %vm299, %v297, 0.0
        %487 = vadd.xlane.f32.xlu0 %v486
        %v488 = vpop.xlane.xlu0 %487
        %v489 = vsel %vm299, %v298, 0.0
        %490 = vadd.xlane.f32.xlu0 %v489
        %v491 = vpop.xlane.xlu0 %490
        %v493 = vsel %vm299, %v167, 0
        %v496 = vsel %vm299, %v168, 0
        %v499 = vsel %vm299, %v169, 0
        %v502 = vsel %vm299, %v170, 0
        %v505 = vsel %vm299, %v171, 0
        %v508 = vsel %vm299, %v172, 0
        %v511 = vsel %vm299, %v173, 0
        %v514 = vsel %vm299, %v174, 0
        %v517 = vsel %vm299, %v175, 0
        %v520 = vsel %vm299, %v176, 0
        %v523 = vsel %vm299, %v177, 0
        %v526 = vsel %vm299, %v178, 0
        %v529 = vsel %vm299, %v179, 0
        %v532 = vsel %vm299, %v180, 0
        %v535 = vsel %vm299, %v181, 0
        %v538 = vsel %vm299, %v182, 0
        %540 = vmatprep.subr.mxu0 0.0
        %541 = vmatpush1.xpose.msra.mxu0 %v538
        %542 = vmatprep.subr.mxu0 0.0
        %543 = vmatpush1.xpose.msra.mxu0 %v535
        %544 = vmatprep.subr.mxu0 0.0
        %545 = vmatpush1.xpose.msra.mxu0 %v532
        %546 = vmatprep.subr.mxu0 0.0
        %547 = vmatpush1.xpose.msra.mxu0 %v529
        %548 = vmatprep.subr.mxu0 0.0
        %549 = vmatpush1.xpose.msra.mxu0 %v526
        %550 = vmatprep.subr.mxu0 0.0
        %551 = vmatpush1.xpose.msra.mxu0 %v523
        %552 = vmatprep.subr.mxu0 0.0
        %553 = vmatpush1.xpose.msra.mxu0 %v520
        %554 = vmatprep.subr.mxu0 0.0
        %555 = vmatpush1.xpose.msra.mxu0 %v517
        %556 = vmatprep.subr.mxu0 0.0
        %557 = vmatpush1.xpose.msra.mxu0 %v514
        %558 = vmatprep.subr.mxu0 0.0
        %559 = vmatpush1.xpose.msra.mxu0 %v511
        %560 = vmatprep.subr.mxu0 0.0
        %561 = vmatpush1.xpose.msra.mxu0 %v508
        %562 = vmatprep.subr.mxu0 0.0
        %563 = vmatpush1.xpose.msra.mxu0 %v505
        %564 = vmatprep.subr.mxu0 0.0
        %565 = vmatpush1.xpose.msra.mxu0 %v502
        %566 = vmatprep.subr.mxu0 0.0
        %567 = vmatpush1.xpose.msra.mxu0 %v499
        %568 = vmatprep.subr.mxu0 0.0
        %569 = vmatpush1.xpose.msra.mxu0 %v496
        %570 = vmatprep.subr.mxu0 0.0
        %571 = vmatpush1.xpose.msra.mxu0 %v493
        %572 = vmatprep.subr.mxu0 0.0
        %573 = vmatpush2.xpose.msra.mxu0 0.0
        %574 = vmatprep.subr.mxu0 0.0
        %575 = vmatpush2.xpose.msra.mxu0 0.0
        %576 = vmatprep.subr.mxu0 0.0
        %577 = vmatpush2.xpose.msra.mxu0 0.0
        %578 = vmatprep.subr.mxu0 0.0
        %579 = vmatpush2.xpose.msra.mxu0 0.0
        %580 = vmatprep.subr.mxu0 0.0
        %581 = vmatpush2.xpose.msra.mxu0 0.0
        %582 = vmatprep.subr.mxu0 0.0
        %583 = vmatpush2.xpose.msra.mxu0 0.0
        %584 = vmatprep.subr.mxu0 0.0
        %585 = vmatpush2.xpose.msra.mxu0 0.0
        %586 = vmatprep.subr.mxu0 0.0
        %587 = vmatpush2.xpose.msra.mxu0 0.0
        %588 = vmatprep.subr.mxu0 0.0
        %589 = vmatpush2.xpose.msra.mxu0 0.0
        %590 = vmatprep.subr.mxu0 0.0
        %591 = vmatpush2.xpose.msra.mxu0 0.0
        %592 = vmatprep.subr.mxu0 0.0
        %593 = vmatpush2.xpose.msra.mxu0 0.0
        %594 = vmatprep.subr.mxu0 0.0
        %595 = vmatpush2.xpose.msra.mxu0 0.0
        %596 = vmatprep.subr.mxu0 0.0
        %597 = vmatpush2.xpose.msra.mxu0 0.0
        %598 = vmatprep.subr.mxu0 0.0
        %599 = vmatpush2.xpose.msra.mxu0 0.0
        %600 = vmatprep.subr.mxu0 0.0
        %601 = vmatpush2.xpose.msra.mxu0 0.0
        %602 = vmatprep.subr.mxu0 0.0
        %603 = vmatpush2.xpose.msra.mxu0 0.0
        %604 = vmatprep.mubr.f32.mxu0 0.0
        %605 = vmatmul.mubr.f32.gmra.mxu0 %v493
        %v606 = vpop.f32.mrf.mxu0
        %v607 = vadd.f32 0.0, %v606
        %v608 = vpop.f32.mrf.mxu0
        %609 = vmatprep.mubr.f32.mxu0 0.0
        %610 = vmatmul.mubr.f32.gmra.mxu0 %v496
        %v611 = vpop.f32.mrf.mxu0
        %v612 = vadd.f32 0.0, %v611
        %v613 = vpop.f32.mrf.mxu0
        %614 = vmatprep.mubr.f32.mxu0 0.0
        %615 = vmatmul.mubr.f32.gmra.mxu0 %v499
        %v616 = vpop.f32.mrf.mxu0
        %v617 = vadd.f32 0.0, %v616
        %v618 = vpop.f32.mrf.mxu0
        %619 = vmatprep.mubr.f32.mxu0 0.0
        %620 = vmatmul.mubr.f32.gmra.mxu0 %v502
        %v621 = vpop.f32.mrf.mxu0
        %v622 = vadd.f32 0.0, %v621
        %v623 = vpop.f32.mrf.mxu0
        %624 = vmatprep.mubr.f32.mxu0 0.0
        %625 = vmatmul.mubr.f32.gmra.mxu0 %v505
        %v626 = vpop.f32.mrf.mxu0
        %v627 = vadd.f32 0.0, %v626
        %v628 = vpop.f32.mrf.mxu0
        %629 = vmatprep.mubr.f32.mxu0 0.0
        %630 = vmatmul.mubr.f32.gmra.mxu0 %v508
        %v631 = vpop.f32.mrf.mxu0
        %v632 = vadd.f32 0.0, %v631
        %v633 = vpop.f32.mrf.mxu0
        %634 = vmatprep.mubr.f32.mxu0 0.0
        %635 = vmatmul.mubr.f32.gmra.mxu0 %v511
        %v636 = vpop.f32.mrf.mxu0
        %v637 = vadd.f32 0.0, %v636
        %v638 = vpop.f32.mrf.mxu0
        %639 = vmatprep.mubr.f32.mxu0 0.0
        %640 = vmatmul.mubr.f32.gmra.mxu0 %v514
        %v641 = vpop.f32.mrf.mxu0
        %v642 = vadd.f32 0.0, %v641
        %v643 = vpop.f32.mrf.mxu0
        %644 = vmatprep.mubr.f32.mxu0 0.0
        %645 = vmatmul.mubr.f32.gmra.mxu0 %v517
        %v646 = vpop.f32.mrf.mxu0
        %v647 = vadd.f32 0.0, %v646
        %v648 = vpop.f32.mrf.mxu0
        %649 = vmatprep.mubr.f32.mxu0 0.0
        %650 = vmatmul.mubr.f32.gmra.mxu0 %v520
        %v651 = vpop.f32.mrf.mxu0
        %v652 = vadd.f32 0.0, %v651
        %v653 = vpop.f32.mrf.mxu0
        %654 = vmatprep.mubr.f32.mxu0 0.0
        %655 = vmatmul.mubr.f32.gmra.mxu0 %v523
        %v656 = vpop.f32.mrf.mxu0
        %v657 = vadd.f32 0.0, %v656
        %v658 = vpop.f32.mrf.mxu0
        %659 = vmatprep.mubr.f32.mxu0 0.0
        %660 = vmatmul.mubr.f32.gmra.mxu0 %v526
        %v661 = vpop.f32.mrf.mxu0
        %v662 = vadd.f32 0.0, %v661
        %v663 = vpop.f32.mrf.mxu0
        %664 = vmatprep.mubr.f32.mxu0 0.0
        %665 = vmatmul.mubr.f32.gmra.mxu0 %v529
        %v666 = vpop.f32.mrf.mxu0
        %v667 = vadd.f32 0.0, %v666
        %v668 = vpop.f32.mrf.mxu0
        %669 = vmatprep.mubr.f32.mxu0 0.0
        %670 = vmatmul.mubr.f32.gmra.mxu0 %v532
        %v671 = vpop.f32.mrf.mxu0
        %v672 = vadd.f32 0.0, %v671
        %v673 = vpop.f32.mrf.mxu0
        %674 = vmatprep.mubr.f32.mxu0 0.0
        %675 = vmatmul.mubr.f32.gmra.mxu0 %v535
        %v676 = vpop.f32.mrf.mxu0
        %v677 = vadd.f32 0.0, %v676
        %v678 = vpop.f32.mrf.mxu0
        %679 = vmatprep.mubr.f32.mxu0 0.0
        %680 = vmatmul.mubr.f32.gmra.mxu0 %v538
        %v681 = vpop.f32.mrf.mxu0
        %v682 = vadd.f32 0.0, %v681
        %v683 = vpop.f32.mrf.mxu0
        %684 = vdwg.mxu0
        %v686 = vsel %vm299, %v183, 0
        %v689 = vsel %vm299, %v184, 0
        %v692 = vsel %vm299, %v185, 0
        %v695 = vsel %vm299, %v186, 0
        %v698 = vsel %vm299, %v187, 0
        %v701 = vsel %vm299, %v188, 0
        %v704 = vsel %vm299, %v189, 0
        %v707 = vsel %vm299, %v190, 0
        %v710 = vsel %vm299, %v191, 0
        %v713 = vsel %vm299, %v192, 0
        %v716 = vsel %vm299, %v193, 0
        %v719 = vsel %vm299, %v194, 0
        %v722 = vsel %vm299, %v195, 0
        %v725 = vsel %vm299, %v196, 0
        %v728 = vsel %vm299, %v197, 0
        %v731 = vsel %vm299, %v198, 0
        %733 = vmatprep.subr.mxu0 0.0
        %734 = vmatpush1.xpose.msra.mxu0 %v731
        %735 = vmatprep.subr.mxu0 0.0
        %736 = vmatpush1.xpose.msra.mxu0 %v728
        %737 = vmatprep.subr.mxu0 0.0
        %738 = vmatpush1.xpose.msra.mxu0 %v725
        %739 = vmatprep.subr.mxu0 0.0
        %740 = vmatpush1.xpose.msra.mxu0 %v722
        %741 = vmatprep.subr.mxu0 0.0
        %742 = vmatpush1.xpose.msra.mxu0 %v719
        %743 = vmatprep.subr.mxu0 0.0
        %744 = vmatpush1.xpose.msra.mxu0 %v716
        %745 = vmatprep.subr.mxu0 0.0
        %746 = vmatpush1.xpose.msra.mxu0 %v713
        %747 = vmatprep.subr.mxu0 0.0
        %748 = vmatpush1.xpose.msra.mxu0 %v710
        %749 = vmatprep.subr.mxu0 0.0
        %750 = vmatpush1.xpose.msra.mxu0 %v707
        %751 = vmatprep.subr.mxu0 0.0
        %752 = vmatpush1.xpose.msra.mxu0 %v704
        %753 = vmatprep.subr.mxu0 0.0
        %754 = vmatpush1.xpose.msra.mxu0 %v701
        %755 = vmatprep.subr.mxu0 0.0
        %756 = vmatpush1.xpose.msra.mxu0 %v698
        %757 = vmatprep.subr.mxu0 0.0
        %758 = vmatpush1.xpose.msra.mxu0 %v695
        %759 = vmatprep.subr.mxu0 0.0
        %760 = vmatpush1.xpose.msra.mxu0 %v692
        %761 = vmatprep.subr.mxu0 0.0
        %762 = vmatpush1.xpose.msra.mxu0 %v689
        %763 = vmatprep.subr.mxu0 0.0
        %764 = vmatpush1.xpose.msra.mxu0 %v686
        %765 = vmatprep.subr.mxu0 0.0
        %766 = vmatpush2.xpose.msra.mxu0 0.0
        %767 = vmatprep.subr.mxu0 0.0
        %768 = vmatpush2.xpose.msra.mxu0 0.0
        %769 = vmatprep.subr.mxu0 0.0
        %770 = vmatpush2.xpose.msra.mxu0 0.0
        %771 = vmatprep.subr.mxu0 0.0
        %772 = vmatpush2.xpose.msra.mxu0 0.0
        %773 = vmatprep.subr.mxu0 0.0
        %774 = vmatpush2.xpose.msra.mxu0 0.0
        %775 = vmatprep.subr.mxu0 0.0
        %776 = vmatpush2.xpose.msra.mxu0 0.0
        %777 = vmatprep.subr.mxu0 0.0
        %778 = vmatpush2.xpose.msra.mxu0 0.0
        %779 = vmatprep.subr.mxu0 0.0
        %780 = vmatpush2.xpose.msra.mxu0 0.0
        %781 = vmatprep.subr.mxu0 0.0
        %782 = vmatpush2.xpose.msra.mxu0 0.0
        %783 = vmatprep.subr.mxu0 0.0
        %784 = vmatpush2.xpose.msra.mxu0 0.0
        %785 = vmatprep.subr.mxu0 0.0
        %786 = vmatpush2.xpose.msra.mxu0 0.0
        %787 = vmatprep.subr.mxu0 0.0
        %788 = vmatpush2.xpose.msra.mxu0 0.0
        %789 = vmatprep.subr.mxu0 0.0
        %790 = vmatpush2.xpose.msra.mxu0 0.0
        %791 = vmatprep.subr.mxu0 0.0
        %792 = vmatpush2.xpose.msra.mxu0 0.0
        %793 = vmatprep.subr.mxu0 0.0
        %794 = vmatpush2.xpose.msra.mxu0 0.0
        %795 = vmatprep.subr.mxu0 0.0
        %796 = vmatpush2.xpose.msra.mxu0 0.0
        %797 = vmatprep.mubr.f32.mxu0 0.0
        %798 = vmatmul.mubr.f32.gmra.mxu0 %v686
        %v799 = vpop.f32.mrf.mxu0
        %v800 = vadd.f32 0.0, %v799
        %v801 = vpop.f32.mrf.mxu0
        %802 = vmatprep.mubr.f32.mxu0 0.0
        %803 = vmatmul.mubr.f32.gmra.mxu0 %v689
        %v804 = vpop.f32.mrf.mxu0
        %v805 = vadd.f32 0.0, %v804
        %v806 = vpop.f32.mrf.mxu0
        %807 = vmatprep.mubr.f32.mxu0 0.0
        %808 = vmatmul.mubr.f32.gmra.mxu0 %v692
        %v809 = vpop.f32.mrf.mxu0
        %v810 = vadd.f32 0.0, %v809
        %v811 = vpop.f32.mrf.mxu0
        %812 = vmatprep.mubr.f32.mxu0 0.0
        %813 = vmatmul.mubr.f32.gmra.mxu0 %v695
        %v814 = vpop.f32.mrf.mxu0
        %v815 = vadd.f32 0.0, %v814
        %v816 = vpop.f32.mrf.mxu0
        %817 = vmatprep.mubr.f32.mxu0 0.0
        %818 = vmatmul.mubr.f32.gmra.mxu0 %v698
        %v819 = vpop.f32.mrf.mxu0
        %v820 = vadd.f32 0.0, %v819
        %v821 = vpop.f32.mrf.mxu0
        %822 = vmatprep.mubr.f32.mxu0 0.0
        %823 = vmatmul.mubr.f32.gmra.mxu0 %v701
        %v824 = vpop.f32.mrf.mxu0
        %v825 = vadd.f32 0.0, %v824
        %v826 = vpop.f32.mrf.mxu0
        %827 = vmatprep.mubr.f32.mxu0 0.0
        %828 = vmatmul.mubr.f32.gmra.mxu0 %v704
        %v829 = vpop.f32.mrf.mxu0
        %v830 = vadd.f32 0.0, %v829
        %v831 = vpop.f32.mrf.mxu0
        %832 = vmatprep.mubr.f32.mxu0 0.0
        %833 = vmatmul.mubr.f32.gmra.mxu0 %v707
        %v834 = vpop.f32.mrf.mxu0
        %v835 = vadd.f32 0.0, %v834
        %v836 = vpop.f32.mrf.mxu0
        %837 = vmatprep.mubr.f32.mxu0 0.0
        %838 = vmatmul.mubr.f32.gmra.mxu0 %v710
        %v839 = vpop.f32.mrf.mxu0
        %v840 = vadd.f32 0.0, %v839
        %v841 = vpop.f32.mrf.mxu0
        %842 = vmatprep.mubr.f32.mxu0 0.0
        %843 = vmatmul.mubr.f32.gmra.mxu0 %v713
        %v844 = vpop.f32.mrf.mxu0
        %v845 = vadd.f32 0.0, %v844
        %v846 = vpop.f32.mrf.mxu0
        %847 = vmatprep.mubr.f32.mxu0 0.0
        %848 = vmatmul.mubr.f32.gmra.mxu0 %v716
        %v849 = vpop.f32.mrf.mxu0
        %v850 = vadd.f32 0.0, %v849
        %v851 = vpop.f32.mrf.mxu0
        %852 = vmatprep.mubr.f32.mxu0 0.0
        %853 = vmatmul.mubr.f32.gmra.mxu0 %v719
        %v854 = vpop.f32.mrf.mxu0
        %v855 = vadd.f32 0.0, %v854
        %v856 = vpop.f32.mrf.mxu0
        %857 = vmatprep.mubr.f32.mxu0 0.0
        %858 = vmatmul.mubr.f32.gmra.mxu0 %v722
        %v859 = vpop.f32.mrf.mxu0
        %v860 = vadd.f32 0.0, %v859
        %v861 = vpop.f32.mrf.mxu0
        %862 = vmatprep.mubr.f32.mxu0 0.0
        %863 = vmatmul.mubr.f32.gmra.mxu0 %v725
        %v864 = vpop.f32.mrf.mxu0
        %v865 = vadd.f32 0.0, %v864
        %v866 = vpop.f32.mrf.mxu0
        %867 = vmatprep.mubr.f32.mxu0 0.0
        %868 = vmatmul.mubr.f32.gmra.mxu0 %v728
        %v869 = vpop.f32.mrf.mxu0
        %v870 = vadd.f32 0.0, %v869
        %v871 = vpop.f32.mrf.mxu0
        %872 = vmatprep.mubr.f32.mxu0 0.0
        %873 = vmatmul.mubr.f32.gmra.mxu0 %v731
        %v874 = vpop.f32.mrf.mxu0
        %v875 = vadd.f32 0.0, %v874
        %v876 = vpop.f32.mrf.mxu0
        %877 = vdwg.mxu0
        %v879 = vsel %vm299, %v199, 0
        %v882 = vsel %vm299, %v200, 0
        %v885 = vsel %vm299, %v201, 0
        %v888 = vsel %vm299, %v202, 0
        %v891 = vsel %vm299, %v203, 0
        %v894 = vsel %vm299, %v204, 0
        %v897 = vsel %vm299, %v205, 0
        %v900 = vsel %vm299, %v206, 0
        %v903 = vsel %vm299, %v207, 0
        %v906 = vsel %vm299, %v208, 0
        %v909 = vsel %vm299, %v209, 0
        %v912 = vsel %vm299, %v210, 0
        %v915 = vsel %vm299, %v211, 0
        %v918 = vsel %vm299, %v212, 0
        %v921 = vsel %vm299, %v213, 0
        %v924 = vsel %vm299, %v214, 0
        %926 = vmatprep.subr.mxu0 0.0
        %927 = vmatpush1.xpose.msra.mxu0 %v924
        %928 = vmatprep.subr.mxu0 0.0
        %929 = vmatpush1.xpose.msra.mxu0 %v921
        %930 = vmatprep.subr.mxu0 0.0
        %931 = vmatpush1.xpose.msra.mxu0 %v918
        %932 = vmatprep.subr.mxu0 0.0
        %933 = vmatpush1.xpose.msra.mxu0 %v915
        %934 = vmatprep.subr.mxu0 0.0
        %935 = vmatpush1.xpose.msra.mxu0 %v912
        %936 = vmatprep.subr.mxu0 0.0
        %937 = vmatpush1.xpose.msra.mxu0 %v909
        %938 = vmatprep.subr.mxu0 0.0
        %939 = vmatpush1.xpose.msra.mxu0 %v906
        %940 = vmatprep.subr.mxu0 0.0
        %941 = vmatpush1.xpose.msra.mxu0 %v903
        %942 = vmatprep.subr.mxu0 0.0
        %943 = vmatpush1.xpose.msra.mxu0 %v900
        %944 = vmatprep.subr.mxu0 0.0
        %945 = vmatpush1.xpose.msra.mxu0 %v897
        %946 = vmatprep.subr.mxu0 0.0
        %947 = vmatpush1.xpose.msra.mxu0 %v894
        %948 = vmatprep.subr.mxu0 0.0
        %949 = vmatpush1.xpose.msra.mxu0 %v891
        %950 = vmatprep.subr.mxu0 0.0
        %951 = vmatpush1.xpose.msra.mxu0 %v888
        %952 = vmatprep.subr.mxu0 0.0
        %953 = vmatpush1.xpose.msra.mxu0 %v885
        %954 = vmatprep.subr.mxu0 0.0
        %955 = vmatpush1.xpose.msra.mxu0 %v882
        %956 = vmatprep.subr.mxu0 0.0
        %957 = vmatpush1.xpose.msra.mxu0 %v879
        %958 = vmatprep.subr.mxu0 0.0
        %959 = vmatpush2.xpose.msra.mxu0 0.0
        %960 = vmatprep.subr.mxu0 0.0
        %961 = vmatpush2.xpose.msra.mxu0 0.0
        %962 = vmatprep.subr.mxu0 0.0
        %963 = vmatpush2.xpose.msra.mxu0 0.0
        %964 = vmatprep.subr.mxu0 0.0
        %965 = vmatpush2.xpose.msra.mxu0 0.0
        %966 = vmatprep.subr.mxu0 0.0
        %967 = vmatpush2.xpose.msra.mxu0 0.0
        %968 = vmatprep.subr.mxu0 0.0
        %969 = vmatpush2.xpose.msra.mxu0 0.0
        %970 = vmatprep.subr.mxu0 0.0
        %971 = vmatpush2.xpose.msra.mxu0 0.0
        %972 = vmatprep.subr.mxu0 0.0
        %973 = vmatpush2.xpose.msra.mxu0 0.0
        %974 = vmatprep.subr.mxu0 0.0
        %975 = vmatpush2.xpose.msra.mxu0 0.0
        %976 = vmatprep.subr.mxu0 0.0
        %977 = vmatpush2.xpose.msra.mxu0 0.0
        %978 = vmatprep.subr.mxu0 0.0
        %979 = vmatpush2.xpose.msra.mxu0 0.0
        %980 = vmatprep.subr.mxu0 0.0
        %981 = vmatpush2.xpose.msra.mxu0 0.0
        %982 = vmatprep.subr.mxu0 0.0
        %983 = vmatpush2.xpose.msra.mxu0 0.0
        %984 = vmatprep.subr.mxu0 0.0
        %985 = vmatpush2.xpose.msra.mxu0 0.0
        %986 = vmatprep.subr.mxu0 0.0
        %987 = vmatpush2.xpose.msra.mxu0 0.0
        %988 = vmatprep.subr.mxu0 0.0
        %989 = vmatpush2.xpose.msra.mxu0 0.0
        %990 = vmatprep.mubr.f32.mxu0 0.0
        %991 = vmatmul.mubr.f32.gmra.mxu0 %v879
        %v992 = vpop.f32.mrf.mxu0
        %v993 = vadd.f32 0.0, %v992
        %v994 = vpop.f32.mrf.mxu0
        %995 = vmatprep.mubr.f32.mxu0 0.0
        %996 = vmatmul.mubr.f32.gmra.mxu0 %v882
        %v997 = vpop.f32.mrf.mxu0
        %v998 = vadd.f32 0.0, %v997
        %v999 = vpop.f32.mrf.mxu0
        %1000 = vmatprep.mubr.f32.mxu0 0.0
        %1001 = vmatmul.mubr.f32.gmra.mxu0 %v885
        %v1002 = vpop.f32.mrf.mxu0
        %v1003 = vadd.f32 0.0, %v1002
        %v1004 = vpop.f32.mrf.mxu0
        %1005 = vmatprep.mubr.f32.mxu0 0.0
        %1006 = vmatmul.mubr.f32.gmra.mxu0 %v888
        %v1007 = vpop.f32.mrf.mxu0
        %v1008 = vadd.f32 0.0, %v1007
        %v1009 = vpop.f32.mrf.mxu0
        %1010 = vmatprep.mubr.f32.mxu0 0.0
        %1011 = vmatmul.mubr.f32.gmra.mxu0 %v891
        %v1012 = vpop.f32.mrf.mxu0
        %v1013 = vadd.f32 0.0, %v1012
        %v1014 = vpop.f32.mrf.mxu0
        %1015 = vmatprep.mubr.f32.mxu0 0.0
        %1016 = vmatmul.mubr.f32.gmra.mxu0 %v894
        %v1017 = vpop.f32.mrf.mxu0
        %v1018 = vadd.f32 0.0, %v1017
        %v1019 = vpop.f32.mrf.mxu0
        %1020 = vmatprep.mubr.f32.mxu0 0.0
        %1021 = vmatmul.mubr.f32.gmra.mxu0 %v897
        %v1022 = vpop.f32.mrf.mxu0
        %v1023 = vadd.f32 0.0, %v1022
        %v1024 = vpop.f32.mrf.mxu0
        %1025 = vmatprep.mubr.f32.mxu0 0.0
        %1026 = vmatmul.mubr.f32.gmra.mxu0 %v900
        %v1027 = vpop.f32.mrf.mxu0
        %v1028 = vadd.f32 0.0, %v1027
        %v1029 = vpop.f32.mrf.mxu0
        %1030 = vmatprep.mubr.f32.mxu0 0.0
        %1031 = vmatmul.mubr.f32.gmra.mxu0 %v903
        %v1032 = vpop.f32.mrf.mxu0
        %v1033 = vadd.f32 0.0, %v1032
        %v1034 = vpop.f32.mrf.mxu0
        %1035 = vmatprep.mubr.f32.mxu0 0.0
        %1036 = vmatmul.mubr.f32.gmra.mxu0 %v906
        %v1037 = vpop.f32.mrf.mxu0
        %v1038 = vadd.f32 0.0, %v1037
        %v1039 = vpop.f32.mrf.mxu0
        %1040 = vmatprep.mubr.f32.mxu0 0.0
        %1041 = vmatmul.mubr.f32.gmra.mxu0 %v909
        %v1042 = vpop.f32.mrf.mxu0
        %v1043 = vadd.f32 0.0, %v1042
        %v1044 = vpop.f32.mrf.mxu0
        %1045 = vmatprep.mubr.f32.mxu0 0.0
        %1046 = vmatmul.mubr.f32.gmra.mxu0 %v912
        %v1047 = vpop.f32.mrf.mxu0
        %v1048 = vadd.f32 0.0, %v1047
        %v1049 = vpop.f32.mrf.mxu0
        %1050 = vmatprep.mubr.f32.mxu0 0.0
        %1051 = vmatmul.mubr.f32.gmra.mxu0 %v915
        %v1052 = vpop.f32.mrf.mxu0
        %v1053 = vadd.f32 0.0, %v1052
        %v1054 = vpop.f32.mrf.mxu0
        %1055 = vmatprep.mubr.f32.mxu0 0.0
        %1056 = vmatmul.mubr.f32.gmra.mxu0 %v918
        %v1057 = vpop.f32.mrf.mxu0
        %v1058 = vadd.f32 0.0, %v1057
        %v1059 = vpop.f32.mrf.mxu0
        %1060 = vmatprep.mubr.f32.mxu0 0.0
        %1061 = vmatmul.mubr.f32.gmra.mxu0 %v921
        %v1062 = vpop.f32.mrf.mxu0
        %v1063 = vadd.f32 0.0, %v1062
        %v1064 = vpop.f32.mrf.mxu0
        %1065 = vmatprep.mubr.f32.mxu0 0.0
        %1066 = vmatmul.mubr.f32.gmra.mxu0 %v924
        %v1067 = vpop.f32.mrf.mxu0
        %v1068 = vadd.f32 0.0, %v1067
        %v1069 = vpop.f32.mrf.mxu0
        %1070 = vdwg.mxu0
        %v1072 = vsel %vm299, %v215, 0
        %v1075 = vsel %vm299, %v216, 0
        %v1078 = vsel %vm299, %v217, 0
        %v1081 = vsel %vm299, %v218, 0
        %v1084 = vsel %vm299, %v219, 0
        %v1087 = vsel %vm299, %v220, 0
        %v1090 = vsel %vm299, %v221, 0
        %v1093 = vsel %vm299, %v222, 0
        %v1096 = vsel %vm299, %v223, 0
        %v1099 = vsel %vm299, %v224, 0
        %v1102 = vsel %vm299, %v225, 0
        %v1105 = vsel %vm299, %v226, 0
        %v1108 = vsel %vm299, %v227, 0
        %v1111 = vsel %vm299, %v228, 0
        %v1114 = vsel %vm299, %v229, 0
        %v1117 = vsel %vm299, %v230, 0
        %1119 = vmatprep.subr.mxu0 0.0
        %1120 = vmatpush1.xpose.msra.mxu0 %v1117
        %1121 = vmatprep.subr.mxu0 0.0
        %1122 = vmatpush1.xpose.msra.mxu0 %v1114
        %1123 = vmatprep.subr.mxu0 0.0
        %1124 = vmatpush1.xpose.msra.mxu0 %v1111
        %1125 = vmatprep.subr.mxu0 0.0
        %1126 = vmatpush1.xpose.msra.mxu0 %v1108
        %1127 = vmatprep.subr.mxu0 0.0
        %1128 = vmatpush1.xpose.msra.mxu0 %v1105
        %1129 = vmatprep.subr.mxu0 0.0
        %1130 = vmatpush1.xpose.msra.mxu0 %v1102
        %1131 = vmatprep.subr.mxu0 0.0
        %1132 = vmatpush1.xpose.msra.mxu0 %v1099
        %1133 = vmatprep.subr.mxu0 0.0
        %1134 = vmatpush1.xpose.msra.mxu0 %v1096
        %1135 = vmatprep.subr.mxu0 0.0
        %1136 = vmatpush1.xpose.msra.mxu0 %v1093
        %1137 = vmatprep.subr.mxu0 0.0
        %1138 = vmatpush1.xpose.msra.mxu0 %v1090
        %1139 = vmatprep.subr.mxu0 0.0
        %1140 = vmatpush1.xpose.msra.mxu0 %v1087
        %1141 = vmatprep.subr.mxu0 0.0
        %1142 = vmatpush1.xpose.msra.mxu0 %v1084
        %1143 = vmatprep.subr.mxu0 0.0
        %1144 = vmatpush1.xpose.msra.mxu0 %v1081
        %1145 = vmatprep.subr.mxu0 0.0
        %1146 = vmatpush1.xpose.msra.mxu0 %v1078
        %1147 = vmatprep.subr.mxu0 0.0
        %1148 = vmatpush1.xpose.msra.mxu0 %v1075
        %1149 = vmatprep.subr.mxu0 0.0
        %1150 = vmatpush1.xpose.msra.mxu0 %v1072
        %1151 = vmatprep.subr.mxu0 0.0
        %1152 = vmatpush2.xpose.msra.mxu0 0.0
        %1153 = vmatprep.subr.mxu0 0.0
        %1154 = vmatpush2.xpose.msra.mxu0 0.0
        %1155 = vmatprep.subr.mxu0 0.0
        %1156 = vmatpush2.xpose.msra.mxu0 0.0
        %1157 = vmatprep.subr.mxu0 0.0
        %1158 = vmatpush2.xpose.msra.mxu0 0.0
        %1159 = vmatprep.subr.mxu0 0.0
        %1160 = vmatpush2.xpose.msra.mxu0 0.0
        %1161 = vmatprep.subr.mxu0 0.0
        %1162 = vmatpush2.xpose.msra.mxu0 0.0
        %1163 = vmatprep.subr.mxu0 0.0
        %1164 = vmatpush2.xpose.msra.mxu0 0.0
        %1165 = vmatprep.subr.mxu0 0.0
        %1166 = vmatpush2.xpose.msra.mxu0 0.0
        %1167 = vmatprep.subr.mxu0 0.0
        %1168 = vmatpush2.xpose.msra.mxu0 0.0
        %1169 = vmatprep.subr.mxu0 0.0
        %1170 = vmatpush2.xpose.msra.mxu0 0.0
        %1171 = vmatprep.subr.mxu0 0.0
        %1172 = vmatpush2.xpose.msra.mxu0 0.0
        %1173 = vmatprep.subr.mxu0 0.0
        %1174 = vmatpush2.xpose.msra.mxu0 0.0
        %1175 = vmatprep.subr.mxu0 0.0
        %1176 = vmatpush2.xpose.msra.mxu0 0.0
        %1177 = vmatprep.subr.mxu0 0.0
        %1178 = vmatpush2.xpose.msra.mxu0 0.0
        %1179 = vmatprep.subr.mxu0 0.0
        %1180 = vmatpush2.xpose.msra.mxu0 0.0
        %1181 = vmatprep.subr.mxu0 0.0
        %1182 = vmatpush2.xpose.msra.mxu0 0.0
        %1183 = vmatprep.mubr.f32.mxu0 0.0
        %1184 = vmatmul.mubr.f32.gmra.mxu0 %v1072
        %v1185 = vpop.f32.mrf.mxu0
        %v1186 = vadd.f32 0.0, %v1185
        %v1187 = vpop.f32.mrf.mxu0
        %1188 = vmatprep.mubr.f32.mxu0 0.0
        %1189 = vmatmul.mubr.f32.gmra.mxu0 %v1075
        %v1190 = vpop.f32.mrf.mxu0
        %v1191 = vadd.f32 0.0, %v1190
        %v1192 = vpop.f32.mrf.mxu0
        %1193 = vmatprep.mubr.f32.mxu0 0.0
        %1194 = vmatmul.mubr.f32.gmra.mxu0 %v1078
        %v1195 = vpop.f32.mrf.mxu0
        %v1196 = vadd.f32 0.0, %v1195
        %v1197 = vpop.f32.mrf.mxu0
        %1198 = vmatprep.mubr.f32.mxu0 0.0
        %1199 = vmatmul.mubr.f32.gmra.mxu0 %v1081
        %v1200 = vpop.f32.mrf.mxu0
        %v1201 = vadd.f32 0.0, %v1200
        %v1202 = vpop.f32.mrf.mxu0
        %1203 = vmatprep.mubr.f32.mxu0 0.0
        %1204 = vmatmul.mubr.f32.gmra.mxu0 %v1084
        %v1205 = vpop.f32.mrf.mxu0
        %v1206 = vadd.f32 0.0, %v1205
        %v1207 = vpop.f32.mrf.mxu0
        %1208 = vmatprep.mubr.f32.mxu0 0.0
        %1209 = vmatmul.mubr.f32.gmra.mxu0 %v1087
        %v1210 = vpop.f32.mrf.mxu0
        %v1211 = vadd.f32 0.0, %v1210
        %v1212 = vpop.f32.mrf.mxu0
        %1213 = vmatprep.mubr.f32.mxu0 0.0
        %1214 = vmatmul.mubr.f32.gmra.mxu0 %v1090
        %v1215 = vpop.f32.mrf.mxu0
        %v1216 = vadd.f32 0.0, %v1215
        %v1217 = vpop.f32.mrf.mxu0
        %1218 = vmatprep.mubr.f32.mxu0 0.0
        %1219 = vmatmul.mubr.f32.gmra.mxu0 %v1093
        %v1220 = vpop.f32.mrf.mxu0
        %v1221 = vadd.f32 0.0, %v1220
        %v1222 = vpop.f32.mrf.mxu0
        %1223 = vmatprep.mubr.f32.mxu0 0.0
        %1224 = vmatmul.mubr.f32.gmra.mxu0 %v1096
        %v1225 = vpop.f32.mrf.mxu0
        %v1226 = vadd.f32 0.0, %v1225
        %v1227 = vpop.f32.mrf.mxu0
        %1228 = vmatprep.mubr.f32.mxu0 0.0
        %1229 = vmatmul.mubr.f32.gmra.mxu0 %v1099
        %v1230 = vpop.f32.mrf.mxu0
        %v1231 = vadd.f32 0.0, %v1230
        %v1232 = vpop.f32.mrf.mxu0
        %1233 = vmatprep.mubr.f32.mxu0 0.0
        %1234 = vmatmul.mubr.f32.gmra.mxu0 %v1102
        %v1235 = vpop.f32.mrf.mxu0
        %v1236 = vadd.f32 0.0, %v1235
        %v1237 = vpop.f32.mrf.mxu0
        %1238 = vmatprep.mubr.f32.mxu0 0.0
        %1239 = vmatmul.mubr.f32.gmra.mxu0 %v1105
        %v1240 = vpop.f32.mrf.mxu0
        %v1241 = vadd.f32 0.0, %v1240
        %v1242 = vpop.f32.mrf.mxu0
        %1243 = vmatprep.mubr.f32.mxu0 0.0
        %1244 = vmatmul.mubr.f32.gmra.mxu0 %v1108
        %v1245 = vpop.f32.mrf.mxu0
        %v1246 = vadd.f32 0.0, %v1245
        %v1247 = vpop.f32.mrf.mxu0
        %1248 = vmatprep.mubr.f32.mxu0 0.0
        %1249 = vmatmul.mubr.f32.gmra.mxu0 %v1111
        %v1250 = vpop.f32.mrf.mxu0
        %v1251 = vadd.f32 0.0, %v1250
        %v1252 = vpop.f32.mrf.mxu0
        %1253 = vmatprep.mubr.f32.mxu0 0.0
        %1254 = vmatmul.mubr.f32.gmra.mxu0 %v1114
        %v1255 = vpop.f32.mrf.mxu0
        %v1256 = vadd.f32 0.0, %v1255
        %v1257 = vpop.f32.mrf.mxu0
        %1258 = vmatprep.mubr.f32.mxu0 0.0
        %1259 = vmatmul.mubr.f32.gmra.mxu0 %v1117
        %v1260 = vpop.f32.mrf.mxu0
        %v1261 = vadd.f32 0.0, %v1260
        %v1262 = vpop.f32.mrf.mxu0
        %1263 = vdwg.mxu0
        %v1264 = vmul.f32 %v607, 2.0
        %v1265 = vmul.f32 %v612, 2.0
        %v1266 = vmul.f32 %v617, 2.0
        %v1267 = vmul.f32 %v622, 2.0
        %v1268 = vmul.f32 %v627, 2.0
        %v1269 = vmul.f32 %v632, 2.0
        %v1270 = vmul.f32 %v637, 2.0
        %v1271 = vmul.f32 %v642, 2.0
        %v1272 = vmul.f32 %v647, 2.0
        %v1273 = vmul.f32 %v652, 2.0
        %v1274 = vmul.f32 %v657, 2.0
        %v1275 = vmul.f32 %v662, 2.0
        %v1276 = vmul.f32 %v667, 2.0
        %v1277 = vmul.f32 %v672, 2.0
        %v1278 = vmul.f32 %v677, 2.0
        %v1279 = vmul.f32 %v682, 2.0
        %v1280 = vmul.f32 %v800, 2.0
        %v1281 = vmul.f32 %v805, 2.0
        %v1282 = vmul.f32 %v810, 2.0
        %v1283 = vmul.f32 %v815, 2.0
        %v1284 = vmul.f32 %v820, 2.0
        %v1285 = vmul.f32 %v825, 2.0
        %v1286 = vmul.f32 %v830, 2.0
        %v1287 = vmul.f32 %v835, 2.0
        %v1288 = vmul.f32 %v840, 2.0
        %v1289 = vmul.f32 %v845, 2.0
        %v1290 = vmul.f32 %v850, 2.0
        %v1291 = vmul.f32 %v855, 2.0
        %v1292 = vmul.f32 %v860, 2.0
        %v1293 = vmul.f32 %v865, 2.0
        %v1294 = vmul.f32 %v870, 2.0
        %v1295 = vmul.f32 %v875, 2.0
        %v1296 = vmul.f32 %v993, 2.0
        %v1297 = vmul.f32 %v998, 2.0
        %v1298 = vmul.f32 %v1003, 2.0
        %v1299 = vmul.f32 %v1008, 2.0
        %v1300 = vmul.f32 %v1013, 2.0
        %v1301 = vmul.f32 %v1018, 2.0
        %v1302 = vmul.f32 %v1023, 2.0
        %v1303 = vmul.f32 %v1028, 2.0
        %v1304 = vmul.f32 %v1033, 2.0
        %v1305 = vmul.f32 %v1038, 2.0
        %v1306 = vmul.f32 %v1043, 2.0
        %v1307 = vmul.f32 %v1048, 2.0
        %v1308 = vmul.f32 %v1053, 2.0
        %v1309 = vmul.f32 %v1058, 2.0
        %v1310 = vmul.f32 %v1063, 2.0
        %v1311 = vmul.f32 %v1068, 2.0
        %v1312 = vmul.f32 %v1186, 2.0
        %v1313 = vmul.f32 %v1191, 2.0
        %v1314 = vmul.f32 %v1196, 2.0
        %v1315 = vmul.f32 %v1201, 2.0
        %v1316 = vmul.f32 %v1206, 2.0
        %v1317 = vmul.f32 %v1211, 2.0
        %v1318 = vmul.f32 %v1216, 2.0
        %v1319 = vmul.f32 %v1221, 2.0
        %v1320 = vmul.f32 %v1226, 2.0
        %v1321 = vmul.f32 %v1231, 2.0
        %v1322 = vmul.f32 %v1236, 2.0
        %v1323 = vmul.f32 %v1241, 2.0
        %v1324 = vmul.f32 %v1246, 2.0
        %v1325 = vmul.f32 %v1251, 2.0
        %v1326 = vmul.f32 %v1256, 2.0
        %v1327 = vmul.f32 %v1261, 2.0
        %v1328 = vsub.f32 %v302, %v1264
        %v1329 = vsub.f32 %v305, %v1265
        %v1330 = vsub.f32 %v308, %v1266
        %v1331 = vsub.f32 %v311, %v1267
        %v1332 = vsub.f32 %v314, %v1268
        %v1333 = vsub.f32 %v317, %v1269
        %v1334 = vsub.f32 %v320, %v1270
        %v1335 = vsub.f32 %v323, %v1271
        %v1336 = vsub.f32 %v326, %v1272
        %v1337 = vsub.f32 %v329, %v1273
        %v1338 = vsub.f32 %v332, %v1274
        %v1339 = vsub.f32 %v335, %v1275
        %v1340 = vsub.f32 %v338, %v1276
        %v1341 = vsub.f32 %v341, %v1277
        %v1342 = vsub.f32 %v344, %v1278
        %v1343 = vsub.f32 %v347, %v1279
        %v1344 = vsub.f32 %v350, %v1280
        %v1345 = vsub.f32 %v353, %v1281
        %v1346 = vsub.f32 %v356, %v1282
        %v1347 = vsub.f32 %v359, %v1283
        %v1348 = vsub.f32 %v362, %v1284
        %v1349 = vsub.f32 %v365, %v1285
        %v1350 = vsub.f32 %v368, %v1286
        %v1351 = vsub.f32 %v371, %v1287
        %v1352 = vsub.f32 %v374, %v1288
        %v1353 = vsub.f32 %v377, %v1289
        %v1354 = vsub.f32 %v380, %v1290
        %v1355 = vsub.f32 %v383, %v1291
        %v1356 = vsub.f32 %v386, %v1292
        %v1357 = vsub.f32 %v389, %v1293
        %v1358 = vsub.f32 %v392, %v1294
        %v1359 = vsub.f32 %v395, %v1295
        %v1360 = vsub.f32 %v398, %v1296
        %v1361 = vsub.f32 %v401, %v1297
        %v1362 = vsub.f32 %v404, %v1298
        %v1363 = vsub.f32 %v407, %v1299
        %v1364 = vsub.f32 %v410, %v1300
        %v1365 = vsub.f32 %v413, %v1301
        %v1366 = vsub.f32 %v416, %v1302
        %v1367 = vsub.f32 %v419, %v1303
        %v1368 = vsub.f32 %v422, %v1304
        %v1369 = vsub.f32 %v425, %v1305
        %v1370 = vsub.f32 %v428, %v1306
        %v1371 = vsub.f32 %v431, %v1307
        %v1372 = vsub.f32 %v434, %v1308
        %v1373 = vsub.f32 %v437, %v1309
        %v1374 = vsub.f32 %v440, %v1310
        %v1375 = vsub.f32 %v443, %v1311
        %v1376 = vsub.f32 %v446, %v1312
        %v1377 = vsub.f32 %v449, %v1313
        %v1378 = vsub.f32 %v452, %v1314
        %v1379 = vsub.f32 %v455, %v1315
        %v1380 = vsub.f32 %v458, %v1316
        %v1381 = vsub.f32 %v461, %v1317
        %v1382 = vsub.f32 %v464, %v1318
        %v1383 = vsub.f32 %v467, %v1319
        %v1384 = vsub.f32 %v470, %v1320
        %v1385 = vsub.f32 %v473, %v1321
        %v1386 = vsub.f32 %v476, %v1322
        %v1387 = vsub.f32 %v479, %v1323
        %v1388 = vsub.f32 %v482, %v1324
        %v1389 = vsub.f32 %v485, %v1325
        %v1390 = vsub.f32 %v488, %v1326
        %v1391 = vsub.f32 %v491, %v1327
        %1392 = vxpose.xlu0.b32.start [1/16] %v302, 128
        %1393 = vxpose.xlu0.b32.cont [2/16] %v305, 128
        %1394 = vxpose.xlu0.b32.cont [3/16] %v308, 128
        %1395 = vxpose.xlu0.b32.cont [4/16] %v311, 128
        %1396 = vxpose.xlu0.b32.cont [5/16] %v314, 128
        %1397 = vxpose.xlu0.b32.cont [6/16] %v317, 128
        %1398 = vxpose.xlu0.b32.cont [7/16] %v320, 128
        %1399 = vxpose.xlu0.b32.cont [8/16] %v323, 128
        %1400 = vxpose.xlu0.b32.cont [9/16] %v326, 128
        %1401 = vxpose.xlu0.b32.cont [10/16] %v329, 128
        %1402 = vxpose.xlu0.b32.cont [11/16] %v332, 128
        %1403 = vxpose.xlu0.b32.cont [12/16] %v335, 128
        %1404 = vxpose.xlu0.b32.cont [13/16] %v338, 128
        %1405 = vxpose.xlu0.b32.cont [14/16] %v341, 128
        %1406 = vxpose.xlu0.b32.cont [15/16] %v344, 128
        %1407 = vxpose.xlu0.b32.end [16/16] %v347, 128
        %v1408 = vpop.trf.xlu0
        %v1409 = vpop.trf.xlu0
        %v1410 = vpop.trf.xlu0
        %v1411 = vpop.trf.xlu0
        %v1412 = vpop.trf.xlu0
        %v1413 = vpop.trf.xlu0
        %v1414 = vpop.trf.xlu0
        %v1415 = vpop.trf.xlu0
        %v1416 = vpop.trf.xlu0
        %v1417 = vpop.trf.xlu0
        %v1418 = vpop.trf.xlu0
        %v1419 = vpop.trf.xlu0
        %v1420 = vpop.trf.xlu0
        %v1421 = vpop.trf.xlu0
        %v1422 = vpop.trf.xlu0
        %v1423 = vpop.trf.xlu0
        %1424 = vxpose.xlu0.b32.start [1/16] %v350, 128
        %1425 = vxpose.xlu0.b32.cont [2/16] %v353, 128
        %1426 = vxpose.xlu0.b32.cont [3/16] %v356, 128
        %1427 = vxpose.xlu0.b32.cont [4/16] %v359, 128
        %1428 = vxpose.xlu0.b32.cont [5/16] %v362, 128
        %1429 = vxpose.xlu0.b32.cont [6/16] %v365, 128
        %1430 = vxpose.xlu0.b32.cont [7/16] %v368, 128
        %1431 = vxpose.xlu0.b32.cont [8/16] %v371, 128
        %1432 = vxpose.xlu0.b32.cont [9/16] %v374, 128
        %1433 = vxpose.xlu0.b32.cont [10/16] %v377, 128
        %1434 = vxpose.xlu0.b32.cont [11/16] %v380, 128
        %1435 = vxpose.xlu0.b32.cont [12/16] %v383, 128
        %1436 = vxpose.xlu0.b32.cont [13/16] %v386, 128
        %1437 = vxpose.xlu0.b32.cont [14/16] %v389, 128
        %1438 = vxpose.xlu0.b32.cont [15/16] %v392, 128
        %1439 = vxpose.xlu0.b32.end [16/16] %v395, 128
        %v1440 = vpop.trf.xlu0
        %v1441 = vpop.trf.xlu0
        %v1442 = vpop.trf.xlu0
        %v1443 = vpop.trf.xlu0
        %v1444 = vpop.trf.xlu0
        %v1445 = vpop.trf.xlu0
        %v1446 = vpop.trf.xlu0
        %v1447 = vpop.trf.xlu0
        %v1448 = vpop.trf.xlu0
        %v1449 = vpop.trf.xlu0
        %v1450 = vpop.trf.xlu0
        %v1451 = vpop.trf.xlu0
        %v1452 = vpop.trf.xlu0
        %v1453 = vpop.trf.xlu0
        %v1454 = vpop.trf.xlu0
        %v1455 = vpop.trf.xlu0
        %1456 = vxpose.xlu0.b32.start [1/16] %v398, 128
        %1457 = vxpose.xlu0.b32.cont [2/16] %v401, 128
        %1458 = vxpose.xlu0.b32.cont [3/16] %v404, 128
        %1459 = vxpose.xlu0.b32.cont [4/16] %v407, 128
        %1460 = vxpose.xlu0.b32.cont [5/16] %v410, 128
        %1461 = vxpose.xlu0.b32.cont [6/16] %v413, 128
        %1462 = vxpose.xlu0.b32.cont [7/16] %v416, 128
        %1463 = vxpose.xlu0.b32.cont [8/16] %v419, 128
        %1464 = vxpose.xlu0.b32.cont [9/16] %v422, 128
        %1465 = vxpose.xlu0.b32.cont [10/16] %v425, 128
        %1466 = vxpose.xlu0.b32.cont [11/16] %v428, 128
        %1467 = vxpose.xlu0.b32.cont [12/16] %v431, 128
        %1468 = vxpose.xlu0.b32.cont [13/16] %v434, 128
        %1469 = vxpose.xlu0.b32.cont [14/16] %v437, 128
        %1470 = vxpose.xlu0.b32.cont [15/16] %v440, 128
        %1471 = vxpose.xlu0.b32.end [16/16] %v443, 128
        %v1472 = vpop.trf.xlu0
        %v1473 = vpop.trf.xlu0
        %v1474 = vpop.trf.xlu0
        %v1475 = vpop.trf.xlu0
        %v1476 = vpop.trf.xlu0
        %v1477 = vpop.trf.xlu0
        %v1478 = vpop.trf.xlu0
        %v1479 = vpop.trf.xlu0
        %v1480 = vpop.trf.xlu0
        %v1481 = vpop.trf.xlu0
        %v1482 = vpop.trf.xlu0
        %v1483 = vpop.trf.xlu0
        %v1484 = vpop.trf.xlu0
        %v1485 = vpop.trf.xlu0
        %v1486 = vpop.trf.xlu0
        %v1487 = vpop.trf.xlu0
        %1488 = vxpose.xlu0.b32.start [1/16] %v446, 128
        %1489 = vxpose.xlu0.b32.cont [2/16] %v449, 128
        %1490 = vxpose.xlu0.b32.cont [3/16] %v452, 128
        %1491 = vxpose.xlu0.b32.cont [4/16] %v455, 128
        %1492 = vxpose.xlu0.b32.cont [5/16] %v458, 128
        %1493 = vxpose.xlu0.b32.cont [6/16] %v461, 128
        %1494 = vxpose.xlu0.b32.cont [7/16] %v464, 128
        %1495 = vxpose.xlu0.b32.cont [8/16] %v467, 128
        %1496 = vxpose.xlu0.b32.cont [9/16] %v470, 128
        %1497 = vxpose.xlu0.b32.cont [10/16] %v473, 128
        %1498 = vxpose.xlu0.b32.cont [11/16] %v476, 128
        %1499 = vxpose.xlu0.b32.cont [12/16] %v479, 128
        %1500 = vxpose.xlu0.b32.cont [13/16] %v482, 128
        %1501 = vxpose.xlu0.b32.cont [14/16] %v485, 128
        %1502 = vxpose.xlu0.b32.cont [15/16] %v488, 128
        %1503 = vxpose.xlu0.b32.end [16/16] %v491, 128
        %v1504 = vpop.trf.xlu0
        %v1505 = vpop.trf.xlu0
        %v1506 = vpop.trf.xlu0
        %v1507 = vpop.trf.xlu0
        %v1508 = vpop.trf.xlu0
        %v1509 = vpop.trf.xlu0
        %v1510 = vpop.trf.xlu0
        %v1511 = vpop.trf.xlu0
        %v1512 = vpop.trf.xlu0
        %v1513 = vpop.trf.xlu0
        %v1514 = vpop.trf.xlu0
        %v1515 = vpop.trf.xlu0
        %v1516 = vpop.trf.xlu0
        %v1517 = vpop.trf.xlu0
        %v1518 = vpop.trf.xlu0
        %v1519 = vpop.trf.xlu0
        %v1520 = vlaneseq
        %v1521 = vshrl.u32 %v1520, 7
        %v1522 = vsub.s32 0, %v1521
        %v1523 = vrot.slane %v1408, %v1522
        %v1524 = vlaneseq
        %v1525 = vshrl.u32 %v1524, 7
        %v1526 = vsub.s32 0, %v1525
        %v1527 = vrot.slane %v1440, %v1526
        %v1528 = vlaneseq
        %v1529 = vshrl.u32 %v1528, 7
        %v1530 = vsub.s32 0, %v1529
        %v1531 = vrot.slane %v1472, %v1530
        %v1532 = vlaneseq
        %v1533 = vshrl.u32 %v1532, 7
        %v1534 = vsub.s32 0, %v1533
        %v1535 = vrot.slane %v1504, %v1534
        %v1536 = vadd.f32 %v1328, %v1523
        %v1537 = vadd.f32 %v1329, %v1523
        %v1538 = vadd.f32 %v1330, %v1523
        %v1539 = vadd.f32 %v1331, %v1523
        %v1540 = vadd.f32 %v1332, %v1523
        %v1541 = vadd.f32 %v1333, %v1523
        %v1542 = vadd.f32 %v1334, %v1523
        %v1543 = vadd.f32 %v1335, %v1523
        %v1544 = vadd.f32 %v1336, %v1523
        %v1545 = vadd.f32 %v1337, %v1523
        %v1546 = vadd.f32 %v1338, %v1523
        %v1547 = vadd.f32 %v1339, %v1523
        %v1548 = vadd.f32 %v1340, %v1523
        %v1549 = vadd.f32 %v1341, %v1523
        %v1550 = vadd.f32 %v1342, %v1523
        %v1551 = vadd.f32 %v1343, %v1523
        %v1552 = vadd.f32 %v1344, %v1527
        %v1553 = vadd.f32 %v1345, %v1527
        %v1554 = vadd.f32 %v1346, %v1527
        %v1555 = vadd.f32 %v1347, %v1527
        %v1556 = vadd.f32 %v1348, %v1527
        %v1557 = vadd.f32 %v1349, %v1527
        %v1558 = vadd.f32 %v1350, %v1527
        %v1559 = vadd.f32 %v1351, %v1527
        %v1560 = vadd.f32 %v1352, %v1527
        %v1561 = vadd.f32 %v1353, %v1527
        %v1562 = vadd.f32 %v1354, %v1527
        %v1563 = vadd.f32 %v1355, %v1527
        %v1564 = vadd.f32 %v1356, %v1527
        %v1565 = vadd.f32 %v1357, %v1527
        %v1566 = vadd.f32 %v1358, %v1527
        %v1567 = vadd.f32 %v1359, %v1527
        %v1568 = vadd.f32 %v1360, %v1531
        %v1569 = vadd.f32 %v1361, %v1531
        %v1570 = vadd.f32 %v1362, %v1531
        %v1571 = vadd.f32 %v1363, %v1531
        %v1572 = vadd.f32 %v1364, %v1531
        %v1573 = vadd.f32 %v1365, %v1531
        %v1574 = vadd.f32 %v1366, %v1531
        %v1575 = vadd.f32 %v1367, %v1531
        %v1576 = vadd.f32 %v1368, %v1531
        %v1577 = vadd.f32 %v1369, %v1531
        %v1578 = vadd.f32 %v1370, %v1531
        %v1579 = vadd.f32 %v1371, %v1531
        %v1580 = vadd.f32 %v1372, %v1531
        %v1581 = vadd.f32 %v1373, %v1531
        %v1582 = vadd.f32 %v1374, %v1531
        %v1583 = vadd.f32 %v1375, %v1531
        %v1584 = vadd.f32 %v1376, %v1535
        %v1585 = vadd.f32 %v1377, %v1535
        %v1586 = vadd.f32 %v1378, %v1535
        %v1587 = vadd.f32 %v1379, %v1535
        %v1588 = vadd.f32 %v1380, %v1535
        %v1589 = vadd.f32 %v1381, %v1535
        %v1590 = vadd.f32 %v1382, %v1535
        %v1591 = vadd.f32 %v1383, %v1535
        %v1592 = vadd.f32 %v1384, %v1535
        %v1593 = vadd.f32 %v1385, %v1535
        %v1594 = vadd.f32 %v1386, %v1535
        %v1595 = vadd.f32 %v1387, %v1535
        %v1596 = vadd.f32 %v1388, %v1535
        %v1597 = vadd.f32 %v1389, %v1535
        %v1598 = vadd.f32 %v1390, %v1535
        %v1599 = vadd.f32 %v1391, %v1535
        %v1600 = vmax.f32 %v1536, 1e-06
        %v1601 = vmax.f32 %v1537, 1e-06
        %v1602 = vmax.f32 %v1538, 1e-06
        %v1603 = vmax.f32 %v1539, 1e-06
        %v1604 = vmax.f32 %v1540, 1e-06
        %v1605 = vmax.f32 %v1541, 1e-06
        %v1606 = vmax.f32 %v1542, 1e-06
        %v1607 = vmax.f32 %v1543, 1e-06
        %v1608 = vmax.f32 %v1544, 1e-06
        %v1609 = vmax.f32 %v1545, 1e-06
        %v1610 = vmax.f32 %v1546, 1e-06
        %v1611 = vmax.f32 %v1547, 1e-06
        %v1612 = vmax.f32 %v1548, 1e-06
        %v1613 = vmax.f32 %v1549, 1e-06
        %v1614 = vmax.f32 %v1550, 1e-06
        %v1615 = vmax.f32 %v1551, 1e-06
        %v1616 = vmax.f32 %v1552, 1e-06
        %v1617 = vmax.f32 %v1553, 1e-06
        %v1618 = vmax.f32 %v1554, 1e-06
        %v1619 = vmax.f32 %v1555, 1e-06
        %v1620 = vmax.f32 %v1556, 1e-06
        %v1621 = vmax.f32 %v1557, 1e-06
        %v1622 = vmax.f32 %v1558, 1e-06
        %v1623 = vmax.f32 %v1559, 1e-06
        %v1624 = vmax.f32 %v1560, 1e-06
        %v1625 = vmax.f32 %v1561, 1e-06
        %v1626 = vmax.f32 %v1562, 1e-06
        %v1627 = vmax.f32 %v1563, 1e-06
        %v1628 = vmax.f32 %v1564, 1e-06
        %v1629 = vmax.f32 %v1565, 1e-06
        %v1630 = vmax.f32 %v1566, 1e-06
        %v1631 = vmax.f32 %v1567, 1e-06
        %v1632 = vmax.f32 %v1568, 1e-06
        %v1633 = vmax.f32 %v1569, 1e-06
        %v1634 = vmax.f32 %v1570, 1e-06
        %v1635 = vmax.f32 %v1571, 1e-06
        %v1636 = vmax.f32 %v1572, 1e-06
        %v1637 = vmax.f32 %v1573, 1e-06
        %v1638 = vmax.f32 %v1574, 1e-06
        %v1639 = vmax.f32 %v1575, 1e-06
        %v1640 = vmax.f32 %v1576, 1e-06
        %v1641 = vmax.f32 %v1577, 1e-06
        %v1642 = vmax.f32 %v1578, 1e-06
        %v1643 = vmax.f32 %v1579, 1e-06
        %v1644 = vmax.f32 %v1580, 1e-06
        %v1645 = vmax.f32 %v1581, 1e-06
        %v1646 = vmax.f32 %v1582, 1e-06
        %v1647 = vmax.f32 %v1583, 1e-06
        %v1648 = vmax.f32 %v1584, 1e-06
        %v1649 = vmax.f32 %v1585, 1e-06
        %v1650 = vmax.f32 %v1586, 1e-06
        %v1651 = vmax.f32 %v1587, 1e-06
        %v1652 = vmax.f32 %v1588, 1e-06
        %v1653 = vmax.f32 %v1589, 1e-06
        %v1654 = vmax.f32 %v1590, 1e-06
        %v1655 = vmax.f32 %v1591, 1e-06
        %v1656 = vmax.f32 %v1592, 1e-06
        %v1657 = vmax.f32 %v1593, 1e-06
        %v1658 = vmax.f32 %v1594, 1e-06
        %v1659 = vmax.f32 %v1595, 1e-06
        %v1660 = vmax.f32 %v1596, 1e-06
        %v1661 = vmax.f32 %v1597, 1e-06
        %v1662 = vmax.f32 %v1598, 1e-06
        %v1663 = vmax.f32 %v1599, 1e-06
        %v1664 = vmin.f32 %v1600, 1000000.0
        %v1665 = vmin.f32 %v1601, 1000000.0
        %v1666 = vmin.f32 %v1602, 1000000.0
        %v1667 = vmin.f32 %v1603, 1000000.0
        %v1668 = vmin.f32 %v1604, 1000000.0
        %v1669 = vmin.f32 %v1605, 1000000.0
        %v1670 = vmin.f32 %v1606, 1000000.0
        %v1671 = vmin.f32 %v1607, 1000000.0
        %v1672 = vmin.f32 %v1608, 1000000.0
        %v1673 = vmin.f32 %v1609, 1000000.0
        %v1674 = vmin.f32 %v1610, 1000000.0
        %v1675 = vmin.f32 %v1611, 1000000.0
        %v1676 = vmin.f32 %v1612, 1000000.0
        %v1677 = vmin.f32 %v1613, 1000000.0
        %v1678 = vmin.f32 %v1614, 1000000.0
        %v1679 = vmin.f32 %v1615, 1000000.0
        %v1680 = vmin.f32 %v1616, 1000000.0
        %v1681 = vmin.f32 %v1617, 1000000.0
        %v1682 = vmin.f32 %v1618, 1000000.0
        %v1683 = vmin.f32 %v1619, 1000000.0
        %v1684 = vmin.f32 %v1620, 1000000.0
        %v1685 = vmin.f32 %v1621, 1000000.0
        %v1686 = vmin.f32 %v1622, 1000000.0
        %v1687 = vmin.f32 %v1623, 1000000.0
        %v1688 = vmin.f32 %v1624, 1000000.0
        %v1689 = vmin.f32 %v1625, 1000000.0
        %v1690 = vmin.f32 %v1626, 1000000.0
        %v1691 = vmin.f32 %v1627, 1000000.0
        %v1692 = vmin.f32 %v1628, 1000000.0
        %v1693 = vmin.f32 %v1629, 1000000.0
        %v1694 = vmin.f32 %v1630, 1000000.0
        %v1695 = vmin.f32 %v1631, 1000000.0
        %v1696 = vmin.f32 %v1632, 1000000.0
        %v1697 = vmin.f32 %v1633, 1000000.0
        %v1698 = vmin.f32 %v1634, 1000000.0
        %v1699 = vmin.f32 %v1635, 1000000.0
        %v1700 = vmin.f32 %v1636, 1000000.0
        %v1701 = vmin.f32 %v1637, 1000000.0
        %v1702 = vmin.f32 %v1638, 1000000.0
        %v1703 = vmin.f32 %v1639, 1000000.0
        %v1704 = vmin.f32 %v1640, 1000000.0
        %v1705 = vmin.f32 %v1641, 1000000.0
        %v1706 = vmin.f32 %v1642, 1000000.0
        %v1707 = vmin.f32 %v1643, 1000000.0
        %v1708 = vmin.f32 %v1644, 1000000.0
        %v1709 = vmin.f32 %v1645, 1000000.0
        %v1710 = vmin.f32 %v1646, 1000000.0
        %v1711 = vmin.f32 %v1647, 1000000.0
        %v1712 = vmin.f32 %v1648, 1000000.0
        %v1713 = vmin.f32 %v1649, 1000000.0
        %v1714 = vmin.f32 %v1650, 1000000.0
        %v1715 = vmin.f32 %v1651, 1000000.0
        %v1716 = vmin.f32 %v1652, 1000000.0
        %v1717 = vmin.f32 %v1653, 1000000.0
        %v1718 = vmin.f32 %v1654, 1000000.0
        %v1719 = vmin.f32 %v1655, 1000000.0
        %v1720 = vmin.f32 %v1656, 1000000.0
        %v1721 = vmin.f32 %v1657, 1000000.0
        %v1722 = vmin.f32 %v1658, 1000000.0
        %v1723 = vmin.f32 %v1659, 1000000.0
        %v1724 = vmin.f32 %v1660, 1000000.0
        %v1725 = vmin.f32 %v1661, 1000000.0
        %v1726 = vmin.f32 %v1662, 1000000.0
        %v1727 = vmin.f32 %v1663, 1000000.0
        %v1728 = vrsqrt.pop %v1664
        %v1729 = vmul.f32 %v1664, %v1728
        %vm1730 = vcmp.eq.f32.partialorder %v1664, inf
        %v1731 = vsel %vm1730, %v1664, %v1729
        %vm1732 = vcmp.eq.f32.partialorder %v1664, 0.0
        %v1733 = vand.u32 %v1664, 2147483648
        %v1734 = vsel %vm1732, %v1733, %v1731
        %v1735 = vrsqrt.pop %v1665
        %v1736 = vmul.f32 %v1665, %v1735
        %vm1737 = vcmp.eq.f32.partialorder %v1665, inf
        %v1738 = vsel %vm1737, %v1665, %v1736
        %vm1739 = vcmp.eq.f32.partialorder %v1665, 0.0
        %v1740 = vand.u32 %v1665, 2147483648
        %v1741 = vsel %vm1739, %v1740, %v1738
        %v1742 = vrsqrt.pop %v1666
        %v1743 = vmul.f32 %v1666, %v1742
        %vm1744 = vcmp.eq.f32.partialorder %v1666, inf
        %v1745 = vsel %vm1744, %v1666, %v1743
        %vm1746 = vcmp.eq.f32.partialorder %v1666, 0.0
        %v1747 = vand.u32 %v1666, 2147483648
        %v1748 = vsel %vm1746, %v1747, %v1745
        %v1749 = vrsqrt.pop %v1667
        %v1750 = vmul.f32 %v1667, %v1749
        %vm1751 = vcmp.eq.f32.partialorder %v1667, inf
        %v1752 = vsel %vm1751, %v1667, %v1750
        %vm1753 = vcmp.eq.f32.partialorder %v1667, 0.0
        %v1754 = vand.u32 %v1667, 2147483648
        %v1755 = vsel %vm1753, %v1754, %v1752
        %v1756 = vrsqrt.pop %v1668
        %v1757 = vmul.f32 %v1668, %v1756
        %vm1758 = vcmp.eq.f32.partialorder %v1668, inf
        %v1759 = vsel %vm1758, %v1668, %v1757
        %vm1760 = vcmp.eq.f32.partialorder %v1668, 0.0
        %v1761 = vand.u32 %v1668, 2147483648
        %v1762 = vsel %vm1760, %v1761, %v1759
        %v1763 = vrsqrt.pop %v1669
        %v1764 = vmul.f32 %v1669, %v1763
        %vm1765 = vcmp.eq.f32.partialorder %v1669, inf
        %v1766 = vsel %vm1765, %v1669, %v1764
        %vm1767 = vcmp.eq.f32.partialorder %v1669, 0.0
        %v1768 = vand.u32 %v1669, 2147483648
        %v1769 = vsel %vm1767, %v1768, %v1766
        %v1770 = vrsqrt.pop %v1670
        %v1771 = vmul.f32 %v1670, %v1770
        %vm1772 = vcmp.eq.f32.partialorder %v1670, inf
        %v1773 = vsel %vm1772, %v1670, %v1771
        %vm1774 = vcmp.eq.f32.partialorder %v1670, 0.0
        %v1775 = vand.u32 %v1670, 2147483648
        %v1776 = vsel %vm1774, %v1775, %v1773
        %v1777 = vrsqrt.pop %v1671
        %v1778 = vmul.f32 %v1671, %v1777
        %vm1779 = vcmp.eq.f32.partialorder %v1671, inf
        %v1780 = vsel %vm1779, %v1671, %v1778
        %vm1781 = vcmp.eq.f32.partialorder %v1671, 0.0
        %v1782 = vand.u32 %v1671, 2147483648
        %v1783 = vsel %vm1781, %v1782, %v1780
        %v1784 = vrsqrt.pop %v1672
        %v1785 = vmul.f32 %v1672, %v1784
        %vm1786 = vcmp.eq.f32.partialorder %v1672, inf
        %v1787 = vsel %vm1786, %v1672, %v1785
        %vm1788 = vcmp.eq.f32.partialorder %v1672, 0.0
        %v1789 = vand.u32 %v1672, 2147483648
        %v1790 = vsel %vm1788, %v1789, %v1787
        %v1791 = vrsqrt.pop %v1673
        %v1792 = vmul.f32 %v1673, %v1791
        %vm1793 = vcmp.eq.f32.partialorder %v1673, inf
        %v1794 = vsel %vm1793, %v1673, %v1792
        %vm1795 = vcmp.eq.f32.partialorder %v1673, 0.0
        %v1796 = vand.u32 %v1673, 2147483648
        %v1797 = vsel %vm1795, %v1796, %v1794
        %v1798 = vrsqrt.pop %v1674
        %v1799 = vmul.f32 %v1674, %v1798
        %vm1800 = vcmp.eq.f32.partialorder %v1674, inf
        %v1801 = vsel %vm1800, %v1674, %v1799
        %vm1802 = vcmp.eq.f32.partialorder %v1674, 0.0
        %v1803 = vand.u32 %v1674, 2147483648
        %v1804 = vsel %vm1802, %v1803, %v1801
        %v1805 = vrsqrt.pop %v1675
        %v1806 = vmul.f32 %v1675, %v1805
        %vm1807 = vcmp.eq.f32.partialorder %v1675, inf
        %v1808 = vsel %vm1807, %v1675, %v1806
        %vm1809 = vcmp.eq.f32.partialorder %v1675, 0.0
        %v1810 = vand.u32 %v1675, 2147483648
        %v1811 = vsel %vm1809, %v1810, %v1808
        %v1812 = vrsqrt.pop %v1676
        %v1813 = vmul.f32 %v1676, %v1812
        %vm1814 = vcmp.eq.f32.partialorder %v1676, inf
        %v1815 = vsel %vm1814, %v1676, %v1813
        %vm1816 = vcmp.eq.f32.partialorder %v1676, 0.0
        %v1817 = vand.u32 %v1676, 2147483648
        %v1818 = vsel %vm1816, %v1817, %v1815
        %v1819 = vrsqrt.pop %v1677
        %v1820 = vmul.f32 %v1677, %v1819
        %vm1821 = vcmp.eq.f32.partialorder %v1677, inf
        %v1822 = vsel %vm1821, %v1677, %v1820
        %vm1823 = vcmp.eq.f32.partialorder %v1677, 0.0
        %v1824 = vand.u32 %v1677, 2147483648
        %v1825 = vsel %vm1823, %v1824, %v1822
        %v1826 = vrsqrt.pop %v1678
        %v1827 = vmul.f32 %v1678, %v1826
        %vm1828 = vcmp.eq.f32.partialorder %v1678, inf
        %v1829 = vsel %vm1828, %v1678, %v1827
        %vm1830 = vcmp.eq.f32.partialorder %v1678, 0.0
        %v1831 = vand.u32 %v1678, 2147483648
        %v1832 = vsel %vm1830, %v1831, %v1829
        %v1833 = vrsqrt.pop %v1679
        %v1834 = vmul.f32 %v1679, %v1833
        %vm1835 = vcmp.eq.f32.partialorder %v1679, inf
        %v1836 = vsel %vm1835, %v1679, %v1834
        %vm1837 = vcmp.eq.f32.partialorder %v1679, 0.0
        %v1838 = vand.u32 %v1679, 2147483648
        %v1839 = vsel %vm1837, %v1838, %v1836
        %v1840 = vrsqrt.pop %v1680
        %v1841 = vmul.f32 %v1680, %v1840
        %vm1842 = vcmp.eq.f32.partialorder %v1680, inf
        %v1843 = vsel %vm1842, %v1680, %v1841
        %vm1844 = vcmp.eq.f32.partialorder %v1680, 0.0
        %v1845 = vand.u32 %v1680, 2147483648
        %v1846 = vsel %vm1844, %v1845, %v1843
        %v1847 = vrsqrt.pop %v1681
        %v1848 = vmul.f32 %v1681, %v1847
        %vm1849 = vcmp.eq.f32.partialorder %v1681, inf
        %v1850 = vsel %vm1849, %v1681, %v1848
        %vm1851 = vcmp.eq.f32.partialorder %v1681, 0.0
        %v1852 = vand.u32 %v1681, 2147483648
        %v1853 = vsel %vm1851, %v1852, %v1850
        %v1854 = vrsqrt.pop %v1682
        %v1855 = vmul.f32 %v1682, %v1854
        %vm1856 = vcmp.eq.f32.partialorder %v1682, inf
        %v1857 = vsel %vm1856, %v1682, %v1855
        %vm1858 = vcmp.eq.f32.partialorder %v1682, 0.0
        %v1859 = vand.u32 %v1682, 2147483648
        %v1860 = vsel %vm1858, %v1859, %v1857
        %v1861 = vrsqrt.pop %v1683
        %v1862 = vmul.f32 %v1683, %v1861
        %vm1863 = vcmp.eq.f32.partialorder %v1683, inf
        %v1864 = vsel %vm1863, %v1683, %v1862
        %vm1865 = vcmp.eq.f32.partialorder %v1683, 0.0
        %v1866 = vand.u32 %v1683, 2147483648
        %v1867 = vsel %vm1865, %v1866, %v1864
        %v1868 = vrsqrt.pop %v1684
        %v1869 = vmul.f32 %v1684, %v1868
        %vm1870 = vcmp.eq.f32.partialorder %v1684, inf
        %v1871 = vsel %vm1870, %v1684, %v1869
        %vm1872 = vcmp.eq.f32.partialorder %v1684, 0.0
        %v1873 = vand.u32 %v1684, 2147483648
        %v1874 = vsel %vm1872, %v1873, %v1871
        %v1875 = vrsqrt.pop %v1685
        %v1876 = vmul.f32 %v1685, %v1875
        %vm1877 = vcmp.eq.f32.partialorder %v1685, inf
        %v1878 = vsel %vm1877, %v1685, %v1876
        %vm1879 = vcmp.eq.f32.partialorder %v1685, 0.0
        %v1880 = vand.u32 %v1685, 2147483648
        %v1881 = vsel %vm1879, %v1880, %v1878
        %v1882 = vrsqrt.pop %v1686
        %v1883 = vmul.f32 %v1686, %v1882
        %vm1884 = vcmp.eq.f32.partialorder %v1686, inf
        %v1885 = vsel %vm1884, %v1686, %v1883
        %vm1886 = vcmp.eq.f32.partialorder %v1686, 0.0
        %v1887 = vand.u32 %v1686, 2147483648
        %v1888 = vsel %vm1886, %v1887, %v1885
        %v1889 = vrsqrt.pop %v1687
        %v1890 = vmul.f32 %v1687, %v1889
        %vm1891 = vcmp.eq.f32.partialorder %v1687, inf
        %v1892 = vsel %vm1891, %v1687, %v1890
        %vm1893 = vcmp.eq.f32.partialorder %v1687, 0.0
        %v1894 = vand.u32 %v1687, 2147483648
        %v1895 = vsel %vm1893, %v1894, %v1892
        %v1896 = vrsqrt.pop %v1688
        %v1897 = vmul.f32 %v1688, %v1896
        %vm1898 = vcmp.eq.f32.partialorder %v1688, inf
        %v1899 = vsel %vm1898, %v1688, %v1897
        %vm1900 = vcmp.eq.f32.partialorder %v1688, 0.0
        %v1901 = vand.u32 %v1688, 2147483648
        %v1902 = vsel %vm1900, %v1901, %v1899
        %v1903 = vrsqrt.pop %v1689
        %v1904 = vmul.f32 %v1689, %v1903
        %vm1905 = vcmp.eq.f32.partialorder %v1689, inf
        %v1906 = vsel %vm1905, %v1689, %v1904
        %vm1907 = vcmp.eq.f32.partialorder %v1689, 0.0
        %v1908 = vand.u32 %v1689, 2147483648
        %v1909 = vsel %vm1907, %v1908, %v1906
        %v1910 = vrsqrt.pop %v1690
        %v1911 = vmul.f32 %v1690, %v1910
        %vm1912 = vcmp.eq.f32.partialorder %v1690, inf
        %v1913 = vsel %vm1912, %v1690, %v1911
        %vm1914 = vcmp.eq.f32.partialorder %v1690, 0.0
        %v1915 = vand.u32 %v1690, 2147483648
        %v1916 = vsel %vm1914, %v1915, %v1913
        %v1917 = vrsqrt.pop %v1691
        %v1918 = vmul.f32 %v1691, %v1917
        %vm1919 = vcmp.eq.f32.partialorder %v1691, inf
        %v1920 = vsel %vm1919, %v1691, %v1918
        %vm1921 = vcmp.eq.f32.partialorder %v1691, 0.0
        %v1922 = vand.u32 %v1691, 2147483648
        %v1923 = vsel %vm1921, %v1922, %v1920
        %v1924 = vrsqrt.pop %v1692
        %v1925 = vmul.f32 %v1692, %v1924
        %vm1926 = vcmp.eq.f32.partialorder %v1692, inf
        %v1927 = vsel %vm1926, %v1692, %v1925
        %vm1928 = vcmp.eq.f32.partialorder %v1692, 0.0
        %v1929 = vand.u32 %v1692, 2147483648
        %v1930 = vsel %vm1928, %v1929, %v1927
        %v1931 = vrsqrt.pop %v1693
        %v1932 = vmul.f32 %v1693, %v1931
        %vm1933 = vcmp.eq.f32.partialorder %v1693, inf
        %v1934 = vsel %vm1933, %v1693, %v1932
        %vm1935 = vcmp.eq.f32.partialorder %v1693, 0.0
        %v1936 = vand.u32 %v1693, 2147483648
        %v1937 = vsel %vm1935, %v1936, %v1934
        %v1938 = vrsqrt.pop %v1694
        %v1939 = vmul.f32 %v1694, %v1938
        %vm1940 = vcmp.eq.f32.partialorder %v1694, inf
        %v1941 = vsel %vm1940, %v1694, %v1939
        %vm1942 = vcmp.eq.f32.partialorder %v1694, 0.0
        %v1943 = vand.u32 %v1694, 2147483648
        %v1944 = vsel %vm1942, %v1943, %v1941
        %v1945 = vrsqrt.pop %v1695
        %v1946 = vmul.f32 %v1695, %v1945
        %vm1947 = vcmp.eq.f32.partialorder %v1695, inf
        %v1948 = vsel %vm1947, %v1695, %v1946
        %vm1949 = vcmp.eq.f32.partialorder %v1695, 0.0
        %v1950 = vand.u32 %v1695, 2147483648
        %v1951 = vsel %vm1949, %v1950, %v1948
        %v1952 = vrsqrt.pop %v1696
        %v1953 = vmul.f32 %v1696, %v1952
        %vm1954 = vcmp.eq.f32.partialorder %v1696, inf
        %v1955 = vsel %vm1954, %v1696, %v1953
        %vm1956 = vcmp.eq.f32.partialorder %v1696, 0.0
        %v1957 = vand.u32 %v1696, 2147483648
        %v1958 = vsel %vm1956, %v1957, %v1955
        %v1959 = vrsqrt.pop %v1697
        %v1960 = vmul.f32 %v1697, %v1959
        %vm1961 = vcmp.eq.f32.partialorder %v1697, inf
        %v1962 = vsel %vm1961, %v1697, %v1960
        %vm1963 = vcmp.eq.f32.partialorder %v1697, 0.0
        %v1964 = vand.u32 %v1697, 2147483648
        %v1965 = vsel %vm1963, %v1964, %v1962
        %v1966 = vrsqrt.pop %v1698
        %v1967 = vmul.f32 %v1698, %v1966
        %vm1968 = vcmp.eq.f32.partialorder %v1698, inf
        %v1969 = vsel %vm1968, %v1698, %v1967
        %vm1970 = vcmp.eq.f32.partialorder %v1698, 0.0
        %v1971 = vand.u32 %v1698, 2147483648
        %v1972 = vsel %vm1970, %v1971, %v1969
        %v1973 = vrsqrt.pop %v1699
        %v1974 = vmul.f32 %v1699, %v1973
        %vm1975 = vcmp.eq.f32.partialorder %v1699, inf
        %v1976 = vsel %vm1975, %v1699, %v1974
        %vm1977 = vcmp.eq.f32.partialorder %v1699, 0.0
        %v1978 = vand.u32 %v1699, 2147483648
        %v1979 = vsel %vm1977, %v1978, %v1976
        %v1980 = vrsqrt.pop %v1700
        %v1981 = vmul.f32 %v1700, %v1980
        %vm1982 = vcmp.eq.f32.partialorder %v1700, inf
        %v1983 = vsel %vm1982, %v1700, %v1981
        %vm1984 = vcmp.eq.f32.partialorder %v1700, 0.0
        %v1985 = vand.u32 %v1700, 2147483648
        %v1986 = vsel %vm1984, %v1985, %v1983
        %v1987 = vrsqrt.pop %v1701
        %v1988 = vmul.f32 %v1701, %v1987
        %vm1989 = vcmp.eq.f32.partialorder %v1701, inf
        %v1990 = vsel %vm1989, %v1701, %v1988
        %vm1991 = vcmp.eq.f32.partialorder %v1701, 0.0
        %v1992 = vand.u32 %v1701, 2147483648
        %v1993 = vsel %vm1991, %v1992, %v1990
        %v1994 = vrsqrt.pop %v1702
        %v1995 = vmul.f32 %v1702, %v1994
        %vm1996 = vcmp.eq.f32.partialorder %v1702, inf
        %v1997 = vsel %vm1996, %v1702, %v1995
        %vm1998 = vcmp.eq.f32.partialorder %v1702, 0.0
        %v1999 = vand.u32 %v1702, 2147483648
        %v2000 = vsel %vm1998, %v1999, %v1997
        %v2001 = vrsqrt.pop %v1703
        %v2002 = vmul.f32 %v1703, %v2001
        %vm2003 = vcmp.eq.f32.partialorder %v1703, inf
        %v2004 = vsel %vm2003, %v1703, %v2002
        %vm2005 = vcmp.eq.f32.partialorder %v1703, 0.0
        %v2006 = vand.u32 %v1703, 2147483648
        %v2007 = vsel %vm2005, %v2006, %v2004
        %v2008 = vrsqrt.pop %v1704
        %v2009 = vmul.f32 %v1704, %v2008
        %vm2010 = vcmp.eq.f32.partialorder %v1704, inf
        %v2011 = vsel %vm2010, %v1704, %v2009
        %vm2012 = vcmp.eq.f32.partialorder %v1704, 0.0
        %v2013 = vand.u32 %v1704, 2147483648
        %v2014 = vsel %vm2012, %v2013, %v2011
        %v2015 = vrsqrt.pop %v1705
        %v2016 = vmul.f32 %v1705, %v2015
        %vm2017 = vcmp.eq.f32.partialorder %v1705, inf
        %v2018 = vsel %vm2017, %v1705, %v2016
        %vm2019 = vcmp.eq.f32.partialorder %v1705, 0.0
        %v2020 = vand.u32 %v1705, 2147483648
        %v2021 = vsel %vm2019, %v2020, %v2018
        %v2022 = vrsqrt.pop %v1706
        %v2023 = vmul.f32 %v1706, %v2022
        %vm2024 = vcmp.eq.f32.partialorder %v1706, inf
        %v2025 = vsel %vm2024, %v1706, %v2023
        %vm2026 = vcmp.eq.f32.partialorder %v1706, 0.0
        %v2027 = vand.u32 %v1706, 2147483648
        %v2028 = vsel %vm2026, %v2027, %v2025
        %v2029 = vrsqrt.pop %v1707
        %v2030 = vmul.f32 %v1707, %v2029
        %vm2031 = vcmp.eq.f32.partialorder %v1707, inf
        %v2032 = vsel %vm2031, %v1707, %v2030
        %vm2033 = vcmp.eq.f32.partialorder %v1707, 0.0
        %v2034 = vand.u32 %v1707, 2147483648
        %v2035 = vsel %vm2033, %v2034, %v2032
        %v2036 = vrsqrt.pop %v1708
        %v2037 = vmul.f32 %v1708, %v2036
        %vm2038 = vcmp.eq.f32.partialorder %v1708, inf
        %v2039 = vsel %vm2038, %v1708, %v2037
        %vm2040 = vcmp.eq.f32.partialorder %v1708, 0.0
        %v2041 = vand.u32 %v1708, 2147483648
        %v2042 = vsel %vm2040, %v2041, %v2039
        %v2043 = vrsqrt.pop %v1709
        %v2044 = vmul.f32 %v1709, %v2043
        %vm2045 = vcmp.eq.f32.partialorder %v1709, inf
        %v2046 = vsel %vm2045, %v1709, %v2044
        %vm2047 = vcmp.eq.f32.partialorder %v1709, 0.0
        %v2048 = vand.u32 %v1709, 2147483648
        %v2049 = vsel %vm2047, %v2048, %v2046
        %v2050 = vrsqrt.pop %v1710
        %v2051 = vmul.f32 %v1710, %v2050
        %vm2052 = vcmp.eq.f32.partialorder %v1710, inf
        %v2053 = vsel %vm2052, %v1710, %v2051
        %vm2054 = vcmp.eq.f32.partialorder %v1710, 0.0
        %v2055 = vand.u32 %v1710, 2147483648
        %v2056 = vsel %vm2054, %v2055, %v2053
        %v2057 = vrsqrt.pop %v1711
        %v2058 = vmul.f32 %v1711, %v2057
        %vm2059 = vcmp.eq.f32.partialorder %v1711, inf
        %v2060 = vsel %vm2059, %v1711, %v2058
        %vm2061 = vcmp.eq.f32.partialorder %v1711, 0.0
        %v2062 = vand.u32 %v1711, 2147483648
        %v2063 = vsel %vm2061, %v2062, %v2060
        %v2064 = vrsqrt.pop %v1712
        %v2065 = vmul.f32 %v1712, %v2064
        %vm2066 = vcmp.eq.f32.partialorder %v1712, inf
        %v2067 = vsel %vm2066, %v1712, %v2065
        %vm2068 = vcmp.eq.f32.partialorder %v1712, 0.0
        %v2069 = vand.u32 %v1712, 2147483648
        %v2070 = vsel %vm2068, %v2069, %v2067
        %v2071 = vrsqrt.pop %v1713
        %v2072 = vmul.f32 %v1713, %v2071
        %vm2073 = vcmp.eq.f32.partialorder %v1713, inf
        %v2074 = vsel %vm2073, %v1713, %v2072
        %vm2075 = vcmp.eq.f32.partialorder %v1713, 0.0
        %v2076 = vand.u32 %v1713, 2147483648
        %v2077 = vsel %vm2075, %v2076, %v2074
        %v2078 = vrsqrt.pop %v1714
        %v2079 = vmul.f32 %v1714, %v2078
        %vm2080 = vcmp.eq.f32.partialorder %v1714, inf
        %v2081 = vsel %vm2080, %v1714, %v2079
        %vm2082 = vcmp.eq.f32.partialorder %v1714, 0.0
        %v2083 = vand.u32 %v1714, 2147483648
        %v2084 = vsel %vm2082, %v2083, %v2081
        %v2085 = vrsqrt.pop %v1715
        %v2086 = vmul.f32 %v1715, %v2085
        %vm2087 = vcmp.eq.f32.partialorder %v1715, inf
        %v2088 = vsel %vm2087, %v1715, %v2086
        %vm2089 = vcmp.eq.f32.partialorder %v1715, 0.0
        %v2090 = vand.u32 %v1715, 2147483648
        %v2091 = vsel %vm2089, %v2090, %v2088
        %v2092 = vrsqrt.pop %v1716
        %v2093 = vmul.f32 %v1716, %v2092
        %vm2094 = vcmp.eq.f32.partialorder %v1716, inf
        %v2095 = vsel %vm2094, %v1716, %v2093
        %vm2096 = vcmp.eq.f32.partialorder %v1716, 0.0
        %v2097 = vand.u32 %v1716, 2147483648
        %v2098 = vsel %vm2096, %v2097, %v2095
        %v2099 = vrsqrt.pop %v1717
        %v2100 = vmul.f32 %v1717, %v2099
        %vm2101 = vcmp.eq.f32.partialorder %v1717, inf
        %v2102 = vsel %vm2101, %v1717, %v2100
        %vm2103 = vcmp.eq.f32.partialorder %v1717, 0.0
        %v2104 = vand.u32 %v1717, 2147483648
        %v2105 = vsel %vm2103, %v2104, %v2102
        %v2106 = vrsqrt.pop %v1718
        %v2107 = vmul.f32 %v1718, %v2106
        %vm2108 = vcmp.eq.f32.partialorder %v1718, inf
        %v2109 = vsel %vm2108, %v1718, %v2107
        %vm2110 = vcmp.eq.f32.partialorder %v1718, 0.0
        %v2111 = vand.u32 %v1718, 2147483648
        %v2112 = vsel %vm2110, %v2111, %v2109
        %v2113 = vrsqrt.pop %v1719
        %v2114 = vmul.f32 %v1719, %v2113
        %vm2115 = vcmp.eq.f32.partialorder %v1719, inf
        %v2116 = vsel %vm2115, %v1719, %v2114
        %vm2117 = vcmp.eq.f32.partialorder %v1719, 0.0
        %v2118 = vand.u32 %v1719, 2147483648
        %v2119 = vsel %vm2117, %v2118, %v2116
        %v2120 = vrsqrt.pop %v1720
        %v2121 = vmul.f32 %v1720, %v2120
        %vm2122 = vcmp.eq.f32.partialorder %v1720, inf
        %v2123 = vsel %vm2122, %v1720, %v2121
        %vm2124 = vcmp.eq.f32.partialorder %v1720, 0.0
        %v2125 = vand.u32 %v1720, 2147483648
        %v2126 = vsel %vm2124, %v2125, %v2123
        %v2127 = vrsqrt.pop %v1721
        %v2128 = vmul.f32 %v1721, %v2127
        %vm2129 = vcmp.eq.f32.partialorder %v1721, inf
        %v2130 = vsel %vm2129, %v1721, %v2128
        %vm2131 = vcmp.eq.f32.partialorder %v1721, 0.0
        %v2132 = vand.u32 %v1721, 2147483648
        %v2133 = vsel %vm2131, %v2132, %v2130
        %v2134 = vrsqrt.pop %v1722
        %v2135 = vmul.f32 %v1722, %v2134
        %vm2136 = vcmp.eq.f32.partialorder %v1722, inf
        %v2137 = vsel %vm2136, %v1722, %v2135
        %vm2138 = vcmp.eq.f32.partialorder %v1722, 0.0
        %v2139 = vand.u32 %v1722, 2147483648
        %v2140 = vsel %vm2138, %v2139, %v2137
        %v2141 = vrsqrt.pop %v1723
        %v2142 = vmul.f32 %v1723, %v2141
        %vm2143 = vcmp.eq.f32.partialorder %v1723, inf
        %v2144 = vsel %vm2143, %v1723, %v2142
        %vm2145 = vcmp.eq.f32.partialorder %v1723, 0.0
        %v2146 = vand.u32 %v1723, 2147483648
        %v2147 = vsel %vm2145, %v2146, %v2144
        %v2148 = vrsqrt.pop %v1724
        %v2149 = vmul.f32 %v1724, %v2148
        %vm2150 = vcmp.eq.f32.partialorder %v1724, inf
        %v2151 = vsel %vm2150, %v1724, %v2149
        %vm2152 = vcmp.eq.f32.partialorder %v1724, 0.0
        %v2153 = vand.u32 %v1724, 2147483648
        %v2154 = vsel %vm2152, %v2153, %v2151
        %v2155 = vrsqrt.pop %v1725
        %v2156 = vmul.f32 %v1725, %v2155
        %vm2157 = vcmp.eq.f32.partialorder %v1725, inf
        %v2158 = vsel %vm2157, %v1725, %v2156
        %vm2159 = vcmp.eq.f32.partialorder %v1725, 0.0
        %v2160 = vand.u32 %v1725, 2147483648
        %v2161 = vsel %vm2159, %v2160, %v2158
        %v2162 = vrsqrt.pop %v1726
        %v2163 = vmul.f32 %v1726, %v2162
        %vm2164 = vcmp.eq.f32.partialorder %v1726, inf
        %v2165 = vsel %vm2164, %v1726, %v2163
        %vm2166 = vcmp.eq.f32.partialorder %v1726, 0.0
        %v2167 = vand.u32 %v1726, 2147483648
        %v2168 = vsel %vm2166, %v2167, %v2165
        %v2169 = vrsqrt.pop %v1727
        %v2170 = vmul.f32 %v1727, %v2169
        %vm2171 = vcmp.eq.f32.partialorder %v1727, inf
        %v2172 = vsel %vm2171, %v1727, %v2170
        %vm2173 = vcmp.eq.f32.partialorder %v1727, 0.0
        %v2174 = vand.u32 %v1727, 2147483648
        %v2175 = vsel %vm2173, %v2174, %v2172
        %v2176 = vmul.f32 %v1734, -0.1
        %v2177 = vmul.f32 %v1741, -0.1
        %v2178 = vmul.f32 %v1748, -0.1
        %v2179 = vmul.f32 %v1755, -0.1
        %v2180 = vmul.f32 %v1762, -0.1
        %v2181 = vmul.f32 %v1769, -0.1
        %v2182 = vmul.f32 %v1776, -0.1
        %v2183 = vmul.f32 %v1783, -0.1
        %v2184 = vmul.f32 %v1790, -0.1
        %v2185 = vmul.f32 %v1797, -0.1
        %v2186 = vmul.f32 %v1804, -0.1
        %v2187 = vmul.f32 %v1811, -0.1
        %v2188 = vmul.f32 %v1818, -0.1
        %v2189 = vmul.f32 %v1825, -0.1
        %v2190 = vmul.f32 %v1832, -0.1
        %v2191 = vmul.f32 %v1839, -0.1
        %v2192 = vmul.f32 %v1846, -0.1
        %v2193 = vmul.f32 %v1853, -0.1
        %v2194 = vmul.f32 %v1860, -0.1
        %v2195 = vmul.f32 %v1867, -0.1
        %v2196 = vmul.f32 %v1874, -0.1
        %v2197 = vmul.f32 %v1881, -0.1
        %v2198 = vmul.f32 %v1888, -0.1
        %v2199 = vmul.f32 %v1895, -0.1
        %v2200 = vmul.f32 %v1902, -0.1
        %v2201 = vmul.f32 %v1909, -0.1
        %v2202 = vmul.f32 %v1916, -0.1
        %v2203 = vmul.f32 %v1923, -0.1
        %v2204 = vmul.f32 %v1930, -0.1
        %v2205 = vmul.f32 %v1937, -0.1
        %v2206 = vmul.f32 %v1944, -0.1
        %v2207 = vmul.f32 %v1951, -0.1
        %v2208 = vmul.f32 %v1958, -0.1
        %v2209 = vmul.f32 %v1965, -0.1
        %v2210 = vmul.f32 %v1972, -0.1
        %v2211 = vmul.f32 %v1979, -0.1
        %v2212 = vmul.f32 %v1986, -0.1
        %v2213 = vmul.f32 %v1993, -0.1
        %v2214 = vmul.f32 %v2000, -0.1
        %v2215 = vmul.f32 %v2007, -0.1
        %v2216 = vmul.f32 %v2014, -0.1
        %v2217 = vmul.f32 %v2021, -0.1
        %v2218 = vmul.f32 %v2028, -0.1
        %v2219 = vmul.f32 %v2035, -0.1
        %v2220 = vmul.f32 %v2042, -0.1
        %v2221 = vmul.f32 %v2049, -0.1
        %v2222 = vmul.f32 %v2056, -0.1
        %v2223 = vmul.f32 %v2063, -0.1
        %v2224 = vmul.f32 %v2070, -0.1
        %v2225 = vmul.f32 %v2077, -0.1
        %v2226 = vmul.f32 %v2084, -0.1
        %v2227 = vmul.f32 %v2091, -0.1
        %v2228 = vmul.f32 %v2098, -0.1
        %v2229 = vmul.f32 %v2105, -0.1
        %v2230 = vmul.f32 %v2112, -0.1
        %v2231 = vmul.f32 %v2119, -0.1
        %v2232 = vmul.f32 %v2126, -0.1
        %v2233 = vmul.f32 %v2133, -0.1
        %v2234 = vmul.f32 %v2140, -0.1
        %v2235 = vmul.f32 %v2147, -0.1
        %v2236 = vmul.f32 %v2154, -0.1
        %v2237 = vmul.f32 %v2161, -0.1
        %v2238 = vmul.f32 %v2168, -0.1
        %v2239 = vmul.f32 %v2175, -0.1
        %v2240 = vmul.f32 %v2176, 1.442695
        %v2241 = vpow.pop %v2240
        %v2242 = vmul.f32 %v2177, 1.442695
        %v2243 = vpow.pop %v2242
        %v2244 = vmul.f32 %v2178, 1.442695
        %v2245 = vpow.pop %v2244
        %v2246 = vmul.f32 %v2179, 1.442695
        %v2247 = vpow.pop %v2246
        %v2248 = vmul.f32 %v2180, 1.442695
        %v2249 = vpow.pop %v2248
        %v2250 = vmul.f32 %v2181, 1.442695
        %v2251 = vpow.pop %v2250
        %v2252 = vmul.f32 %v2182, 1.442695
        %v2253 = vpow.pop %v2252
        %v2254 = vmul.f32 %v2183, 1.442695
        %v2255 = vpow.pop %v2254
        %v2256 = vmul.f32 %v2184, 1.442695
        %v2257 = vpow.pop %v2256
        %v2258 = vmul.f32 %v2185, 1.442695
        %v2259 = vpow.pop %v2258
        %v2260 = vmul.f32 %v2186, 1.442695
        %v2261 = vpow.pop %v2260
        %v2262 = vmul.f32 %v2187, 1.442695
        %v2263 = vpow.pop %v2262
        %v2264 = vmul.f32 %v2188, 1.442695
        %v2265 = vpow.pop %v2264
        %v2266 = vmul.f32 %v2189, 1.442695
        %v2267 = vpow.pop %v2266
        %v2268 = vmul.f32 %v2190, 1.442695
        %v2269 = vpow.pop %v2268
        %v2270 = vmul.f32 %v2191, 1.442695
        %v2271 = vpow.pop %v2270
        %v2272 = vmul.f32 %v2192, 1.442695
        %v2273 = vpow.pop %v2272
        %v2274 = vmul.f32 %v2193, 1.442695
        %v2275 = vpow.pop %v2274
        %v2276 = vmul.f32 %v2194, 1.442695
        %v2277 = vpow.pop %v2276
        %v2278 = vmul.f32 %v2195, 1.442695
        %v2279 = vpow.pop %v2278
        %v2280 = vmul.f32 %v2196, 1.442695
        %v2281 = vpow.pop %v2280
        %v2282 = vmul.f32 %v2197, 1.442695
        %v2283 = vpow.pop %v2282
        %v2284 = vmul.f32 %v2198, 1.442695
        %v2285 = vpow.pop %v2284
        %v2286 = vmul.f32 %v2199, 1.442695
        %v2287 = vpow.pop %v2286
        %v2288 = vmul.f32 %v2200, 1.442695
        %v2289 = vpow.pop %v2288
        %v2290 = vmul.f32 %v2201, 1.442695
        %v2291 = vpow.pop %v2290
        %v2292 = vmul.f32 %v2202, 1.442695
        %v2293 = vpow.pop %v2292
        %v2294 = vmul.f32 %v2203, 1.442695
        %v2295 = vpow.pop %v2294
        %v2296 = vmul.f32 %v2204, 1.442695
        %v2297 = vpow.pop %v2296
        %v2298 = vmul.f32 %v2205, 1.442695
        %v2299 = vpow.pop %v2298
        %v2300 = vmul.f32 %v2206, 1.442695
        %v2301 = vpow.pop %v2300
        %v2302 = vmul.f32 %v2207, 1.442695
        %v2303 = vpow.pop %v2302
        %v2304 = vmul.f32 %v2208, 1.442695
        %v2305 = vpow.pop %v2304
        %v2306 = vmul.f32 %v2209, 1.442695
        %v2307 = vpow.pop %v2306
        %v2308 = vmul.f32 %v2210, 1.442695
        %v2309 = vpow.pop %v2308
        %v2310 = vmul.f32 %v2211, 1.442695
        %v2311 = vpow.pop %v2310
        %v2312 = vmul.f32 %v2212, 1.442695
        %v2313 = vpow.pop %v2312
        %v2314 = vmul.f32 %v2213, 1.442695
        %v2315 = vpow.pop %v2314
        %v2316 = vmul.f32 %v2214, 1.442695
        %v2317 = vpow.pop %v2316
        %v2318 = vmul.f32 %v2215, 1.442695
        %v2319 = vpow.pop %v2318
        %v2320 = vmul.f32 %v2216, 1.442695
        %v2321 = vpow.pop %v2320
        %v2322 = vmul.f32 %v2217, 1.442695
        %v2323 = vpow.pop %v2322
        %v2324 = vmul.f32 %v2218, 1.442695
        %v2325 = vpow.pop %v2324
        %v2326 = vmul.f32 %v2219, 1.442695
        %v2327 = vpow.pop %v2326
        %v2328 = vmul.f32 %v2220, 1.442695
        %v2329 = vpow.pop %v2328
        %v2330 = vmul.f32 %v2221, 1.442695
        %v2331 = vpow.pop %v2330
        %v2332 = vmul.f32 %v2222, 1.442695
        %v2333 = vpow.pop %v2332
        %v2334 = vmul.f32 %v2223, 1.442695
        %v2335 = vpow.pop %v2334
        %v2336 = vmul.f32 %v2224, 1.442695
        %v2337 = vpow.pop %v2336
        %v2338 = vmul.f32 %v2225, 1.442695
        %v2339 = vpow.pop %v2338
        %v2340 = vmul.f32 %v2226, 1.442695
        %v2341 = vpow.pop %v2340
        %v2342 = vmul.f32 %v2227, 1.442695
        %v2343 = vpow.pop %v2342
        %v2344 = vmul.f32 %v2228, 1.442695
        %v2345 = vpow.pop %v2344
        %v2346 = vmul.f32 %v2229, 1.442695
        %v2347 = vpow.pop %v2346
        %v2348 = vmul.f32 %v2230, 1.442695
        %v2349 = vpow.pop %v2348
        %v2350 = vmul.f32 %v2231, 1.442695
        %v2351 = vpow.pop %v2350
        %v2352 = vmul.f32 %v2232, 1.442695
        %v2353 = vpow.pop %v2352
        %v2354 = vmul.f32 %v2233, 1.442695
        %v2355 = vpow.pop %v2354
        %v2356 = vmul.f32 %v2234, 1.442695
        %v2357 = vpow.pop %v2356
        %v2358 = vmul.f32 %v2235, 1.442695
        %v2359 = vpow.pop %v2358
        %v2360 = vmul.f32 %v2236, 1.442695
        %v2361 = vpow.pop %v2360
        %v2362 = vmul.f32 %v2237, 1.442695
        %v2363 = vpow.pop %v2362
        %v2364 = vmul.f32 %v2238, 1.442695
        %v2365 = vpow.pop %v2364
        %v2366 = vmul.f32 %v2239, 1.442695
        %v2367 = vpow.pop %v2366
        %v2368 = vmax.f32 %v2241, 0.0
        %v2369 = vmax.f32 %v2243, 0.0
        %v2370 = vmax.f32 %v2245, 0.0
        %v2371 = vmax.f32 %v2247, 0.0
        %v2372 = vmax.f32 %v2249, 0.0
        %v2373 = vmax.f32 %v2251, 0.0
        %v2374 = vmax.f32 %v2253, 0.0
        %v2375 = vmax.f32 %v2255, 0.0
        %v2376 = vmax.f32 %v2257, 0.0
        %v2377 = vmax.f32 %v2259, 0.0
        %v2378 = vmax.f32 %v2261, 0.0
        %v2379 = vmax.f32 %v2263, 0.0
        %v2380 = vmax.f32 %v2265, 0.0
        %v2381 = vmax.f32 %v2267, 0.0
        %v2382 = vmax.f32 %v2269, 0.0
        %v2383 = vmax.f32 %v2271, 0.0
        %v2384 = vmax.f32 %v2273, 0.0
        %v2385 = vmax.f32 %v2275, 0.0
        %v2386 = vmax.f32 %v2277, 0.0
        %v2387 = vmax.f32 %v2279, 0.0
        %v2388 = vmax.f32 %v2281, 0.0
        %v2389 = vmax.f32 %v2283, 0.0
        %v2390 = vmax.f32 %v2285, 0.0
        %v2391 = vmax.f32 %v2287, 0.0
        %v2392 = vmax.f32 %v2289, 0.0
        %v2393 = vmax.f32 %v2291, 0.0
        %v2394 = vmax.f32 %v2293, 0.0
        %v2395 = vmax.f32 %v2295, 0.0
        %v2396 = vmax.f32 %v2297, 0.0
        %v2397 = vmax.f32 %v2299, 0.0
        %v2398 = vmax.f32 %v2301, 0.0
        %v2399 = vmax.f32 %v2303, 0.0
        %v2400 = vmax.f32 %v2305, 0.0
        %v2401 = vmax.f32 %v2307, 0.0
        %v2402 = vmax.f32 %v2309, 0.0
        %v2403 = vmax.f32 %v2311, 0.0
        %v2404 = vmax.f32 %v2313, 0.0
        %v2405 = vmax.f32 %v2315, 0.0
        %v2406 = vmax.f32 %v2317, 0.0
        %v2407 = vmax.f32 %v2319, 0.0
        %v2408 = vmax.f32 %v2321, 0.0
        %v2409 = vmax.f32 %v2323, 0.0
        %v2410 = vmax.f32 %v2325, 0.0
        %v2411 = vmax.f32 %v2327, 0.0
        %v2412 = vmax.f32 %v2329, 0.0
        %v2413 = vmax.f32 %v2331, 0.0
        %v2414 = vmax.f32 %v2333, 0.0
        %v2415 = vmax.f32 %v2335, 0.0
        %v2416 = vmax.f32 %v2337, 0.0
        %v2417 = vmax.f32 %v2339, 0.0
        %v2418 = vmax.f32 %v2341, 0.0
        %v2419 = vmax.f32 %v2343, 0.0
        %v2420 = vmax.f32 %v2345, 0.0
        %v2421 = vmax.f32 %v2347, 0.0
        %v2422 = vmax.f32 %v2349, 0.0
        %v2423 = vmax.f32 %v2351, 0.0
        %v2424 = vmax.f32 %v2353, 0.0
        %v2425 = vmax.f32 %v2355, 0.0
        %v2426 = vmax.f32 %v2357, 0.0
        %v2427 = vmax.f32 %v2359, 0.0
        %v2428 = vmax.f32 %v2361, 0.0
        %v2429 = vmax.f32 %v2363, 0.0
        %v2430 = vmax.f32 %v2365, 0.0
        %v2431 = vmax.f32 %v2367, 0.0
        %v2436 = vlaneseq
        %v2437 = vshrl.u32 %v2436, 7
        %v2438 = vsub.s32 0, %v2437
        %v2439 = vrot.slane %v231, %v2438
        %v2440 = vlaneseq
        %v2441 = vshrl.u32 %v2440, 7
        %v2442 = vsub.s32 0, %v2441
        %v2443 = vrot.slane %v232, %v2442
        %v2444 = vlaneseq
        %v2445 = vshrl.u32 %v2444, 7
        %v2446 = vsub.s32 0, %v2445
        %v2447 = vrot.slane %v233, %v2446
        %v2448 = vlaneseq
        %v2449 = vshrl.u32 %v2448, 7
        %v2450 = vsub.s32 0, %v2449
        %v2451 = vrot.slane %v234, %v2450
        %v2456 = vmul.f32 %v2368, %v2439
        %v2457 = vmul.f32 %v2369, %v2439
        %v2458 = vmul.f32 %v2370, %v2439
        %v2459 = vmul.f32 %v2371, %v2439
        %v2460 = vmul.f32 %v2372, %v2439
        %v2461 = vmul.f32 %v2373, %v2439
        %v2462 = vmul.f32 %v2374, %v2439
        %v2463 = vmul.f32 %v2375, %v2439
        %v2464 = vmul.f32 %v2376, %v2439
        %v2465 = vmul.f32 %v2377, %v2439
        %v2466 = vmul.f32 %v2378, %v2439
        %v2467 = vmul.f32 %v2379, %v2439
        %v2468 = vmul.f32 %v2380, %v2439
        %v2469 = vmul.f32 %v2381, %v2439
        %v2470 = vmul.f32 %v2382, %v2439
        %v2471 = vmul.f32 %v2383, %v2439
        %v2472 = vmul.f32 %v2384, %v2443
        %v2473 = vmul.f32 %v2385, %v2443
        %v2474 = vmul.f32 %v2386, %v2443
        %v2475 = vmul.f32 %v2387, %v2443
        %v2476 = vmul.f32 %v2388, %v2443
        %v2477 = vmul.f32 %v2389, %v2443
        %v2478 = vmul.f32 %v2390, %v2443
        %v2479 = vmul.f32 %v2391, %v2443
        %v2480 = vmul.f32 %v2392, %v2443
        %v2481 = vmul.f32 %v2393, %v2443
        %v2482 = vmul.f32 %v2394, %v2443
        %v2483 = vmul.f32 %v2395, %v2443
        %v2484 = vmul.f32 %v2396, %v2443
        %v2485 = vmul.f32 %v2397, %v2443
        %v2486 = vmul.f32 %v2398, %v2443
        %v2487 = vmul.f32 %v2399, %v2443
        %v2488 = vmul.f32 %v2400, %v2447
        %v2489 = vmul.f32 %v2401, %v2447
        %v2490 = vmul.f32 %v2402, %v2447
        %v2491 = vmul.f32 %v2403, %v2447
        %v2492 = vmul.f32 %v2404, %v2447
        %v2493 = vmul.f32 %v2405, %v2447
        %v2494 = vmul.f32 %v2406, %v2447
        %v2495 = vmul.f32 %v2407, %v2447
        %v2496 = vmul.f32 %v2408, %v2447
        %v2497 = vmul.f32 %v2409, %v2447
        %v2498 = vmul.f32 %v2410, %v2447
        %v2499 = vmul.f32 %v2411, %v2447
        %v2500 = vmul.f32 %v2412, %v2447
        %v2501 = vmul.f32 %v2413, %v2447
        %v2502 = vmul.f32 %v2414, %v2447
        %v2503 = vmul.f32 %v2415, %v2447
        %v2504 = vmul.f32 %v2416, %v2451
        %v2505 = vmul.f32 %v2417, %v2451
        %v2506 = vmul.f32 %v2418, %v2451
        %v2507 = vmul.f32 %v2419, %v2451
        %v2508 = vmul.f32 %v2420, %v2451
        %v2509 = vmul.f32 %v2421, %v2451
        %v2510 = vmul.f32 %v2422, %v2451
        %v2511 = vmul.f32 %v2423, %v2451
        %v2512 = vmul.f32 %v2424, %v2451
        %v2513 = vmul.f32 %v2425, %v2451
        %v2514 = vmul.f32 %v2426, %v2451
        %v2515 = vmul.f32 %v2427, %v2451
        %v2516 = vmul.f32 %v2428, %v2451
        %v2517 = vmul.f32 %v2429, %v2451
        %v2518 = vmul.f32 %v2430, %v2451
        %v2519 = vmul.f32 %v2431, %v2451
        %2520 = vxpose.xlu0.b32.start [1/16] %v231, 128
        %2521 = vxpose.xlu0.b32.cont [2/16] 0.0, 128
        %2522 = vxpose.xlu0.b32.cont [3/16] 0.0, 128
        %2523 = vxpose.xlu0.b32.cont [4/16] 0.0, 128
        %2524 = vxpose.xlu0.b32.cont [5/16] 0.0, 128
        %2525 = vxpose.xlu0.b32.cont [6/16] 0.0, 128
        %2526 = vxpose.xlu0.b32.cont [7/16] 0.0, 128
        %2527 = vxpose.xlu0.b32.cont [8/16] 0.0, 128
        %2528 = vxpose.xlu0.b32.cont [9/16] 0.0, 128
        %2529 = vxpose.xlu0.b32.cont [10/16] 0.0, 128
        %2530 = vxpose.xlu0.b32.cont [11/16] 0.0, 128
        %2531 = vxpose.xlu0.b32.cont [12/16] 0.0, 128
        %2532 = vxpose.xlu0.b32.cont [13/16] 0.0, 128
        %2533 = vxpose.xlu0.b32.cont [14/16] 0.0, 128
        %2534 = vxpose.xlu0.b32.cont [15/16] 0.0, 128
        %2535 = vxpose.xlu0.b32.end [16/16] 0.0, 128
        %v2536 = vpop.trf.xlu0
        %v2537 = vpop.trf.xlu0
        %v2538 = vpop.trf.xlu0
        %v2539 = vpop.trf.xlu0
        %v2540 = vpop.trf.xlu0
        %v2541 = vpop.trf.xlu0
        %v2542 = vpop.trf.xlu0
        %v2543 = vpop.trf.xlu0
        %v2544 = vpop.trf.xlu0
        %v2545 = vpop.trf.xlu0
        %v2546 = vpop.trf.xlu0
        %v2547 = vpop.trf.xlu0
        %v2548 = vpop.trf.xlu0
        %v2549 = vpop.trf.xlu0
        %v2550 = vpop.trf.xlu0
        %v2551 = vpop.trf.xlu0
        %2552 = vxpose.xlu0.b32.start [1/16] %v232, 128
        %2553 = vxpose.xlu0.b32.cont [2/16] 0.0, 128
        %2554 = vxpose.xlu0.b32.cont [3/16] 0.0, 128
        %2555 = vxpose.xlu0.b32.cont [4/16] 0.0, 128
        %2556 = vxpose.xlu0.b32.cont [5/16] 0.0, 128
        %2557 = vxpose.xlu0.b32.cont [6/16] 0.0, 128
        %2558 = vxpose.xlu0.b32.cont [7/16] 0.0, 128
        %2559 = vxpose.xlu0.b32.cont [8/16] 0.0, 128
        %2560 = vxpose.xlu0.b32.cont [9/16] 0.0, 128
        %2561 = vxpose.xlu0.b32.cont [10/16] 0.0, 128
        %2562 = vxpose.xlu0.b32.cont [11/16] 0.0, 128
        %2563 = vxpose.xlu0.b32.cont [12/16] 0.0, 128
        %2564 = vxpose.xlu0.b32.cont [13/16] 0.0, 128
        %2565 = vxpose.xlu0.b32.cont [14/16] 0.0, 128
        %2566 = vxpose.xlu0.b32.cont [15/16] 0.0, 128
        %2567 = vxpose.xlu0.b32.end [16/16] 0.0, 128
        %v2568 = vpop.trf.xlu0
        %v2569 = vpop.trf.xlu0
        %v2570 = vpop.trf.xlu0
        %v2571 = vpop.trf.xlu0
        %v2572 = vpop.trf.xlu0
        %v2573 = vpop.trf.xlu0
        %v2574 = vpop.trf.xlu0
        %v2575 = vpop.trf.xlu0
        %v2576 = vpop.trf.xlu0
        %v2577 = vpop.trf.xlu0
        %v2578 = vpop.trf.xlu0
        %v2579 = vpop.trf.xlu0
        %v2580 = vpop.trf.xlu0
        %v2581 = vpop.trf.xlu0
        %v2582 = vpop.trf.xlu0
        %v2583 = vpop.trf.xlu0
        %2584 = vxpose.xlu0.b32.start [1/16] %v233, 128
        %2585 = vxpose.xlu0.b32.cont [2/16] 0.0, 128
        %2586 = vxpose.xlu0.b32.cont [3/16] 0.0, 128
        %2587 = vxpose.xlu0.b32.cont [4/16] 0.0, 128
        %2588 = vxpose.xlu0.b32.cont [5/16] 0.0, 128
        %2589 = vxpose.xlu0.b32.cont [6/16] 0.0, 128
        %2590 = vxpose.xlu0.b32.cont [7/16] 0.0, 128
        %2591 = vxpose.xlu0.b32.cont [8/16] 0.0, 128
        %2592 = vxpose.xlu0.b32.cont [9/16] 0.0, 128
        %2593 = vxpose.xlu0.b32.cont [10/16] 0.0, 128
        %2594 = vxpose.xlu0.b32.cont [11/16] 0.0, 128
        %2595 = vxpose.xlu0.b32.cont [12/16] 0.0, 128
        %2596 = vxpose.xlu0.b32.cont [13/16] 0.0, 128
        %2597 = vxpose.xlu0.b32.cont [14/16] 0.0, 128
        %2598 = vxpose.xlu0.b32.cont [15/16] 0.0, 128
        %2599 = vxpose.xlu0.b32.end [16/16] 0.0, 128
        %v2600 = vpop.trf.xlu0
        %v2601 = vpop.trf.xlu0
        %v2602 = vpop.trf.xlu0
        %v2603 = vpop.trf.xlu0
        %v2604 = vpop.trf.xlu0
        %v2605 = vpop.trf.xlu0
        %v2606 = vpop.trf.xlu0
        %v2607 = vpop.trf.xlu0
        %v2608 = vpop.trf.xlu0
        %v2609 = vpop.trf.xlu0
        %v2610 = vpop.trf.xlu0
        %v2611 = vpop.trf.xlu0
        %v2612 = vpop.trf.xlu0
        %v2613 = vpop.trf.xlu0
        %v2614 = vpop.trf.xlu0
        %v2615 = vpop.trf.xlu0
        %2616 = vxpose.xlu0.b32.start [1/16] %v234, 128
        %2617 = vxpose.xlu0.b32.cont [2/16] 0.0, 128
        %2618 = vxpose.xlu0.b32.cont [3/16] 0.0, 128
        %2619 = vxpose.xlu0.b32.cont [4/16] 0.0, 128
        %2620 = vxpose.xlu0.b32.cont [5/16] 0.0, 128
        %2621 = vxpose.xlu0.b32.cont [6/16] 0.0, 128
        %2622 = vxpose.xlu0.b32.cont [7/16] 0.0, 128
        %2623 = vxpose.xlu0.b32.cont [8/16] 0.0, 128
        %2624 = vxpose.xlu0.b32.cont [9/16] 0.0, 128
        %2625 = vxpose.xlu0.b32.cont [10/16] 0.0, 128
        %2626 = vxpose.xlu0.b32.cont [11/16] 0.0, 128
        %2627 = vxpose.xlu0.b32.cont [12/16] 0.0, 128
        %2628 = vxpose.xlu0.b32.cont [13/16] 0.0, 128
        %2629 = vxpose.xlu0.b32.cont [14/16] 0.0, 128
        %2630 = vxpose.xlu0.b32.cont [15/16] 0.0, 128
        %2631 = vxpose.xlu0.b32.end [16/16] 0.0, 128
        %v2632 = vpop.trf.xlu0
        %v2633 = vpop.trf.xlu0
        %v2634 = vpop.trf.xlu0
        %v2635 = vpop.trf.xlu0
        %v2636 = vpop.trf.xlu0
        %v2637 = vpop.trf.xlu0
        %v2638 = vpop.trf.xlu0
        %v2639 = vpop.trf.xlu0
        %v2640 = vpop.trf.xlu0
        %v2641 = vpop.trf.xlu0
        %v2642 = vpop.trf.xlu0
        %v2643 = vpop.trf.xlu0
        %v2644 = vpop.trf.xlu0
        %v2645 = vpop.trf.xlu0
        %v2646 = vpop.trf.xlu0
        %v2647 = vpop.trf.xlu0
        %2649 = vset.pattern.permute.xlu0 0
        %2650 = vperm.xlu0 %2649, %v2536
        %v2651 = vpop.permute.xlu0 %2650
        %2654 = vset.pattern.permute.xlu0 0
        %2655 = vperm.xlu0 %2654, %v2537
        %v2656 = vpop.permute.xlu0 %2655
        %2659 = vset.pattern.permute.xlu0 0
        %2660 = vperm.xlu0 %2659, %v2538
        %v2661 = vpop.permute.xlu0 %2660
        %2664 = vset.pattern.permute.xlu0 0
        %2665 = vperm.xlu0 %2664, %v2539
        %v2666 = vpop.permute.xlu0 %2665
        %2669 = vset.pattern.permute.xlu0 0
        %2670 = vperm.xlu0 %2669, %v2540
        %v2671 = vpop.permute.xlu0 %2670
        %2674 = vset.pattern.permute.xlu0 0
        %2675 = vperm.xlu0 %2674, %v2541
        %v2676 = vpop.permute.xlu0 %2675
        %2679 = vset.pattern.permute.xlu0 0
        %2680 = vperm.xlu0 %2679, %v2542
        %v2681 = vpop.permute.xlu0 %2680
        %2684 = vset.pattern.permute.xlu0 0
        %2685 = vperm.xlu0 %2684, %v2543
        %v2686 = vpop.permute.xlu0 %2685
        %2689 = vset.pattern.permute.xlu0 0
        %2690 = vperm.xlu0 %2689, %v2544
        %v2691 = vpop.permute.xlu0 %2690
        %2694 = vset.pattern.permute.xlu0 0
        %2695 = vperm.xlu0 %2694, %v2545
        %v2696 = vpop.permute.xlu0 %2695
        %2699 = vset.pattern.permute.xlu0 0
        %2700 = vperm.xlu0 %2699, %v2546
        %v2701 = vpop.permute.xlu0 %2700
        %2704 = vset.pattern.permute.xlu0 0
        %2705 = vperm.xlu0 %2704, %v2547
        %v2706 = vpop.permute.xlu0 %2705
        %2709 = vset.pattern.permute.xlu0 0
        %2710 = vperm.xlu0 %2709, %v2548
        %v2711 = vpop.permute.xlu0 %2710
        %2714 = vset.pattern.permute.xlu0 0
        %2715 = vperm.xlu0 %2714, %v2549
        %v2716 = vpop.permute.xlu0 %2715
        %2719 = vset.pattern.permute.xlu0 0
        %2720 = vperm.xlu0 %2719, %v2550
        %v2721 = vpop.permute.xlu0 %2720
        %2724 = vset.pattern.permute.xlu0 0
        %2725 = vperm.xlu0 %2724, %v2551
        %v2726 = vpop.permute.xlu0 %2725
        %2729 = vset.pattern.permute.xlu0 0
        %2730 = vperm.xlu0 %2729, %v2568
        %v2731 = vpop.permute.xlu0 %2730
        %2734 = vset.pattern.permute.xlu0 0
        %2735 = vperm.xlu0 %2734, %v2569
        %v2736 = vpop.permute.xlu0 %2735
        %2739 = vset.pattern.permute.xlu0 0
        %2740 = vperm.xlu0 %2739, %v2570
        %v2741 = vpop.permute.xlu0 %2740
        %2744 = vset.pattern.permute.xlu0 0
        %2745 = vperm.xlu0 %2744, %v2571
        %v2746 = vpop.permute.xlu0 %2745
        %2749 = vset.pattern.permute.xlu0 0
        %2750 = vperm.xlu0 %2749, %v2572
        %v2751 = vpop.permute.xlu0 %2750
        %2754 = vset.pattern.permute.xlu0 0
        %2755 = vperm.xlu0 %2754, %v2573
        %v2756 = vpop.permute.xlu0 %2755
        %2759 = vset.pattern.permute.xlu0 0
        %2760 = vperm.xlu0 %2759, %v2574
        %v2761 = vpop.permute.xlu0 %2760
        %2764 = vset.pattern.permute.xlu0 0
        %2765 = vperm.xlu0 %2764, %v2575
        %v2766 = vpop.permute.xlu0 %2765
        %2769 = vset.pattern.permute.xlu0 0
        %2770 = vperm.xlu0 %2769, %v2576
        %v2771 = vpop.permute.xlu0 %2770
        %2774 = vset.pattern.permute.xlu0 0
        %2775 = vperm.xlu0 %2774, %v2577
        %v2776 = vpop.permute.xlu0 %2775
        %2779 = vset.pattern.permute.xlu0 0
        %2780 = vperm.xlu0 %2779, %v2578
        %v2781 = vpop.permute.xlu0 %2780
        %2784 = vset.pattern.permute.xlu0 0
        %2785 = vperm.xlu0 %2784, %v2579
        %v2786 = vpop.permute.xlu0 %2785
        %2789 = vset.pattern.permute.xlu0 0
        %2790 = vperm.xlu0 %2789, %v2580
        %v2791 = vpop.permute.xlu0 %2790
        %2794 = vset.pattern.permute.xlu0 0
        %2795 = vperm.xlu0 %2794, %v2581
        %v2796 = vpop.permute.xlu0 %2795
        %2799 = vset.pattern.permute.xlu0 0
        %2800 = vperm.xlu0 %2799, %v2582
        %v2801 = vpop.permute.xlu0 %2800
        %2804 = vset.pattern.permute.xlu0 0
        %2805 = vperm.xlu0 %2804, %v2583
        %v2806 = vpop.permute.xlu0 %2805
        %2809 = vset.pattern.permute.xlu0 0
        %2810 = vperm.xlu0 %2809, %v2600
        %v2811 = vpop.permute.xlu0 %2810
        %2814 = vset.pattern.permute.xlu0 0
        %2815 = vperm.xlu0 %2814, %v2601
        %v2816 = vpop.permute.xlu0 %2815
        %2819 = vset.pattern.permute.xlu0 0
        %2820 = vperm.xlu0 %2819, %v2602
        %v2821 = vpop.permute.xlu0 %2820
        %2824 = vset.pattern.permute.xlu0 0
        %2825 = vperm.xlu0 %2824, %v2603
        %v2826 = vpop.permute.xlu0 %2825
        %2829 = vset.pattern.permute.xlu0 0
        %2830 = vperm.xlu0 %2829, %v2604
        %v2831 = vpop.permute.xlu0 %2830
        %2834 = vset.pattern.permute.xlu0 0
        %2835 = vperm.xlu0 %2834, %v2605
        %v2836 = vpop.permute.xlu0 %2835
        %2839 = vset.pattern.permute.xlu0 0
        %2840 = vperm.xlu0 %2839, %v2606
        %v2841 = vpop.permute.xlu0 %2840
        %2844 = vset.pattern.permute.xlu0 0
        %2845 = vperm.xlu0 %2844, %v2607
        %v2846 = vpop.permute.xlu0 %2845
        %2849 = vset.pattern.permute.xlu0 0
        %2850 = vperm.xlu0 %2849, %v2608
        %v2851 = vpop.permute.xlu0 %2850
        %2854 = vset.pattern.permute.xlu0 0
        %2855 = vperm.xlu0 %2854, %v2609
        %v2856 = vpop.permute.xlu0 %2855
        %2859 = vset.pattern.permute.xlu0 0
        %2860 = vperm.xlu0 %2859, %v2610
        %v2861 = vpop.permute.xlu0 %2860
        %2864 = vset.pattern.permute.xlu0 0
        %2865 = vperm.xlu0 %2864, %v2611
        %v2866 = vpop.permute.xlu0 %2865
        %2869 = vset.pattern.permute.xlu0 0
        %2870 = vperm.xlu0 %2869, %v2612
        %v2871 = vpop.permute.xlu0 %2870
        %2874 = vset.pattern.permute.xlu0 0
        %2875 = vperm.xlu0 %2874, %v2613
        %v2876 = vpop.permute.xlu0 %2875
        %2879 = vset.pattern.permute.xlu0 0
        %2880 = vperm.xlu0 %2879, %v2614
        %v2881 = vpop.permute.xlu0 %2880
        %2884 = vset.pattern.permute.xlu0 0
        %2885 = vperm.xlu0 %2884, %v2615
        %v2886 = vpop.permute.xlu0 %2885
        %2889 = vset.pattern.permute.xlu0 0
        %2890 = vperm.xlu0 %2889, %v2632
        %v2891 = vpop.permute.xlu0 %2890
        %2894 = vset.pattern.permute.xlu0 0
        %2895 = vperm.xlu0 %2894, %v2633
        %v2896 = vpop.permute.xlu0 %2895
        %2899 = vset.pattern.permute.xlu0 0
        %2900 = vperm.xlu0 %2899, %v2634
        %v2901 = vpop.permute.xlu0 %2900
        %2904 = vset.pattern.permute.xlu0 0
        %2905 = vperm.xlu0 %2904, %v2635
        %v2906 = vpop.permute.xlu0 %2905
        %2909 = vset.pattern.permute.xlu0 0
        %2910 = vperm.xlu0 %2909, %v2636
        %v2911 = vpop.permute.xlu0 %2910
        %2914 = vset.pattern.permute.xlu0 0
        %2915 = vperm.xlu0 %2914, %v2637
        %v2916 = vpop.permute.xlu0 %2915
        %2919 = vset.pattern.permute.xlu0 0
        %2920 = vperm.xlu0 %2919, %v2638
        %v2921 = vpop.permute.xlu0 %2920
        %2924 = vset.pattern.permute.xlu0 0
        %2925 = vperm.xlu0 %2924, %v2639
        %v2926 = vpop.permute.xlu0 %2925
        %2929 = vset.pattern.permute.xlu0 0
        %2930 = vperm.xlu0 %2929, %v2640
        %v2931 = vpop.permute.xlu0 %2930
        %2934 = vset.pattern.permute.xlu0 0
        %2935 = vperm.xlu0 %2934, %v2641
        %v2936 = vpop.permute.xlu0 %2935
        %2939 = vset.pattern.permute.xlu0 0
        %2940 = vperm.xlu0 %2939, %v2642
        %v2941 = vpop.permute.xlu0 %2940
        %2944 = vset.pattern.permute.xlu0 0
        %2945 = vperm.xlu0 %2944, %v2643
        %v2946 = vpop.permute.xlu0 %2945
        %2949 = vset.pattern.permute.xlu0 0
        %2950 = vperm.xlu0 %2949, %v2644
        %v2951 = vpop.permute.xlu0 %2950
        %2954 = vset.pattern.permute.xlu0 0
        %2955 = vperm.xlu0 %2954, %v2645
        %v2956 = vpop.permute.xlu0 %2955
        %2959 = vset.pattern.permute.xlu0 0
        %2960 = vperm.xlu0 %2959, %v2646
        %v2961 = vpop.permute.xlu0 %2960
        %2964 = vset.pattern.permute.xlu0 0
        %2965 = vperm.xlu0 %2964, %v2647
        %v2966 = vpop.permute.xlu0 %2965
        %v2968 = vmul.f32 %v2456, %v2651
        %v2969 = vmul.f32 %v2457, %v2656
        %v2970 = vmul.f32 %v2458, %v2661
        %v2971 = vmul.f32 %v2459, %v2666
        %v2972 = vmul.f32 %v2460, %v2671
        %v2973 = vmul.f32 %v2461, %v2676
        %v2974 = vmul.f32 %v2462, %v2681
        %v2975 = vmul.f32 %v2463, %v2686
        %v2976 = vmul.f32 %v2464, %v2691
        %v2977 = vmul.f32 %v2465, %v2696
        %v2978 = vmul.f32 %v2466, %v2701
        %v2979 = vmul.f32 %v2467, %v2706
        %v2980 = vmul.f32 %v2468, %v2711
        %v2981 = vmul.f32 %v2469, %v2716
        %v2982 = vmul.f32 %v2470, %v2721
        %v2983 = vmul.f32 %v2471, %v2726
        %v2984 = vmul.f32 %v2472, %v2731
        %v2985 = vmul.f32 %v2473, %v2736
        %v2986 = vmul.f32 %v2474, %v2741
        %v2987 = vmul.f32 %v2475, %v2746
        %v2988 = vmul.f32 %v2476, %v2751
        %v2989 = vmul.f32 %v2477, %v2756
        %v2990 = vmul.f32 %v2478, %v2761
        %v2991 = vmul.f32 %v2479, %v2766
        %v2992 = vmul.f32 %v2480, %v2771
        %v2993 = vmul.f32 %v2481, %v2776
        %v2994 = vmul.f32 %v2482, %v2781
        %v2995 = vmul.f32 %v2483, %v2786
        %v2996 = vmul.f32 %v2484, %v2791
        %v2997 = vmul.f32 %v2485, %v2796
        %v2998 = vmul.f32 %v2486, %v2801
        %v2999 = vmul.f32 %v2487, %v2806
        %v3000 = vmul.f32 %v2488, %v2811
        %v3001 = vmul.f32 %v2489, %v2816
        %v3002 = vmul.f32 %v2490, %v2821
        %v3003 = vmul.f32 %v2491, %v2826
        %v3004 = vmul.f32 %v2492, %v2831
        %v3005 = vmul.f32 %v2493, %v2836
        %v3006 = vmul.f32 %v2494, %v2841
        %v3007 = vmul.f32 %v2495, %v2846
        %v3008 = vmul.f32 %v2496, %v2851
        %v3009 = vmul.f32 %v2497, %v2856
        %v3010 = vmul.f32 %v2498, %v2861
        %v3011 = vmul.f32 %v2499, %v2866
        %v3012 = vmul.f32 %v2500, %v2871
        %v3013 = vmul.f32 %v2501, %v2876
        %v3014 = vmul.f32 %v2502, %v2881
        %v3015 = vmul.f32 %v2503, %v2886
        %v3016 = vmul.f32 %v2504, %v2891
        %v3017 = vmul.f32 %v2505, %v2896
        %v3018 = vmul.f32 %v2506, %v2901
        %v3019 = vmul.f32 %v2507, %v2906
        %v3020 = vmul.f32 %v2508, %v2911
        %v3021 = vmul.f32 %v2509, %v2916
        %v3022 = vmul.f32 %v2510, %v2921
        %v3023 = vmul.f32 %v2511, %v2926
        %v3024 = vmul.f32 %v2512, %v2931
        %v3025 = vmul.f32 %v2513, %v2936
        %v3026 = vmul.f32 %v2514, %v2941
        %v3027 = vmul.f32 %v2515, %v2946
        %v3028 = vmul.f32 %v2516, %v2951
        %v3029 = vmul.f32 %v2517, %v2956
        %v3030 = vmul.f32 %v2518, %v2961
        %v3031 = vmul.f32 %v2519, %v2966
        %3032 = vst [vmem:[%s153] sm:$0xff] %v2968
        %3033 = vst [vmem:[%s153 + $0x8] sm:$0xff] %v2969
        %3034 = vst [vmem:[%s153 + $0x10] sm:$0xff] %v2970
        %3035 = vst [vmem:[%s153 + $0x18] sm:$0xff] %v2971
        %3036 = vst [vmem:[%s153 + $0x20] sm:$0xff] %v2972
        %3037 = vst [vmem:[%s153 + $0x28] sm:$0xff] %v2973
        %3038 = vst [vmem:[%s153 + $0x30] sm:$0xff] %v2974
        %3039 = vst [vmem:[%s153 + $0x38] sm:$0xff] %v2975
        %3040 = vst [vmem:[%s153 + $0x40] sm:$0xff] %v2976
        %3041 = vst [vmem:[%s153 + $0x48] sm:$0xff] %v2977
        %3042 = vst [vmem:[%s153 + $0x50] sm:$0xff] %v2978
        %3043 = vst [vmem:[%s153 + $0x58] sm:$0xff] %v2979
        %3044 = vst [vmem:[%s153 + $0x60] sm:$0xff] %v2980
        %3045 = vst [vmem:[%s153 + $0x68] sm:$0xff] %v2981
        %3046 = vst [vmem:[%s153 + $0x70] sm:$0xff] %v2982
        %3047 = vst [vmem:[%s153 + $0x78] sm:$0xff] %v2983
        %3048 = vst [vmem:[%s153 + $0x80] sm:$0xff] %v2984
        %3049 = vst [vmem:[%s153 + $0x88] sm:$0xff] %v2985
        %3050 = vst [vmem:[%s153 + $0x90] sm:$0xff] %v2986
        %3051 = vst [vmem:[%s153 + $0x98] sm:$0xff] %v2987
        %3052 = vst [vmem:[%s153 + $0xa0] sm:$0xff] %v2988
        %3053 = vst [vmem:[%s153 + $0xa8] sm:$0xff] %v2989
        %3054 = vst [vmem:[%s153 + $0xb0] sm:$0xff] %v2990
        %3055 = vst [vmem:[%s153 + $0xb8] sm:$0xff] %v2991
        %3056 = vst [vmem:[%s153 + $0xc0] sm:$0xff] %v2992
        %3057 = vst [vmem:[%s153 + $0xc8] sm:$0xff] %v2993
        %3058 = vst [vmem:[%s153 + $0xd0] sm:$0xff] %v2994
        %3059 = vst [vmem:[%s153 + $0xd8] sm:$0xff] %v2995
        %3060 = vst [vmem:[%s153 + $0xe0] sm:$0xff] %v2996
        %3061 = vst [vmem:[%s153 + $0xe8] sm:$0xff] %v2997
        %3062 = vst [vmem:[%s153 + $0xf0] sm:$0xff] %v2998
        %3063 = vst [vmem:[%s153 + $0xf8] sm:$0xff] %v2999
        %3064 = vst [vmem:[%s153 + $0x100] sm:$0xff] %v3000
        %3065 = vst [vmem:[%s153 + $0x108] sm:$0xff] %v3001
        %3066 = vst [vmem:[%s153 + $0x110] sm:$0xff] %v3002
        %3067 = vst [vmem:[%s153 + $0x118] sm:$0xff] %v3003
        %3068 = vst [vmem:[%s153 + $0x120] sm:$0xff] %v3004
        %3069 = vst [vmem:[%s153 + $0x128] sm:$0xff] %v3005
        %3070 = vst [vmem:[%s153 + $0x130] sm:$0xff] %v3006
        %3071 = vst [vmem:[%s153 + $0x138] sm:$0xff] %v3007
        %3072 = vst [vmem:[%s153 + $0x140] sm:$0xff] %v3008
        %3073 = vst [vmem:[%s153 + $0x148] sm:$0xff] %v3009
        %3074 = vst [vmem:[%s153 + $0x150] sm:$0xff] %v3010
        %3075 = vst [vmem:[%s153 + $0x158] sm:$0xff] %v3011
        %3076 = vst [vmem:[%s153 + $0x160] sm:$0xff] %v3012
        %3077 = vst [vmem:[%s153 + $0x168] sm:$0xff] %v3013
        %3078 = vst [vmem:[%s153 + $0x170] sm:$0xff] %v3014
        %3079 = vst [vmem:[%s153 + $0x178] sm:$0xff] %v3015
        %3080 = vst [vmem:[%s153 + $0x180] sm:$0xff] %v3016
        %3081 = vst [vmem:[%s153 + $0x188] sm:$0xff] %v3017
        %3082 = vst [vmem:[%s153 + $0x190] sm:$0xff] %v3018
        %3083 = vst [vmem:[%s153 + $0x198] sm:$0xff] %v3019
        %3084 = vst [vmem:[%s153 + $0x1a0] sm:$0xff] %v3020
        %3085 = vst [vmem:[%s153 + $0x1a8] sm:$0xff] %v3021
        %3086 = vst [vmem:[%s153 + $0x1b0] sm:$0xff] %v3022
        %3087 = vst [vmem:[%s153 + $0x1b8] sm:$0xff] %v3023
        %3088 = vst [vmem:[%s153 + $0x1c0] sm:$0xff] %v3024
        %3089 = vst [vmem:[%s153 + $0x1c8] sm:$0xff] %v3025
        %3090 = vst [vmem:[%s153 + $0x1d0] sm:$0xff] %v3026
        %3091 = vst [vmem:[%s153 + $0x1d8] sm:$0xff] %v3027
        %3092 = vst [vmem:[%s153 + $0x1e0] sm:$0xff] %v3028
        %3093 = vst [vmem:[%s153 + $0x1e8] sm:$0xff] %v3029
        %3094 = vst [vmem:[%s153 + $0x1f0] sm:$0xff] %v3030
        %3095 = vst [vmem:[%s153 + $0x1f8] sm:$0xff] %v3031
        %s3096 = sand.u32 %s76, 1
        %s3097 = scalar_lea.sflag [#allocation3], %s3096
        %s3098 = sand.u32 %s76, 1
        %s3099 = smul.addr %s3098, 512
        %s3100 = scalar_lea.vmem [#allocation2], %s3099
        // Predicated region
        $region29: #{message_building_layer_lsh.3} parent=27 // pred_check
          %p3101 = pneg %p86
        $region30: #{message_building_layer_lsh.3} parent=27 // pred_check_branch
          %3103 = sbr.rel (%p3101) target = $region32
        $region31: #{message_building_layer_lsh.3} parent=27 // pred_region
          %s3104 = smul.u32 4, %s16
          %s3106 = ssub.s32 8192, 8192
          %3107 = vsyncadd %s3097, %s3106
          %s3108 = smul.addr %s3104, 16
          %s3109 = smul.addr %s3108, 128
          %s3110 = scalar_lea.hbm %s2, %s3109
          %s3111 = sshll.u32 %s3100, 4
          %s3112 = int_to_ptr.vmem [resolvable:$true] %s3111
          %3117 = dma.vmem_to_hbm [thread:$0]  %s3112, 8192, %s3110, %s3097, 128, 128, 8
        $region32: #{message_building_layer_lsh.3} parent=27 // pred_fallthru
          _
      $region28: #{message_building_layer_lsh.3} parent=5 // pred_fallthru
        _
      %p3118 = scmp.le.s32.totalorder 2, %s11
      // Predicated region
      $region33: #{message_building_layer_lsh.3} parent=5 // pred_check
        %p3119 = pneg %p3118
      $region34: #{message_building_layer_lsh.3} parent=5 // pred_check_branch
        %3121 = sbr.rel (%p3119) target = $region36
      $region35: #{message_building_layer_lsh.3} parent=5 // pred_region
        %s3122 = ssub.s32 %s11, 2
        // Predicated region
        $region37: #{message_building_layer_lsh.3} parent=35 // pred_check
          %p3123 = pneg %p92
        $region38: #{message_building_layer_lsh.3} parent=35 // pred_check_branch
          %3125 = sbr.rel (%p3123) target = $region40
        $region39: #{message_building_layer_lsh.3} parent=35 // pred_region
          %s3126 = sand.u32 %s77, 1
          %s3127 = scalar_lea.sflag [#allocation3], %s3126
          %s3128 = sand.u32 %s77, 1
          %s3129 = smul.addr %s3128, 512
          %s3130 = scalar_lea.vmem [#allocation2], %s3129
          %3131 = dma.done %s3127, 8192
        $region40: #{message_building_layer_lsh.3} parent=35 // pred_fallthru
          _
      $region36: #{message_building_layer_lsh.3} parent=5 // pred_fallthru
        _
    $region6: #{message_building_layer_lsh.3} parent=1 // loop_footer
      %s15 = sadd.s32 1, %s11
    $region7: #{message_building_layer_lsh.3} parent=1 // loop_footer_branch
      %10 = sbr.rel target = $region3
    $region8: #{message_building_layer_lsh.3} parent=1 // loop_exit
      _
    %3132 = vsyncpa [#allocation3], 1
    %s3133 = scalar_lea.sflag [#allocation3], 1
    %3134 = vsyncpa %s3133, 1

</llo_original>
